<compile_context>
chip_gen: v6e
topology: v6e:2x2x1
jax: 0.10.0
libtpu: 0.0.40
codegen_flags: <defaults>
</compile_context>

<pallas_src>
import functools

import jax
import jax.numpy as jnp
from jax.experimental import pallas as pl
from jax.experimental.pallas import tpu as pltpu

VMEM_LIMIT_BYTES = 48 * 1024 * 1024   # > 32 MiB default scoped VMEM, < v7x 64 MiB physical
TARGET_GEMM_ROWS = 2048               # target M (= tile_ho * wo) per fused GEMM


def _round_up(x, m):
    return ((x + m - 1) // m) * m


def _pick_row_tile(ho, wo, target_m=TARGET_GEMM_ROWS):
    """Pick tile_ho so tile_ho*wo ~ target_m; prefer divisors of ho (no output padding)."""
    tmax = max(1, min(ho, target_m // max(wo, 1)))
    for cand in range(tmax, 0, -1):
        if ho % cand == 0 and cand * 2 > tmax:
            return cand, ho // cand
    return tmax, pl.cdiv(ho, tmax)


# --------------------------- fused stem conv kernel ------------------------ #

def stem_conv_kernel(x_ref, w_ref, b_ref, o_ref, pad_ref, y_ref, col_ref, *,
                     kh, kw, cin, cout, tile_ho, wo, pad_h, pad_w, img_h, img_w):
    """Row tile of: Conv(kh x kw, stride 1, 'same' pad, no bias) + folded BN + ReLU."""
    t = pl.program_id(1)

    # Once per image (t == 0): zero the padded scratch and copy the unpadded image into the
    # interior. The halo padding never touches HBM.
    @pl.when(t == 0)
    def _():
        pad_ref[...] = jnp.zeros_like(pad_ref)
        pad_ref[pad_h:pad_h + img_h, pad_w:pad_w + img_w, :] = x_ref[...]

    row0 = pl.multiple_of(t * tile_ho, tile_ho)
    khcin = kh * cin

    # Stage A: vertical unfold -- kh cheap major-dim row-band copies concatenated along
    # lanes: y[r, w, i*cin + c] = pad[row0 + r + i, w, c].
    for i in range(kh):
        y_ref[:, :, i * cin:(i + 1) * cin] = pad_ref[pl.ds(row0 + i, tile_ho), :, :]

    # Stage B: horizontal unfold -- kw static sublane-offset copies into the im2col scratch:
    # col[r, w, j*kh*cin + k] = y[r, w + j, k].
    for j in range(kw):
        col_ref[:, :, j * khcin:(j + 1) * khcin] = y_ref[:, j:j + wo, :]

    # One fused GEMM over K = kh*kw*cin instead of kh*kw micro-matmuls with K = cin.
    taps = col_ref[...].reshape(tile_ho * wo, kh * kw * cin)      # free: wo % 8 == 0
    acc = jnp.dot(taps, w_ref[...], preferred_element_type=jnp.float32)
    out = jnp.maximum(acc + b_ref[...], 0.0)                      # f32 epilogue (v5e-safe)
    o_ref[...] = out.reshape(tile_ho, wo, cout).astype(o_ref.dtype)


def conv_bn_relu_pallas(x_nhwc, w_oihw, scale, bias, stride, padding):
    """Conv2d (PyTorch OIHW weights, no conv bias) + folded BatchNorm + ReLU."""
    assert stride == 1, "stem_stride != 1 not implemented"  # TODO(synk): strided stem conv
    N, H, W, cin = x_nhwc.shape
    cout, cin2, kh, kw = w_oihw.shape
    assert cin == cin2
    ho = H + 2 * padding - kh + 1
    wo = W + 2 * padding - kw + 1

    # Output width rounded to a sublane multiple so the in-kernel leading-dim reshapes are
    # layout-compatible (extra columns come from zero padding and are sliced off below).
    wo_c = _round_up(wo, 8)
    tile_ho, num_t = _pick_row_tile(ho, wo_c)
    ho_c = tile_ho * num_t

    pad_h, pad_w = padding, padding
    hp = ho_c + kh - 1                   # padded-scratch height (covers every row tile)
    wp = wo_c + kw - 1                   # padded-scratch width

    # Weight layout matches the im2col K ordering (j, i, c); BN scale folded in -> bf16.
    K = kh * kw * cin
    w_flat = (jnp.transpose(w_oihw, (3, 2, 1, 0)) * scale[None, None, None, :])
    w_flat = w_flat.reshape(K, cout).astype(jnp.bfloat16)
    b = bias.reshape(1, cout).astype(jnp.float32)

    x_bf = x_nhwc.astype(jnp.bfloat16)

    kernel = functools.partial(
        stem_conv_kernel, kh=kh, kw=kw, cin=cin, cout=cout, tile_ho=tile_ho,
        wo=wo_c, pad_h=pad_h, pad_w=pad_w, img_h=H, img_w=W)

    out = pl.pallas_call(
        kernel,
        out_shape=jax.ShapeDtypeStruct((N, ho_c, wo_c, cout), jnp.bfloat16),
        grid=(N, num_t),
        in_specs=[
            # Whole (unpadded) image: fetched once per batch element, resident across tiles.
            pl.BlockSpec((None, H, W, cin), lambda n, t: (n, 0, 0, 0)),
            pl.BlockSpec((K, cout), lambda n, t: (0, 0)),
            pl.BlockSpec((1, cout), lambda n, t: (0, 0)),
        ],
        out_specs=pl.BlockSpec((None, tile_ho, wo_c, cout), lambda n, t: (n, t, 0, 0)),
        scratch_shapes=[
            pltpu.VMEM((hp, wp, cin), jnp.bfloat16),            # zero-padded image
            pltpu.VMEM((tile_ho, wp, kh * cin), jnp.bfloat16),  # vertical unfold
            pltpu.VMEM((tile_ho, wo_c, K), jnp.bfloat16),       # im2col block
        ],
        compiler_params=pltpu.CompilerParams(
            dimension_semantics=("parallel", "arbitrary"),
            vmem_limit_bytes=VMEM_LIMIT_BYTES,
        ),
    )(x_bf, w_flat, b)

    if ho_c != ho or wo_c != wo:
        out = out[:, :ho, :wo]
    return out


# ---------------------------- proj (patchify) GEMM -------------------------- #

def matmul_bias_kernel(x_ref, w_ref, b_ref, o_ref):
    acc = jnp.dot(x_ref[...], w_ref[...], preferred_element_type=jnp.float32)
    o_ref[...] = (acc + b_ref[...]).astype(o_ref.dtype)


def proj_conv_pallas(x_nhwc, w_oihw, bias, ps, tile_m=512):
    """Patchify conv (kernel_size == stride == ps, no padding): reshape + GEMM + bias."""
    N, H, W, cin = x_nhwc.shape
    cout = w_oihw.shape[0]
    hp2, wp2 = H // ps, W // ps

    # TODO(synk): fold this patchify transpose into the GEMM kernel (one extra HBM pass).
    cols = (
        x_nhwc[:, : hp2 * ps, : wp2 * ps, :]
        .reshape(N, hp2, ps, wp2, ps, cin)
        .transpose(0, 1, 3, 2, 4, 5)
        .reshape(N * hp2 * wp2, ps * ps * cin)
        .astype(jnp.bfloat16)
    )
    w_mat = jnp.transpose(w_oihw, (2, 3, 1, 0)).reshape(ps * ps * cin, cout).astype(jnp.bfloat16)
    b = bias.reshape(1, cout).astype(jnp.float32)

    M, K = cols.shape
    tm = min(tile_m, _round_up(M, 8))
    num_m = pl.cdiv(M, tm)
    m_pad = num_m * tm
    if m_pad != M:
        cols = jnp.pad(cols, ((0, m_pad - M), (0, 0)))

    out = pl.pallas_call(
        matmul_bias_kernel,
        out_shape=jax.ShapeDtypeStruct((m_pad, cout), jnp.float32),
        grid=(num_m,),
        in_specs=[
            pl.BlockSpec((tm, K), lambda i: (i, 0)),
            pl.BlockSpec((K, cout), lambda i: (0, 0)),
            pl.BlockSpec((1, cout), lambda i: (0, 0)),
        ],
        out_specs=pl.BlockSpec((tm, cout), lambda i: (i, 0)),
        compiler_params=pltpu.CompilerParams(
            dimension_semantics=("parallel",),
            vmem_limit_bytes=VMEM_LIMIT_BYTES,
        ),
    )(cols, w_mat, b)

    if m_pad != M:
        out = out[:M]
    return out.reshape(N, hp2, wp2, cout)


# ------------------------------- model glue -------------------------------- #

def fold_bn(gamma, beta, mean, var, eps=1e-5):
    scale = gamma / jnp.sqrt(var + eps)
    bias = beta - mean * scale
    return scale, bias


def patch_embed_forward(params, x_nchw):
    x = jnp.transpose(x_nchw, (0, 2, 3, 1))          # NCHW -> NHWC
    for layer in params["stem"]:
        scale, bias = fold_bn(**layer["bn"])
        x = conv_bn_relu_pallas(x, layer["w"], scale, bias,
                                layer["stride"], layer["padding"])
    p = params["proj"]
    x = proj_conv_pallas(x, p["w"], p["b"], p["stride"])
    return jnp.transpose(x, (0, 3, 1, 2))            # NHWC -> NCHW (matches PyTorch)


def init_patch_embed_params(key, in_chans=3, hidden_dim=32, embed_dim=64,
                            patch_size=4, stem_stride=1):
    ks = jax.random.split(key, 12)

    def conv_w(k, co, ci, kh, kw):
        fan_in = ci * kh * kw
        return jax.random.normal(k, (co, ci, kh, kw), jnp.float32) * (1.0 / jnp.sqrt(fan_in))

    def bn(k, c):
        k1, k2, k3, k4 = jax.random.split(k, 4)
        return dict(
            gamma=1.0 + 0.1 * jax.random.normal(k1, (c,), jnp.float32),
            beta=0.1 * jax.random.normal(k2, (c,), jnp.float32),
            mean=0.1 * jax.random.normal(k3, (c,), jnp.float32),
            var=jnp.abs(jax.random.normal(k4, (c,), jnp.float32)) + 0.5,
        )

    ps = patch_size // stem_stride
    params = dict(
        stem=[
            dict(w=conv_w(ks[0], hidden_dim, in_chans, 7, 7), bn=bn(ks[1], hidden_dim),
                 stride=stem_stride, padding=3),
            dict(w=conv_w(ks[2], hidden_dim, hidden_dim, 3, 3), bn=bn(ks[3], hidden_dim),
                 stride=1, padding=1),
            dict(w=conv_w(ks[4], hidden_dim, hidden_dim, 3, 3), bn=bn(ks[5], hidden_dim),
                 stride=1, padding=1),
        ],
        proj=dict(
            w=conv_w(ks[6], embed_dim, hidden_dim, ps, ps),
            b=0.1 * jax.random.normal(ks[7], (embed_dim,), jnp.float32),
            stride=ps, padding=0,
        ),
    )
    return params


# ----------------------------- reference (lax) ------------------------------ #

def _ref_conv(x_nhwc, w_oihw, stride, padding):
    return jax.lax.conv_general_dilated(
        x_nhwc, jnp.transpose(w_oihw, (2, 3, 1, 0)),
        window_strides=(stride, stride),
        padding=[(padding, padding), (padding, padding)],
        dimension_numbers=("NHWC", "HWIO", "NHWC"),
        precision=jax.lax.Precision.HIGHEST,
    )


def patch_embed_ref(params, x_nchw):
    x = jnp.transpose(x_nchw, (0, 2, 3, 1))
    for layer in params["stem"]:
        scale, bias = fold_bn(**layer["bn"])
        x = _ref_conv(x, layer["w"], layer["stride"], layer["padding"])
        x = jnp.maximum(x * scale + bias, 0.0)
    p = params["proj"]
    x = _ref_conv(x, p["w"], p["stride"], p["padding"]) + p["b"]
    return jnp.transpose(x, (0, 3, 1, 2))


# ---------------------------------- main ------------------------------------ #

if __name__ == "__main__":
    key = jax.random.PRNGKey(0)
    k_params, k_x = jax.random.split(key)

    B, C, H, W = 2, 3, 16, 16          # img_size=16, in_chans=3
    hidden_dim, embed_dim, patch_size = 32, 64, 4

    params = init_patch_embed_params(k_params, in_chans=C, hidden_dim=hidden_dim,
                                     embed_dim=embed_dim, patch_size=patch_size,
                                     stem_stride=1)
    x = jax.random.normal(k_x, (B, C, H, W), jnp.float32)

    out = jax.block_until_ready(patch_embed_forward(params, x))
    assert out.shape == (B, embed_dim, H // patch_size, W // patch_size), out.shape

    ref = jax.block_until_ready(patch_embed_ref(params, x))
    # bf16 MXU operands / bf16 inter-layer activations (f32 accumulate + epilogue).
    assert jnp.allclose(out, ref, rtol=2e-2, atol=2e-2), float(jnp.max(jnp.abs(out - ref)))

    print("KERNEL_OK")
</pallas_src>

<mosaic_0001>
module attributes {stable_mosaic.version = 11 : i64} {
  func.func @stem_conv_kernel(%arg0: i32, %arg1: i32, %arg2: memref<1x16x16x3xbf16, #tpu.memory_space<vmem>>, %arg3: memref<147x32xbf16, #tpu.memory_space<vmem>>, %arg4: memref<1x32xf32, #tpu.memory_space<vmem>>, %arg5: memref<1x16x16x32xbf16, #tpu.memory_space<vmem>>, %arg6: memref<22x22x3xbf16, #tpu.memory_space<vmem>>, %arg7: memref<16x22x21xbf16, #tpu.memory_space<vmem>>, %arg8: memref<16x16x147xbf16, #tpu.memory_space<vmem>>) attributes {dimension_semantics = [#tpu.dimension_semantics<parallel>, #tpu.dimension_semantics<arbitrary>], iteration_bounds = array<i64: 2, 1>, scalar_prefetch = 0 : i64, scratch_operands = 3 : i64, tpu.core_type = #tpu.core_type<tc>, window_params = [{transform_indices = @transform_0, window_bounds = array<i64: 1, 16, 16, 3>}, {pipeline_mode = #tpu.pipeline_mode<synchronous>, transform_indices = @transform_1, window_bounds = array<i64: 147, 32>}, {pipeline_mode = #tpu.pipeline_mode<synchronous>, transform_indices = @transform_2, window_bounds = array<i64: 1, 32>}, {transform_indices = @transform_3, window_bounds = array<i64: 1, 16, 16, 32>}]} {
    %c0_i32 = arith.constant 0 : i32
    %0 = arith.cmpi eq, %arg1, %c0_i32 : i32
    %1 = arith.extui %0 : i1 to i32
    %c0_i32_0 = arith.constant 0 : i32
    %2 = arith.cmpi ne, %1, %c0_i32_0 : i32
    scf.if %2 {
      %cst_74 = arith.constant 0.000000e+00 : bf16
      %61 = vector.broadcast %cst_74 : bf16 to vector<22x22x3xbf16>
      %c0_75 = arith.constant 0 : index
      %c0_76 = arith.constant 0 : index
      %c0_77 = arith.constant 0 : index
      %62 = vector.load %arg6[%c0_75, %c0_76, %c0_77] : memref<22x22x3xbf16, #tpu.memory_space<vmem>>, vector<22x22x3xbf16>
      tpu.vector_store %arg6[%c0_75, %c0_76, %c0_77], %61 {strides = array<i32>} : memref<22x22x3xbf16, #tpu.memory_space<vmem>>, vector<22x22x3xbf16>,
      %c0_78 = arith.constant 0 : index
      %c0_79 = arith.constant 0 : index
      %c0_80 = arith.constant 0 : index
      %c0_81 = arith.constant 0 : index
      %63 = vector.load %arg2[%c0_78, %c0_79, %c0_80, %c0_81] : memref<1x16x16x3xbf16, #tpu.memory_space<vmem>>, vector<1x16x16x3xbf16>
      %64 = vector.shape_cast %63 : vector<1x16x16x3xbf16> to vector<16x16x3xbf16>
      %c3_82 = arith.constant 3 : index
      %c3_83 = arith.constant 3 : index
      %c0_84 = arith.constant 0 : index
      %65 = vector.load %arg6[%c3_82, %c3_83, %c0_84] : memref<22x22x3xbf16, #tpu.memory_space<vmem>>, vector<16x16x3xbf16>
      tpu.vector_store %arg6[%c3_82, %c3_83, %c0_84], %64 {strides = array<i32>} : memref<22x22x3xbf16, #tpu.memory_space<vmem>>, vector<16x16x3xbf16>,
    } else {
    }
    %c16_i32 = arith.constant 16 : i32
    %3 = arith.muli %arg1, %c16_i32 : i32
    %4 = tpu.assume_multiple %3, 16 : i32
    %c0_i32_1 = arith.constant 0 : i32
    %5 = arith.addi %4, %c0_i32_1 : i32
    %6 = arith.index_cast %5 : i32 to index
    %c0 = arith.constant 0 : index
    %c0_2 = arith.constant 0 : index
    %7 = vector.load %arg6[%6, %c0, %c0_2] : memref<22x22x3xbf16, #tpu.memory_space<vmem>>, vector<16x22x3xbf16>
    %c0_3 = arith.constant 0 : index
    %c0_4 = arith.constant 0 : index
    %c0_5 = arith.constant 0 : index
    %8 = vector.load %arg7[%c0_3, %c0_4, %c0_5] : memref<16x22x21xbf16, #tpu.memory_space<vmem>>, vector<16x22x3xbf16>
    tpu.vector_store %arg7[%c0_3, %c0_4, %c0_5], %7 {strides = array<i32>} : memref<16x22x21xbf16, #tpu.memory_space<vmem>>, vector<16x22x3xbf16>,
    %c1_i32 = arith.constant 1 : i32
    %9 = arith.addi %4, %c1_i32 : i32
    %10 = arith.index_cast %9 : i32 to index
    %c0_6 = arith.constant 0 : index
    %c0_7 = arith.constant 0 : index
    %11 = vector.load %arg6[%10, %c0_6, %c0_7] : memref<22x22x3xbf16, #tpu.memory_space<vmem>>, vector<16x22x3xbf16>
    %c0_8 = arith.constant 0 : index
    %c0_9 = arith.constant 0 : index
    %c3 = arith.constant 3 : index
    %12 = vector.load %arg7[%c0_8, %c0_9, %c3] : memref<16x22x21xbf16, #tpu.memory_space<vmem>>, vector<16x22x3xbf16>
    tpu.vector_store %arg7[%c0_8, %c0_9, %c3], %11 {strides = array<i32>} : memref<16x22x21xbf16, #tpu.memory_space<vmem>>, vector<16x22x3xbf16>,
    %c2_i32 = arith.constant 2 : i32
    %13 = arith.addi %4, %c2_i32 : i32
    %14 = arith.index_cast %13 : i32 to index
    %c0_10 = arith.constant 0 : index
    %c0_11 = arith.constant 0 : index
    %15 = vector.load %arg6[%14, %c0_10, %c0_11] : memref<22x22x3xbf16, #tpu.memory_space<vmem>>, vector<16x22x3xbf16>
    %c0_12 = arith.constant 0 : index
    %c0_13 = arith.constant 0 : index
    %c6 = arith.constant 6 : index
    %16 = vector.load %arg7[%c0_12, %c0_13, %c6] : memref<16x22x21xbf16, #tpu.memory_space<vmem>>, vector<16x22x3xbf16>
    tpu.vector_store %arg7[%c0_12, %c0_13, %c6], %15 {strides = array<i32>} : memref<16x22x21xbf16, #tpu.memory_space<vmem>>, vector<16x22x3xbf16>,
    %c3_i32 = arith.constant 3 : i32
    %17 = arith.addi %4, %c3_i32 : i32
    %18 = arith.index_cast %17 : i32 to index
    %c0_14 = arith.constant 0 : index
    %c0_15 = arith.constant 0 : index
    %19 = vector.load %arg6[%18, %c0_14, %c0_15] : memref<22x22x3xbf16, #tpu.memory_space<vmem>>, vector<16x22x3xbf16>
    %c0_16 = arith.constant 0 : index
    %c0_17 = arith.constant 0 : index
    %c9 = arith.constant 9 : index
    %20 = vector.load %arg7[%c0_16, %c0_17, %c9] : memref<16x22x21xbf16, #tpu.memory_space<vmem>>, vector<16x22x3xbf16>
    tpu.vector_store %arg7[%c0_16, %c0_17, %c9], %19 {strides = array<i32>} : memref<16x22x21xbf16, #tpu.memory_space<vmem>>, vector<16x22x3xbf16>,
    %c4_i32 = arith.constant 4 : i32
    %21 = arith.addi %4, %c4_i32 : i32
    %22 = arith.index_cast %21 : i32 to index
    %c0_18 = arith.constant 0 : index
    %c0_19 = arith.constant 0 : index
    %23 = vector.load %arg6[%22, %c0_18, %c0_19] : memref<22x22x3xbf16, #tpu.memory_space<vmem>>, vector<16x22x3xbf16>
    %c0_20 = arith.constant 0 : index
    %c0_21 = arith.constant 0 : index
    %c12 = arith.constant 12 : index
    %24 = vector.load %arg7[%c0_20, %c0_21, %c12] : memref<16x22x21xbf16, #tpu.memory_space<vmem>>, vector<16x22x3xbf16>
    tpu.vector_store %arg7[%c0_20, %c0_21, %c12], %23 {strides = array<i32>} : memref<16x22x21xbf16, #tpu.memory_space<vmem>>, vector<16x22x3xbf16>,
    %c5_i32 = arith.constant 5 : i32
    %25 = arith.addi %4, %c5_i32 : i32
    %26 = arith.index_cast %25 : i32 to index
    %c0_22 = arith.constant 0 : index
    %c0_23 = arith.constant 0 : index
    %27 = vector.load %arg6[%26, %c0_22, %c0_23] : memref<22x22x3xbf16, #tpu.memory_space<vmem>>, vector<16x22x3xbf16>
    %c0_24 = arith.constant 0 : index
    %c0_25 = arith.constant 0 : index
    %c15 = arith.constant 15 : index
    %28 = vector.load %arg7[%c0_24, %c0_25, %c15] : memref<16x22x21xbf16, #tpu.memory_space<vmem>>, vector<16x22x3xbf16>
    tpu.vector_store %arg7[%c0_24, %c0_25, %c15], %27 {strides = array<i32>} : memref<16x22x21xbf16, #tpu.memory_space<vmem>>, vector<16x22x3xbf16>,
    %c6_i32 = arith.constant 6 : i32
    %29 = arith.addi %4, %c6_i32 : i32
    %30 = arith.index_cast %29 : i32 to index
    %c0_26 = arith.constant 0 : index
    %c0_27 = arith.constant 0 : index
    %31 = vector.load %arg6[%30, %c0_26, %c0_27] : memref<22x22x3xbf16, #tpu.memory_space<vmem>>, vector<16x22x3xbf16>
    %c0_28 = arith.constant 0 : index
    %c0_29 = arith.constant 0 : index
    %c18 = arith.constant 18 : index
    %32 = vector.load %arg7[%c0_28, %c0_29, %c18] : memref<16x22x21xbf16, #tpu.memory_space<vmem>>, vector<16x22x3xbf16>
    tpu.vector_store %arg7[%c0_28, %c0_29, %c18], %31 {strides = array<i32>} : memref<16x22x21xbf16, #tpu.memory_space<vmem>>, vector<16x22x3xbf16>,
    %c0_30 = arith.constant 0 : index
    %c0_31 = arith.constant 0 : index
    %c0_32 = arith.constant 0 : index
    %33 = vector.load %arg7[%c0_30, %c0_31, %c0_32] : memref<16x22x21xbf16, #tpu.memory_space<vmem>>, vector<16x16x21xbf16>
    %c0_33 = arith.constant 0 : index
    %c0_34 = arith.constant 0 : index
    %c0_35 = arith.constant 0 : index
    %34 = vector.load %arg8[%c0_33, %c0_34, %c0_35] : memref<16x16x147xbf16, #tpu.memory_space<vmem>>, vector<16x16x21xbf16>
    tpu.vector_store %arg8[%c0_33, %c0_34, %c0_35], %33 {strides = array<i32>} : memref<16x16x147xbf16, #tpu.memory_space<vmem>>, vector<16x16x21xbf16>,
    %c0_36 = arith.constant 0 : index
    %c1 = arith.constant 1 : index
    %c0_37 = arith.constant 0 : index
    %35 = vector.load %arg7[%c0_36, %c1, %c0_37] : memref<16x22x21xbf16, #tpu.memory_space<vmem>>, vector<16x16x21xbf16>
    %c0_38 = arith.constant 0 : index
    %c0_39 = arith.constant 0 : index
    %c21 = arith.constant 21 : index
    %36 = vector.load %arg8[%c0_38, %c0_39, %c21] : memref<16x16x147xbf16, #tpu.memory_space<vmem>>, vector<16x16x21xbf16>
    tpu.vector_store %arg8[%c0_38, %c0_39, %c21], %35 {strides = array<i32>} : memref<16x16x147xbf16, #tpu.memory_space<vmem>>, vector<16x16x21xbf16>,
    %c0_40 = arith.constant 0 : index
    %c2 = arith.constant 2 : index
    %c0_41 = arith.constant 0 : index
    %37 = vector.load %arg7[%c0_40, %c2, %c0_41] : memref<16x22x21xbf16, #tpu.memory_space<vmem>>, vector<16x16x21xbf16>
    %c0_42 = arith.constant 0 : index
    %c0_43 = arith.constant 0 : index
    %c42 = arith.constant 42 : index
    %38 = vector.load %arg8[%c0_42, %c0_43, %c42] : memref<16x16x147xbf16, #tpu.memory_space<vmem>>, vector<16x16x21xbf16>
    tpu.vector_store %arg8[%c0_42, %c0_43, %c42], %37 {strides = array<i32>} : memref<16x16x147xbf16, #tpu.memory_space<vmem>>, vector<16x16x21xbf16>,
    %c0_44 = arith.constant 0 : index
    %c3_45 = arith.constant 3 : index
    %c0_46 = arith.constant 0 : index
    %39 = vector.load %arg7[%c0_44, %c3_45, %c0_46] : memref<16x22x21xbf16, #tpu.memory_space<vmem>>, vector<16x16x21xbf16>
    %c0_47 = arith.constant 0 : index
    %c0_48 = arith.constant 0 : index
    %c63 = arith.constant 63 : index
    %40 = vector.load %arg8[%c0_47, %c0_48, %c63] : memref<16x16x147xbf16, #tpu.memory_space<vmem>>, vector<16x16x21xbf16>
    tpu.vector_store %arg8[%c0_47, %c0_48, %c63], %39 {strides = array<i32>} : memref<16x16x147xbf16, #tpu.memory_space<vmem>>, vector<16x16x21xbf16>,
    %c0_49 = arith.constant 0 : index
    %c4 = arith.constant 4 : index
    %c0_50 = arith.constant 0 : index
    %41 = vector.load %arg7[%c0_49, %c4, %c0_50] : memref<16x22x21xbf16, #tpu.memory_space<vmem>>, vector<16x16x21xbf16>
    %c0_51 = arith.constant 0 : index
    %c0_52 = arith.constant 0 : index
    %c84 = arith.constant 84 : index
    %42 = vector.load %arg8[%c0_51, %c0_52, %c84] : memref<16x16x147xbf16, #tpu.memory_space<vmem>>, vector<16x16x21xbf16>
    tpu.vector_store %arg8[%c0_51, %c0_52, %c84], %41 {strides = array<i32>} : memref<16x16x147xbf16, #tpu.memory_space<vmem>>, vector<16x16x21xbf16>,
    %c0_53 = arith.constant 0 : index
    %c5 = arith.constant 5 : index
    %c0_54 = arith.constant 0 : index
    %43 = vector.load %arg7[%c0_53, %c5, %c0_54] : memref<16x22x21xbf16, #tpu.memory_space<vmem>>, vector<16x16x21xbf16>
    %c0_55 = arith.constant 0 : index
    %c0_56 = arith.constant 0 : index
    %c105 = arith.constant 105 : index
    %44 = vector.load %arg8[%c0_55, %c0_56, %c105] : memref<16x16x147xbf16, #tpu.memory_space<vmem>>, vector<16x16x21xbf16>
    tpu.vector_store %arg8[%c0_55, %c0_56, %c105], %43 {strides = array<i32>} : memref<16x16x147xbf16, #tpu.memory_space<vmem>>, vector<16x16x21xbf16>,
    %c0_57 = arith.constant 0 : index
    %c6_58 = arith.constant 6 : index
    %c0_59 = arith.constant 0 : index
    %45 = vector.load %arg7[%c0_57, %c6_58, %c0_59] : memref<16x22x21xbf16, #tpu.memory_space<vmem>>, vector<16x16x21xbf16>
    %c0_60 = arith.constant 0 : index
    %c0_61 = arith.constant 0 : index
    %c126 = arith.constant 126 : index
    %46 = vector.load %arg8[%c0_60, %c0_61, %c126] : memref<16x16x147xbf16, #tpu.memory_space<vmem>>, vector<16x16x21xbf16>
    tpu.vector_store %arg8[%c0_60, %c0_61, %c126], %45 {strides = array<i32>} : memref<16x16x147xbf16, #tpu.memory_space<vmem>>, vector<16x16x21xbf16>,
    %c0_62 = arith.constant 0 : index
    %c0_63 = arith.constant 0 : index
    %c0_64 = arith.constant 0 : index
    %47 = vector.load %arg8[%c0_62, %c0_63, %c0_64] : memref<16x16x147xbf16, #tpu.memory_space<vmem>>, vector<16x16x147xbf16>
    %48 = vector.shape_cast %47 : vector<16x16x147xbf16> to vector<256x147xbf16>
    %c0_65 = arith.constant 0 : index
    %c0_66 = arith.constant 0 : index
    %49 = vector.load %arg3[%c0_65, %c0_66] : memref<147x32xbf16, #tpu.memory_space<vmem>>, vector<147x32xbf16>
    %cst = arith.constant dense<0.000000e+00> : vector<256x32xf32>
    %50 = tpu.matmul %48, %49, %cst {dimension_numbers = #tpu.dot_dimension_numbers<[1], [0], [0], [1], [0, 0, 1, 1], [], []>} : vector<256x147xbf16>, vector<147x32xbf16>, vector<256x32xf32> -> vector<256x32xf32>
    %c0_67 = arith.constant 0 : index
    %c0_68 = arith.constant 0 : index
    %51 = vector.load %arg4[%c0_67, %c0_68] : memref<1x32xf32, #tpu.memory_space<vmem>>, vector<1x32xf32>
    %52 = vector.broadcast %51 : vector<1x32xf32> to vector<256x32xf32>
    %53 = arith.addf %50, %52 : vector<256x32xf32>
    %cst_69 = arith.constant 0.000000e+00 : f32
    %54 = vector.broadcast %cst_69 : f32 to vector<256x32xf32>
    %55 = arith.maximumf %53, %54 : vector<256x32xf32>
    %56 = vector.shape_cast %55 : vector<256x32xf32> to vector<16x16x32xf32>
    %57 = arith.truncf %56 : vector<16x16x32xf32> to vector<16x16x32xbf16>
    %c0_70 = arith.constant 0 : index
    %c0_71 = arith.constant 0 : index
    %c0_72 = arith.constant 0 : index
    %c0_73 = arith.constant 0 : index
    %58 = vector.load %arg5[%c0_70, %c0_71, %c0_72, %c0_73] : memref<1x16x16x32xbf16, #tpu.memory_space<vmem>>, vector<1x16x16x32xbf16>
    %59 = vector.shape_cast %58 : vector<1x16x16x32xbf16> to vector<16x16x32xbf16>
    %60 = vector.shape_cast %57 : vector<16x16x32xbf16> to vector<1x16x16x32xbf16>
    tpu.vector_store %arg5[%c0_70, %c0_71, %c0_72, %c0_73], %60 {strides = array<i32>} : memref<1x16x16x32xbf16, #tpu.memory_space<vmem>>, vector<1x16x16x32xbf16>,
    return
  }
  func.func @transform_0(%arg0: i32, %arg1: i32) -> (i32, i32, i32, i32) {
    %c0_i32 = arith.constant 0 : i32
    %c0_i32_0 = arith.constant 0 : i32
    %c0_i32_1 = arith.constant 0 : i32
    %c0_i32_2 = arith.constant 0 : i32
    return %arg0, %c0_i32, %c0_i32_0, %c0_i32_1 : i32, i32, i32, i32
  }
  func.func @transform_1(%arg0: i32, %arg1: i32) -> (i32, i32) {
    %c0_i32 = arith.constant 0 : i32
    %c0_i32_0 = arith.constant 0 : i32
    %c0_i32_1 = arith.constant 0 : i32
    return %c0_i32, %c0_i32_0 : i32, i32
  }
  func.func @transform_2(%arg0: i32, %arg1: i32) -> (i32, i32) {
    %c0_i32 = arith.constant 0 : i32
    %c0_i32_0 = arith.constant 0 : i32
    %c0_i32_1 = arith.constant 0 : i32
    return %c0_i32, %c0_i32_0 : i32, i32
  }
  func.func @transform_3(%arg0: i32, %arg1: i32) -> (i32, i32, i32, i32) {
    %c0_i32 = arith.constant 0 : i32
    %c0_i32_0 = arith.constant 0 : i32
    %c0_i32_1 = arith.constant 0 : i32
    return %arg0, %arg1, %c0_i32, %c0_i32_0 : i32, i32, i32, i32
  }
}

</mosaic_0001>

<llo_original>
// kernel: tpu_custom_call.1
$region0: #{tpu_custom_call.1}
  #allocation0 [shape = 'u32[]', space=smem, size = 0x4, offset = 0x4, fixed_abs, tag = 'smem constant byte address 0x4 - core index']
  #allocation1 [shape = 'u32[144,128]{1,0:T(1,128)}', space=vmem, size = 0x12000, scoped, tag = 'internal scratch']
  #allocation2 [shape = 'bf16[22,22,3]{2,1,0:T(8,128)(2,1)}', space=vmem, size = 0x21000, scoped, tag = 'scratch operand']
  #allocation3 [shape = 'bf16[16,22,21]{2,1,0:T(8,128)(2,1)}', space=vmem, size = 0x18000, scoped, tag = 'scratch operand']
  #allocation4 [shape = 'bf16[16,16,147]{2,1,0:T(8,128)(2,1)}', space=vmem, size = 0x20000, scoped, tag = 'scratch operand']
  %s0 = inlined_call_operand.vmem [shape: bf16[2,16,16,3], index: 0, kind: input, shape index: {}]
  %s1 = inlined_call_operand.vmem [shape: bf16[147,32], index: 1, kind: input, shape index: {}]
  %s2 = inlined_call_operand.vmem [shape: f32[1,32], index: 2, kind: input, shape index: {}]
  %s3 = inlined_call_operand.hbm [shape: bf16[2,16,16,32], index: 3, kind: output, shape index: {}]
  %s4 = sld [smem:[#allocation0]]
  $region49: #{tpu_custom_call.1} parent=0
    _
  %s6 = ssub.s32 1, %s4
  %s7 = scalar_select 0, %s6, %s4
  $region1: #{tpu_custom_call.1} parent=0
    #allocation5 [shape = 'u8[131072]{0}', space=vmem, size = 0x20000, scoped, tag = 'output window, operand 0']
    #allocation6 [shape = 's32[2]{0}', space=sflag, size = 0x8, scoped, tag = 'scoped memory for tpu_custom_call.1']
    %8 = vsyncpa [#allocation6], 0
    %s9 = scalar_lea.sflag [#allocation6], 1
    %10 = vsyncpa %s9, 0
    loop: start=0, step=1, limit=4
    $region2: #{tpu_custom_call.1} parent=1 // loop_pre_header
      _
    $region3: #{tpu_custom_call.1} parent=1 // loop_header
      %s12 = sphi 0, %s16
      %p13 = scmp.ge.s32.totalorder %s12, 4
      %s19 = sphi 0, %s31
      %s20 = sphi 0, %s27
      %s21 = sphi 0, %s19
      %s22 = sphi 0, %s20
      %s23 = sphi 0, %s21
      %s24 = sphi 0, %s22
      %s34 = sphi 0, %s36
      %s37 = sphi 0, %s34
      %s38 = sphi 0, %s37
      %s54 = sphi 0, %s38
      %s58 = sphi 0, %s58
      %s60 = sphi 0, %s58
      %s61 = sphi 0, %s60
      %s75 = sphi 0, %s61
      %s79 = sphi 0, %s79
      %s81 = sphi 0, %s79
      %s82 = sphi 0, %s81
      %s96 = sphi 0, %s82
      %s104 = sphi 0, %s106
      %s107 = sphi 0, %s104
      %s108 = sphi 0, %s107
      %s124 = sphi 0, %s108
    $region4: #{tpu_custom_call.1} parent=1 // loop_header_branch
      %15 = sbr.rel (%p13) target = $region8
    $region5: #{tpu_custom_call.1} parent=1 // loop_body
      %s17 = ssub.s32 %s12, 1
      %s18 = ssub.s32 %s12, 2
      %s25 = sadd.s32 1, %s20
      %p26 = scmp.ge.s32.totalorder %s25, 1
      %s27 = scalar_select %p26, 0, %s25
      %s28 = sadd.s32 1, %s19
      %s29 = scalar_select %p26, %s28, %s19
      %p30 = scmp.ge.s32.totalorder %s29, 2
      %s31 = scalar_select %p30, 0, %s29
      %s32 = ssub.s32 %s19, %s31
      %p33 = scmp.eq.s32.totalorder %s32, 0
      %s35 = sadd.s32 %s34, 1
      %s36 = scalar_select %p33, %s34, %s35
      %p39 = pneg %p33
      %p40 = scmp.eq.s32.totalorder %s12, 1
      %p41 = por %p39, %p40
      %p42 = scmp.ne.s32.totalorder %s34, %s37
      %p43 = scmp.eq.s32.totalorder %s12, 0
      %p44 = por %p42, %p43
      %p45 = scmp.ne.s32.totalorder %s34, %s37
      %p46 = scmp.eq.s32.totalorder %s17, 1
      %p47 = por %p45, %p46
      %p48 = scmp.ne.s32.totalorder %s37, %s38
      %p49 = scmp.eq.s32.totalorder %s17, 0
      %p50 = por %p48, %p49
      %p51 = scmp.ne.s32.totalorder %s37, %s38
      %p52 = scmp.eq.s32.totalorder %s18, 1
      %p53 = por %p51, %p52
      %p55 = scmp.ne.s32.totalorder %s38, %s54
      %p56 = scmp.eq.s32.totalorder %s18, 0
      %p57 = por %p55, %p56
      %s59 = sadd.s32 %s58, 1
      %p62 = scmp.eq.s32.totalorder %s12, 1
      %p63 = scmp.ne.s32.totalorder %s58, %s60
      %p64 = scmp.eq.s32.totalorder %s12, 0
      %p65 = por %p63, %p64
      %p66 = scmp.ne.s32.totalorder %s58, %s60
      %p67 = scmp.eq.s32.totalorder %s17, 1
      %p68 = por %p66, %p67
      %p69 = scmp.ne.s32.totalorder %s60, %s61
      %p70 = scmp.eq.s32.totalorder %s17, 0
      %p71 = por %p69, %p70
      %p72 = scmp.ne.s32.totalorder %s60, %s61
      %p73 = scmp.eq.s32.totalorder %s18, 1
      %p74 = por %p72, %p73
      %p76 = scmp.ne.s32.totalorder %s61, %s75
      %p77 = scmp.eq.s32.totalorder %s18, 0
      %p78 = por %p76, %p77
      %s80 = sadd.s32 %s79, 1
      %p83 = scmp.eq.s32.totalorder %s12, 1
      %p84 = scmp.ne.s32.totalorder %s79, %s81
      %p85 = scmp.eq.s32.totalorder %s12, 0
      %p86 = por %p84, %p85
      %p87 = scmp.ne.s32.totalorder %s79, %s81
      %p88 = scmp.eq.s32.totalorder %s17, 1
      %p89 = por %p87, %p88
      %p90 = scmp.ne.s32.totalorder %s81, %s82
      %p91 = scmp.eq.s32.totalorder %s17, 0
      %p92 = por %p90, %p91
      %p93 = scmp.ne.s32.totalorder %s81, %s82
      %p94 = scmp.eq.s32.totalorder %s18, 1
      %p95 = por %p93, %p94
      %p97 = scmp.ne.s32.totalorder %s82, %s96
      %p98 = scmp.eq.s32.totalorder %s18, 0
      %p99 = por %p97, %p98
      %s100 = ssub.s32 %s19, %s31
      %s101 = ssub.s32 %s20, %s27
      %s102 = sor.u32 %s100, %s101
      %p103 = scmp.eq.s32.totalorder %s102, 0
      %s105 = sadd.s32 %s104, 1
      %s106 = scalar_select %p103, %s104, %s105
      %p109 = pneg %p103
      %p110 = scmp.eq.s32.totalorder %s12, 1
      %p111 = por %p109, %p110
      %p112 = scmp.ne.s32.totalorder %s104, %s107
      %p113 = scmp.eq.s32.totalorder %s12, 0
      %p114 = por %p112, %p113
      %p115 = scmp.ne.s32.totalorder %s104, %s107
      %p116 = scmp.eq.s32.totalorder %s17, 1
      %p117 = por %p115, %p116
      %p118 = scmp.ne.s32.totalorder %s107, %s108
      %p119 = scmp.eq.s32.totalorder %s17, 0
      %p120 = por %p118, %p119
      %p121 = scmp.ne.s32.totalorder %s107, %s108
      %p122 = scmp.eq.s32.totalorder %s18, 1
      %p123 = por %p121, %p122
      %p125 = scmp.ne.s32.totalorder %s108, %s124
      %p126 = scmp.eq.s32.totalorder %s18, 0
      %p127 = por %p125, %p126
      %p128 = scmp.le.s32.totalorder 1, %s12
      %p129 = scmp.lt.s32.totalorder %s12, 3
      %p130 = pnand %p128, %p129
      %p131 = pneg %p130
      // Predicated region
      $region9: #{tpu_custom_call.1} parent=5 // pred_check
        _
      $region10: #{tpu_custom_call.1} parent=5 // pred_check_branch
        %133 = sbr.rel (%p130) target = $region12
      $region11: #{tpu_custom_call.1} parent=5 // pred_region
        %s134 = ssub.s32 %s12, 1
        // Predicated region
        $region13: #{tpu_custom_call.1} parent=11 // pred_check
          %p135 = pneg %p71
        $region14: #{tpu_custom_call.1} parent=11 // pred_check_branch
          %137 = sbr.rel (%p135) target = $region16
        $region15: #{tpu_custom_call.1} parent=11 // pred_region
          _
        $region16: #{tpu_custom_call.1} parent=11 // pred_fallthru
          _
        // Predicated region
        $region17: #{tpu_custom_call.1} parent=11 // pred_check
          %p138 = pneg %p92
        $region18: #{tpu_custom_call.1} parent=11 // pred_check_branch
          %140 = sbr.rel (%p138) target = $region20
        $region19: #{tpu_custom_call.1} parent=11 // pred_region
          _
        $region20: #{tpu_custom_call.1} parent=11 // pred_fallthru
          _
      $region12: #{tpu_custom_call.1} parent=5 // pred_fallthru
        _
      %p141 = scmp.lt.s32.totalorder %s12, 2
      // Predicated region
      $region21: #{tpu_custom_call.1} parent=5 // pred_check
        %p142 = pneg %p141
      $region22: #{tpu_custom_call.1} parent=5 // pred_check_branch
        %144 = sbr.rel (%p142) target = $region24
      $region23: #{tpu_custom_call.1} parent=5 // pred_region
        // Predicated region
        $region25: #{tpu_custom_call.1} parent=23 // pred_check
          %p145 = pneg %p44
        $region26: #{tpu_custom_call.1} parent=23 // pred_check_branch
          %147 = sbr.rel (%p145) target = $region28
        $region27: #{tpu_custom_call.1} parent=23 // pred_region
          %p148 = scmp.lt.s32.totalorder %s19, 1
          %s149 = scalar_select %p148, %s19, 1
          %s150 = smul.addr %s149, 32
          %s151 = smul.addr %s150, 4
          %s152 = scalar_lea.vmem %s0, %s151
        $region28: #{tpu_custom_call.1} parent=23 // pred_fallthru
          _
      $region24: #{tpu_custom_call.1} parent=5 // pred_fallthru
        _
      %p153 = scmp.le.s32.totalorder 1, %s12
      %p154 = scmp.lt.s32.totalorder %s12, 3
      %p155 = pnand %p153, %p154
      %p156 = pneg %p155
      // Predicated region
      $region29: #{tpu_custom_call.1} parent=5 // pred_check
        _
      $region30: #{tpu_custom_call.1} parent=5 // pred_check_branch
        %158 = sbr.rel (%p155) target = $region32
      $region31: #{tpu_custom_call.1} parent=5 // pred_region
        %s159 = ssub.s32 %s12, 1
        %p160 = scmp.lt.s32.totalorder %s21, 1
        %s161 = scalar_select %p160, %s21, 1
        %s162 = smul.addr %s161, 32
        %s163 = smul.addr %s162, 4
        %s164 = scalar_lea.vmem %s0, %s163
        %p165 = pneg %p50
        %p166 = pneg %p47
        %p167 = pneg %p71
        %p168 = pneg %p68
        %p169 = pneg %p92
        %p170 = pneg %p89
        %p171 = pneg %p120
        %p172 = pneg %p117
        %s173 = sand.u32 %s107, 1
        %s174 = scalar_lea.sflag [#allocation6], %s173
        %s175 = sand.u32 %s107, 1
        %s176 = smul.addr %s175, 128
        %s177 = scalar_lea.vmem [#allocation5], %s176
        %p178 = scmp.lt.s32.totalorder %s21, 1
        %s179 = scalar_select %p178, %s21, 1
        %s180 = smul.addr %s179, 32
        %s181 = smul.addr %s180, 4
        %s182 = scalar_lea.vmem %s0, %s181
        %s183 = smul.u32 16, %s22
        %p185 = scmp.eq.s32.totalorder %s22, 0
        // Predicated region
        $region33: #{tpu_custom_call.1} parent=31 // pred_check
          %p186 = pneg %p185
        $region34: #{tpu_custom_call.1} parent=31 // pred_check_branch
          %188 = sbr.rel (%p186) target = $region36
        $region35: #{tpu_custom_call.1} parent=31 // pred_region
          %vm189 = vcmask 19456
          %190 = vst.msk [vmem:[#allocation2] sm:$0xf] %vm189, 0
          %191 = vst.msk [vmem:[#allocation2 + $0x4] sm:$0xf] %vm189, 0
          %vm192 = vcmask 18432
          %193 = vst.msk [vmem:[#allocation2 + $0x8] sm:$0x7] %vm192, 0
          %194 = vst.msk [vmem:[#allocation2 + $0xc] sm:$0xf] %vm189, 0
          %195 = vst.msk [vmem:[#allocation2 + $0x10] sm:$0xf] %vm189, 0
          %196 = vst.msk [vmem:[#allocation2 + $0x14] sm:$0x7] %vm192, 0
          %197 = vst.msk [vmem:[#allocation2 + $0x18] sm:$0xf] %vm189, 0
          %198 = vst.msk [vmem:[#allocation2 + $0x1c] sm:$0xf] %vm189, 0
          %199 = vst.msk [vmem:[#allocation2 + $0x20] sm:$0x7] %vm192, 0
          %200 = vst.msk [vmem:[#allocation2 + $0x24] sm:$0xf] %vm189, 0
          %201 = vst.msk [vmem:[#allocation2 + $0x28] sm:$0xf] %vm189, 0
          %202 = vst.msk [vmem:[#allocation2 + $0x2c] sm:$0x7] %vm192, 0
          %203 = vst.msk [vmem:[#allocation2 + $0x30] sm:$0xf] %vm189, 0
          %204 = vst.msk [vmem:[#allocation2 + $0x34] sm:$0xf] %vm189, 0
          %205 = vst.msk [vmem:[#allocation2 + $0x38] sm:$0x7] %vm192, 0
          %206 = vst.msk [vmem:[#allocation2 + $0x3c] sm:$0xf] %vm189, 0
          %207 = vst.msk [vmem:[#allocation2 + $0x40] sm:$0xf] %vm189, 0
          %208 = vst.msk [vmem:[#allocation2 + $0x44] sm:$0x7] %vm192, 0
          %209 = vst.msk [vmem:[#allocation2 + $0x48] sm:$0xf] %vm189, 0
          %210 = vst.msk [vmem:[#allocation2 + $0x4c] sm:$0xf] %vm189, 0
          %211 = vst.msk [vmem:[#allocation2 + $0x50] sm:$0x7] %vm192, 0
          %212 = vst.msk [vmem:[#allocation2 + $0x54] sm:$0xf] %vm189, 0
          %213 = vst.msk [vmem:[#allocation2 + $0x58] sm:$0xf] %vm189, 0
          %214 = vst.msk [vmem:[#allocation2 + $0x5c] sm:$0x7] %vm192, 0
          %215 = vst.msk [vmem:[#allocation2 + $0x60] sm:$0xf] %vm189, 0
          %216 = vst.msk [vmem:[#allocation2 + $0x64] sm:$0xf] %vm189, 0
          %217 = vst.msk [vmem:[#allocation2 + $0x68] sm:$0x7] %vm192, 0
          %218 = vst.msk [vmem:[#allocation2 + $0x6c] sm:$0xf] %vm189, 0
          %219 = vst.msk [vmem:[#allocation2 + $0x70] sm:$0xf] %vm189, 0
          %220 = vst.msk [vmem:[#allocation2 + $0x74] sm:$0x7] %vm192, 0
          %221 = vst.msk [vmem:[#allocation2 + $0x78] sm:$0xf] %vm189, 0
          %222 = vst.msk [vmem:[#allocation2 + $0x7c] sm:$0xf] %vm189, 0
          %223 = vst.msk [vmem:[#allocation2 + $0x80] sm:$0x7] %vm192, 0
          %224 = vst.msk [vmem:[#allocation2 + $0x84] sm:$0xf] %vm189, 0
          %225 = vst.msk [vmem:[#allocation2 + $0x88] sm:$0xf] %vm189, 0
          %226 = vst.msk [vmem:[#allocation2 + $0x8c] sm:$0x7] %vm192, 0
          %227 = vst.msk [vmem:[#allocation2 + $0x90] sm:$0xf] %vm189, 0
          %228 = vst.msk [vmem:[#allocation2 + $0x94] sm:$0xf] %vm189, 0
          %229 = vst.msk [vmem:[#allocation2 + $0x98] sm:$0x7] %vm192, 0
          %230 = vst.msk [vmem:[#allocation2 + $0x9c] sm:$0xf] %vm189, 0
          %231 = vst.msk [vmem:[#allocation2 + $0xa0] sm:$0xf] %vm189, 0
          %232 = vst.msk [vmem:[#allocation2 + $0xa4] sm:$0x7] %vm192, 0
          %233 = vst.msk [vmem:[#allocation2 + $0xa8] sm:$0xf] %vm189, 0
          %234 = vst.msk [vmem:[#allocation2 + $0xac] sm:$0xf] %vm189, 0
          %235 = vst.msk [vmem:[#allocation2 + $0xb0] sm:$0x7] %vm192, 0
          %236 = vst.msk [vmem:[#allocation2 + $0xb4] sm:$0xf] %vm189, 0
          %237 = vst.msk [vmem:[#allocation2 + $0xb8] sm:$0xf] %vm189, 0
          %238 = vst.msk [vmem:[#allocation2 + $0xbc] sm:$0x7] %vm192, 0
          %239 = vst.msk [vmem:[#allocation2 + $0xc0] sm:$0xf] %vm189, 0
          %240 = vst.msk [vmem:[#allocation2 + $0xc4] sm:$0xf] %vm189, 0
          %241 = vst.msk [vmem:[#allocation2 + $0xc8] sm:$0x7] %vm192, 0
          %242 = vst.msk [vmem:[#allocation2 + $0xcc] sm:$0xf] %vm189, 0
          %243 = vst.msk [vmem:[#allocation2 + $0xd0] sm:$0xf] %vm189, 0
          %244 = vst.msk [vmem:[#allocation2 + $0xd4] sm:$0x7] %vm192, 0
          %245 = vst.msk [vmem:[#allocation2 + $0xd8] sm:$0xf] %vm189, 0
          %246 = vst.msk [vmem:[#allocation2 + $0xdc] sm:$0xf] %vm189, 0
          %247 = vst.msk [vmem:[#allocation2 + $0xe0] sm:$0x7] %vm192, 0
          %248 = vst.msk [vmem:[#allocation2 + $0xe4] sm:$0xf] %vm189, 0
          %249 = vst.msk [vmem:[#allocation2 + $0xe8] sm:$0xf] %vm189, 0
          %250 = vst.msk [vmem:[#allocation2 + $0xec] sm:$0x7] %vm192, 0
          %251 = vst.msk [vmem:[#allocation2 + $0xf0] sm:$0xf] %vm189, 0
          %252 = vst.msk [vmem:[#allocation2 + $0xf4] sm:$0xf] %vm189, 0
          %253 = vst.msk [vmem:[#allocation2 + $0xf8] sm:$0x7] %vm192, 0
          %254 = vst.msk [vmem:[#allocation2 + $0xfc] sm:$0xf] %vm189, 0
          %255 = vst.msk [vmem:[#allocation2 + $0x100] sm:$0xf] %vm189, 0
          %256 = vst.msk [vmem:[#allocation2 + $0x104] sm:$0x7] %vm192, 0
          %v257 = vld [vmem:[%s182] sm:$0xf]
          %v258 = vld [vmem:[%s182 + $0x4] sm:$0xf]
          %v259 = vld [vmem:[%s182 + $0x8] sm:$0xf]
          %v260 = vld [vmem:[%s182 + $0xc] sm:$0xf]
          %v261 = vld [vmem:[%s182 + $0x10] sm:$0xf]
          %v262 = vld [vmem:[%s182 + $0x14] sm:$0xf]
          %v263 = vld [vmem:[%s182 + $0x18] sm:$0xf]
          %v264 = vld [vmem:[%s182 + $0x1c] sm:$0xf]
          %v265 = vld [vmem:[%s182 + $0x20] sm:$0xf]
          %v266 = vld [vmem:[%s182 + $0x24] sm:$0xf]
          %v267 = vld [vmem:[%s182 + $0x28] sm:$0xf]
          %v268 = vld [vmem:[%s182 + $0x2c] sm:$0xf]
          %v269 = vld [vmem:[%s182 + $0x30] sm:$0xf]
          %v270 = vld [vmem:[%s182 + $0x34] sm:$0xf]
          %v271 = vld [vmem:[%s182 + $0x38] sm:$0xf]
          %v272 = vld [vmem:[%s182 + $0x3c] sm:$0xf]
          %v273 = vld [vmem:[%s182 + $0x40] sm:$0xf]
          %v274 = vld [vmem:[%s182 + $0x44] sm:$0xf]
          %v275 = vld [vmem:[%s182 + $0x48] sm:$0xf]
          %v276 = vld [vmem:[%s182 + $0x4c] sm:$0xf]
          %v277 = vld [vmem:[%s182 + $0x50] sm:$0xf]
          %v278 = vld [vmem:[%s182 + $0x54] sm:$0xf]
          %v279 = vld [vmem:[%s182 + $0x58] sm:$0xf]
          %v280 = vld [vmem:[%s182 + $0x5c] sm:$0xf]
          %v281 = vld [vmem:[%s182 + $0x60] sm:$0xf]
          %v282 = vld [vmem:[%s182 + $0x64] sm:$0xf]
          %v283 = vld [vmem:[%s182 + $0x68] sm:$0xf]
          %v284 = vld [vmem:[%s182 + $0x6c] sm:$0xf]
          %v285 = vld [vmem:[%s182 + $0x70] sm:$0xf]
          %v286 = vld [vmem:[%s182 + $0x74] sm:$0xf]
          %v287 = vld [vmem:[%s182 + $0x78] sm:$0xf]
          %v288 = vld [vmem:[%s182 + $0x7c] sm:$0xf]
          %vm289 = vsmask.f32 1280
          %vm290 = vsmask.f32 5392
          %vm291 = vmor %vm289, %vm290
          %v293 = vshrl.u32 %v257, 16
          %v295 = vrot.slane %v293, 6
          %v296 = vshll.u32 %v257, 16
          %v298 = vrot.slane %v296, 7
          %v299 = vor.u32 %v295, %v298
          %v300 = vrot.slane %v299, 4
          %v302 = vshrl.u32 %v258, 16
          %v304 = vrot.slane %v302, 6
          %v305 = vshll.u32 %v258, 16
          %v307 = vrot.slane %v305, 7
          %v308 = vor.u32 %v304, %v307
          %v309 = vsel %vm291, %v300, %v308
          %v310 = vrot.slane %v308, 4
          %v312 = vshrl.u32 %v259, 16
          %v314 = vrot.slane %v312, 6
          %v315 = vshll.u32 %v259, 16
          %v317 = vrot.slane %v315, 7
          %v318 = vor.u32 %v314, %v317
          %v319 = vrot.slane %v318, 4
          %v321 = vshrl.u32 %v260, 16
          %v323 = vrot.slane %v321, 6
          %v324 = vshll.u32 %v260, 16
          %v326 = vrot.slane %v324, 7
          %v327 = vor.u32 %v323, %v326
          %v328 = vsel %vm291, %v319, %v327
          %v329 = vrot.slane %v327, 4
          %v331 = vshrl.u32 %v261, 16
          %v333 = vrot.slane %v331, 6
          %v334 = vshll.u32 %v261, 16
          %v336 = vrot.slane %v334, 7
          %v337 = vor.u32 %v333, %v336
          %v338 = vrot.slane %v337, 4
          %v340 = vshrl.u32 %v262, 16
          %v342 = vrot.slane %v340, 6
          %v343 = vshll.u32 %v262, 16
          %v345 = vrot.slane %v343, 7
          %v346 = vor.u32 %v342, %v345
          %v347 = vsel %vm291, %v338, %v346
          %v348 = vrot.slane %v346, 4
          %v350 = vshrl.u32 %v263, 16
          %v352 = vrot.slane %v350, 6
          %v353 = vshll.u32 %v263, 16
          %v355 = vrot.slane %v353, 7
          %v356 = vor.u32 %v352, %v355
          %v357 = vrot.slane %v356, 4
          %v359 = vshrl.u32 %v264, 16
          %v361 = vrot.slane %v359, 6
          %v362 = vshll.u32 %v264, 16
          %v364 = vrot.slane %v362, 7
          %v365 = vor.u32 %v361, %v364
          %v366 = vsel %vm291, %v357, %v365
          %v367 = vrot.slane %v365, 4
          %v369 = vshrl.u32 %v265, 16
          %v371 = vrot.slane %v369, 6
          %v372 = vshll.u32 %v265, 16
          %v374 = vrot.slane %v372, 7
          %v375 = vor.u32 %v371, %v374
          %v376 = vrot.slane %v375, 4
          %v378 = vshrl.u32 %v266, 16
          %v380 = vrot.slane %v378, 6
          %v381 = vshll.u32 %v266, 16
          %v383 = vrot.slane %v381, 7
          %v384 = vor.u32 %v380, %v383
          %v385 = vsel %vm291, %v376, %v384
          %v386 = vrot.slane %v384, 4
          %v388 = vshrl.u32 %v267, 16
          %v390 = vrot.slane %v388, 6
          %v391 = vshll.u32 %v267, 16
          %v393 = vrot.slane %v391, 7
          %v394 = vor.u32 %v390, %v393
          %v395 = vrot.slane %v394, 4
          %v397 = vshrl.u32 %v268, 16
          %v399 = vrot.slane %v397, 6
          %v400 = vshll.u32 %v268, 16
          %v402 = vrot.slane %v400, 7
          %v403 = vor.u32 %v399, %v402
          %v404 = vsel %vm291, %v395, %v403
          %v405 = vrot.slane %v403, 4
          %v407 = vshrl.u32 %v269, 16
          %v409 = vrot.slane %v407, 6
          %v410 = vshll.u32 %v269, 16
          %v412 = vrot.slane %v410, 7
          %v413 = vor.u32 %v409, %v412
          %v414 = vrot.slane %v413, 4
          %v416 = vshrl.u32 %v270, 16
          %v418 = vrot.slane %v416, 6
          %v419 = vshll.u32 %v270, 16
          %v421 = vrot.slane %v419, 7
          %v422 = vor.u32 %v418, %v421
          %v423 = vsel %vm291, %v414, %v422
          %v424 = vrot.slane %v422, 4
          %v426 = vshrl.u32 %v271, 16
          %v428 = vrot.slane %v426, 6
          %v429 = vshll.u32 %v271, 16
          %v431 = vrot.slane %v429, 7
          %v432 = vor.u32 %v428, %v431
          %v433 = vrot.slane %v432, 4
          %v435 = vshrl.u32 %v272, 16
          %v437 = vrot.slane %v435, 6
          %v438 = vshll.u32 %v272, 16
          %v440 = vrot.slane %v438, 7
          %v441 = vor.u32 %v437, %v440
          %v442 = vsel %vm291, %v433, %v441
          %v443 = vrot.slane %v441, 4
          %v445 = vshrl.u32 %v273, 16
          %v447 = vrot.slane %v445, 6
          %v448 = vshll.u32 %v273, 16
          %v450 = vrot.slane %v448, 7
          %v451 = vor.u32 %v447, %v450
          %v452 = vrot.slane %v451, 4
          %v454 = vshrl.u32 %v274, 16
          %v456 = vrot.slane %v454, 6
          %v457 = vshll.u32 %v274, 16
          %v459 = vrot.slane %v457, 7
          %v460 = vor.u32 %v456, %v459
          %v461 = vsel %vm291, %v452, %v460
          %v462 = vrot.slane %v460, 4
          %v464 = vshrl.u32 %v275, 16
          %v466 = vrot.slane %v464, 6
          %v467 = vshll.u32 %v275, 16
          %v469 = vrot.slane %v467, 7
          %v470 = vor.u32 %v466, %v469
          %v471 = vrot.slane %v470, 4
          %v473 = vshrl.u32 %v276, 16
          %v475 = vrot.slane %v473, 6
          %v476 = vshll.u32 %v276, 16
          %v478 = vrot.slane %v476, 7
          %v479 = vor.u32 %v475, %v478
          %v480 = vsel %vm291, %v471, %v479
          %v481 = vrot.slane %v479, 4
          %v483 = vshrl.u32 %v277, 16
          %v485 = vrot.slane %v483, 6
          %v486 = vshll.u32 %v277, 16
          %v488 = vrot.slane %v486, 7
          %v489 = vor.u32 %v485, %v488
          %v490 = vrot.slane %v489, 4
          %v492 = vshrl.u32 %v278, 16
          %v494 = vrot.slane %v492, 6
          %v495 = vshll.u32 %v278, 16
          %v497 = vrot.slane %v495, 7
          %v498 = vor.u32 %v494, %v497
          %v499 = vsel %vm291, %v490, %v498
          %v500 = vrot.slane %v498, 4
          %v502 = vshrl.u32 %v279, 16
          %v504 = vrot.slane %v502, 6
          %v505 = vshll.u32 %v279, 16
          %v507 = vrot.slane %v505, 7
          %v508 = vor.u32 %v504, %v507
          %v509 = vrot.slane %v508, 4
          %v511 = vshrl.u32 %v280, 16
          %v513 = vrot.slane %v511, 6
          %v514 = vshll.u32 %v280, 16
          %v516 = vrot.slane %v514, 7
          %v517 = vor.u32 %v513, %v516
          %v518 = vsel %vm291, %v509, %v517
          %v519 = vrot.slane %v517, 4
          %v521 = vshrl.u32 %v281, 16
          %v523 = vrot.slane %v521, 6
          %v524 = vshll.u32 %v281, 16
          %v526 = vrot.slane %v524, 7
          %v527 = vor.u32 %v523, %v526
          %v528 = vrot.slane %v527, 4
          %v530 = vshrl.u32 %v282, 16
          %v532 = vrot.slane %v530, 6
          %v533 = vshll.u32 %v282, 16
          %v535 = vrot.slane %v533, 7
          %v536 = vor.u32 %v532, %v535
          %v537 = vsel %vm291, %v528, %v536
          %v538 = vrot.slane %v536, 4
          %v540 = vshrl.u32 %v283, 16
          %v542 = vrot.slane %v540, 6
          %v543 = vshll.u32 %v283, 16
          %v545 = vrot.slane %v543, 7
          %v546 = vor.u32 %v542, %v545
          %v547 = vrot.slane %v546, 4
          %v549 = vshrl.u32 %v284, 16
          %v551 = vrot.slane %v549, 6
          %v552 = vshll.u32 %v284, 16
          %v554 = vrot.slane %v552, 7
          %v555 = vor.u32 %v551, %v554
          %v556 = vsel %vm291, %v547, %v555
          %v557 = vrot.slane %v555, 4
          %v559 = vshrl.u32 %v285, 16
          %v561 = vrot.slane %v559, 6
          %v562 = vshll.u32 %v285, 16
          %v564 = vrot.slane %v562, 7
          %v565 = vor.u32 %v561, %v564
          %v566 = vrot.slane %v565, 4
          %v568 = vshrl.u32 %v286, 16
          %v570 = vrot.slane %v568, 6
          %v571 = vshll.u32 %v286, 16
          %v573 = vrot.slane %v571, 7
          %v574 = vor.u32 %v570, %v573
          %v575 = vsel %vm291, %v566, %v574
          %v576 = vrot.slane %v574, 4
          %v578 = vshrl.u32 %v287, 16
          %v580 = vrot.slane %v578, 6
          %v581 = vshll.u32 %v287, 16
          %v583 = vrot.slane %v581, 7
          %v584 = vor.u32 %v580, %v583
          %v585 = vrot.slane %v584, 4
          %v587 = vshrl.u32 %v288, 16
          %v589 = vrot.slane %v587, 6
          %v590 = vshll.u32 %v288, 16
          %v592 = vrot.slane %v590, 7
          %v593 = vor.u32 %v589, %v592
          %v594 = vsel %vm291, %v585, %v593
          %v595 = vrot.slane %v593, 4
          %s644 = scalar_lea.vmem [#allocation2], 36
          %vm645 = vcmask 19457
          %vm646 = vsmask.f32 7942
          %vm647 = vmand %vm645, %vm646
          %v648 = vld [vmem:[%s644] sm:$0xe]
          %v649 = vsel %vm647, %v299, %v648
          %650 = vst [vmem:[%s644] sm:$0xe] %v649
          %651 = vst.msk [vmem:[%s644 + $0x4] sm:$0xf] %vm189, %v309
          %vm652 = vcmask 17408
          %vm653 = vmand %vm652, %vm289
          %v654 = vld [vmem:[%s644 + $0x8] sm:$0x3]
          %v655 = vsel %vm653, %v310, %v654
          %656 = vst [vmem:[%s644 + $0x8] sm:$0x3] %v655
          %v657 = vld [vmem:[%s644 + $0xc] sm:$0xe]
          %v658 = vsel %vm647, %v318, %v657
          %659 = vst [vmem:[%s644 + $0xc] sm:$0xe] %v658
          %660 = vst.msk [vmem:[%s644 + $0x10] sm:$0xf] %vm189, %v328
          %v661 = vld [vmem:[%s644 + $0x14] sm:$0x3]
          %v662 = vsel %vm653, %v329, %v661
          %663 = vst [vmem:[%s644 + $0x14] sm:$0x3] %v662
          %v664 = vld [vmem:[%s644 + $0x18] sm:$0xe]
          %v665 = vsel %vm647, %v337, %v664
          %666 = vst [vmem:[%s644 + $0x18] sm:$0xe] %v665
          %667 = vst.msk [vmem:[%s644 + $0x1c] sm:$0xf] %vm189, %v347
          %v668 = vld [vmem:[%s644 + $0x20] sm:$0x3]
          %v669 = vsel %vm653, %v348, %v668
          %670 = vst [vmem:[%s644 + $0x20] sm:$0x3] %v669
          %v671 = vld [vmem:[%s644 + $0x24] sm:$0xe]
          %v672 = vsel %vm647, %v356, %v671
          %673 = vst [vmem:[%s644 + $0x24] sm:$0xe] %v672
          %674 = vst.msk [vmem:[%s644 + $0x28] sm:$0xf] %vm189, %v366
          %v675 = vld [vmem:[%s644 + $0x2c] sm:$0x3]
          %v676 = vsel %vm653, %v367, %v675
          %677 = vst [vmem:[%s644 + $0x2c] sm:$0x3] %v676
          %v678 = vld [vmem:[%s644 + $0x30] sm:$0xe]
          %v679 = vsel %vm647, %v375, %v678
          %680 = vst [vmem:[%s644 + $0x30] sm:$0xe] %v679
          %681 = vst.msk [vmem:[%s644 + $0x34] sm:$0xf] %vm189, %v385
          %v682 = vld [vmem:[%s644 + $0x38] sm:$0x3]
          %v683 = vsel %vm653, %v386, %v682
          %684 = vst [vmem:[%s644 + $0x38] sm:$0x3] %v683
          %v685 = vld [vmem:[%s644 + $0x3c] sm:$0xe]
          %v686 = vsel %vm647, %v394, %v685
          %687 = vst [vmem:[%s644 + $0x3c] sm:$0xe] %v686
          %688 = vst.msk [vmem:[%s644 + $0x40] sm:$0xf] %vm189, %v404
          %v689 = vld [vmem:[%s644 + $0x44] sm:$0x3]
          %v690 = vsel %vm653, %v405, %v689
          %691 = vst [vmem:[%s644 + $0x44] sm:$0x3] %v690
          %v692 = vld [vmem:[%s644 + $0x48] sm:$0xe]
          %v693 = vsel %vm647, %v413, %v692
          %694 = vst [vmem:[%s644 + $0x48] sm:$0xe] %v693
          %695 = vst.msk [vmem:[%s644 + $0x4c] sm:$0xf] %vm189, %v423
          %v696 = vld [vmem:[%s644 + $0x50] sm:$0x3]
          %v697 = vsel %vm653, %v424, %v696
          %698 = vst [vmem:[%s644 + $0x50] sm:$0x3] %v697
          %v699 = vld [vmem:[%s644 + $0x54] sm:$0xe]
          %v700 = vsel %vm647, %v432, %v699
          %701 = vst [vmem:[%s644 + $0x54] sm:$0xe] %v700
          %702 = vst.msk [vmem:[%s644 + $0x58] sm:$0xf] %vm189, %v442
          %v703 = vld [vmem:[%s644 + $0x5c] sm:$0x3]
          %v704 = vsel %vm653, %v443, %v703
          %705 = vst [vmem:[%s644 + $0x5c] sm:$0x3] %v704
          %v706 = vld [vmem:[%s644 + $0x60] sm:$0xe]
          %v707 = vsel %vm647, %v451, %v706
          %708 = vst [vmem:[%s644 + $0x60] sm:$0xe] %v707
          %709 = vst.msk [vmem:[%s644 + $0x64] sm:$0xf] %vm189, %v461
          %v710 = vld [vmem:[%s644 + $0x68] sm:$0x3]
          %v711 = vsel %vm653, %v462, %v710
          %712 = vst [vmem:[%s644 + $0x68] sm:$0x3] %v711
          %v713 = vld [vmem:[%s644 + $0x6c] sm:$0xe]
          %v714 = vsel %vm647, %v470, %v713
          %715 = vst [vmem:[%s644 + $0x6c] sm:$0xe] %v714
          %716 = vst.msk [vmem:[%s644 + $0x70] sm:$0xf] %vm189, %v480
          %v717 = vld [vmem:[%s644 + $0x74] sm:$0x3]
          %v718 = vsel %vm653, %v481, %v717
          %719 = vst [vmem:[%s644 + $0x74] sm:$0x3] %v718
          %v720 = vld [vmem:[%s644 + $0x78] sm:$0xe]
          %v721 = vsel %vm647, %v489, %v720
          %722 = vst [vmem:[%s644 + $0x78] sm:$0xe] %v721
          %723 = vst.msk [vmem:[%s644 + $0x7c] sm:$0xf] %vm189, %v499
          %v724 = vld [vmem:[%s644 + $0x80] sm:$0x3]
          %v725 = vsel %vm653, %v500, %v724
          %726 = vst [vmem:[%s644 + $0x80] sm:$0x3] %v725
          %v727 = vld [vmem:[%s644 + $0x84] sm:$0xe]
          %v728 = vsel %vm647, %v508, %v727
          %729 = vst [vmem:[%s644 + $0x84] sm:$0xe] %v728
          %730 = vst.msk [vmem:[%s644 + $0x88] sm:$0xf] %vm189, %v518
          %v731 = vld [vmem:[%s644 + $0x8c] sm:$0x3]
          %v732 = vsel %vm653, %v519, %v731
          %733 = vst [vmem:[%s644 + $0x8c] sm:$0x3] %v732
          %v734 = vld [vmem:[%s644 + $0x90] sm:$0xe]
          %v735 = vsel %vm647, %v527, %v734
          %736 = vst [vmem:[%s644 + $0x90] sm:$0xe] %v735
          %737 = vst.msk [vmem:[%s644 + $0x94] sm:$0xf] %vm189, %v537
          %v738 = vld [vmem:[%s644 + $0x98] sm:$0x3]
          %v739 = vsel %vm653, %v538, %v738
          %740 = vst [vmem:[%s644 + $0x98] sm:$0x3] %v739
          %v741 = vld [vmem:[%s644 + $0x9c] sm:$0xe]
          %v742 = vsel %vm647, %v546, %v741
          %743 = vst [vmem:[%s644 + $0x9c] sm:$0xe] %v742
          %744 = vst.msk [vmem:[%s644 + $0xa0] sm:$0xf] %vm189, %v556
          %v745 = vld [vmem:[%s644 + $0xa4] sm:$0x3]
          %v746 = vsel %vm653, %v557, %v745
          %747 = vst [vmem:[%s644 + $0xa4] sm:$0x3] %v746
          %v748 = vld [vmem:[%s644 + $0xa8] sm:$0xe]
          %v749 = vsel %vm647, %v565, %v748
          %750 = vst [vmem:[%s644 + $0xa8] sm:$0xe] %v749
          %751 = vst.msk [vmem:[%s644 + $0xac] sm:$0xf] %vm189, %v575
          %v752 = vld [vmem:[%s644 + $0xb0] sm:$0x3]
          %v753 = vsel %vm653, %v576, %v752
          %754 = vst [vmem:[%s644 + $0xb0] sm:$0x3] %v753
          %v755 = vld [vmem:[%s644 + $0xb4] sm:$0xe]
          %v756 = vsel %vm647, %v584, %v755
          %757 = vst [vmem:[%s644 + $0xb4] sm:$0xe] %v756
          %758 = vst.msk [vmem:[%s644 + $0xb8] sm:$0xf] %vm189, %v594
          %v759 = vld [vmem:[%s644 + $0xbc] sm:$0x3]
          %v760 = vsel %vm653, %v595, %v759
          %761 = vst [vmem:[%s644 + $0xbc] sm:$0x3] %v760
        $region36: #{tpu_custom_call.1} parent=31 // pred_fallthru
          _
        %s762 = smul.u32 %s22, 16
        %s763 = smul.u32 %s762, 3
        %s764 = smul.addr %s763, 4
        %s765 = scalar_lea.vmem [#allocation2], %s764
        %v766 = vld [vmem:[%s765] sm:$0xf]
        %v767 = vld [vmem:[%s765 + $0x4] sm:$0xf]
        %v768 = vld [vmem:[%s765 + $0x8] sm:$0x7]
        %v769 = vld [vmem:[%s765 + $0xc] sm:$0xf]
        %v770 = vld [vmem:[%s765 + $0x10] sm:$0xf]
        %v771 = vld [vmem:[%s765 + $0x14] sm:$0x7]
        %v772 = vld [vmem:[%s765 + $0x18] sm:$0xf]
        %v773 = vld [vmem:[%s765 + $0x1c] sm:$0xf]
        %v774 = vld [vmem:[%s765 + $0x20] sm:$0x7]
        %v775 = vld [vmem:[%s765 + $0x24] sm:$0xf]
        %v776 = vld [vmem:[%s765 + $0x28] sm:$0xf]
        %v777 = vld [vmem:[%s765 + $0x2c] sm:$0x7]
        %v778 = vld [vmem:[%s765 + $0x30] sm:$0xf]
        %v779 = vld [vmem:[%s765 + $0x34] sm:$0xf]
        %v780 = vld [vmem:[%s765 + $0x38] sm:$0x7]
        %v781 = vld [vmem:[%s765 + $0x3c] sm:$0xf]
        %v782 = vld [vmem:[%s765 + $0x40] sm:$0xf]
        %v783 = vld [vmem:[%s765 + $0x44] sm:$0x7]
        %v784 = vld [vmem:[%s765 + $0x48] sm:$0xf]
        %v785 = vld [vmem:[%s765 + $0x4c] sm:$0xf]
        %v786 = vld [vmem:[%s765 + $0x50] sm:$0x7]
        %v787 = vld [vmem:[%s765 + $0x54] sm:$0xf]
        %v788 = vld [vmem:[%s765 + $0x58] sm:$0xf]
        %v789 = vld [vmem:[%s765 + $0x5c] sm:$0x7]
        %v790 = vld [vmem:[%s765 + $0x60] sm:$0xf]
        %v791 = vld [vmem:[%s765 + $0x64] sm:$0xf]
        %v792 = vld [vmem:[%s765 + $0x68] sm:$0x7]
        %v793 = vld [vmem:[%s765 + $0x6c] sm:$0xf]
        %v794 = vld [vmem:[%s765 + $0x70] sm:$0xf]
        %v795 = vld [vmem:[%s765 + $0x74] sm:$0x7]
        %v796 = vld [vmem:[%s765 + $0x78] sm:$0xf]
        %v797 = vld [vmem:[%s765 + $0x7c] sm:$0xf]
        %v798 = vld [vmem:[%s765 + $0x80] sm:$0x7]
        %v799 = vld [vmem:[%s765 + $0x84] sm:$0xf]
        %v800 = vld [vmem:[%s765 + $0x88] sm:$0xf]
        %v801 = vld [vmem:[%s765 + $0x8c] sm:$0x7]
        %v802 = vld [vmem:[%s765 + $0x90] sm:$0xf]
        %v803 = vld [vmem:[%s765 + $0x94] sm:$0xf]
        %v804 = vld [vmem:[%s765 + $0x98] sm:$0x7]
        %v805 = vld [vmem:[%s765 + $0x9c] sm:$0xf]
        %v806 = vld [vmem:[%s765 + $0xa0] sm:$0xf]
        %v807 = vld [vmem:[%s765 + $0xa4] sm:$0x7]
        %v808 = vld [vmem:[%s765 + $0xa8] sm:$0xf]
        %v809 = vld [vmem:[%s765 + $0xac] sm:$0xf]
        %v810 = vld [vmem:[%s765 + $0xb0] sm:$0x7]
        %v811 = vld [vmem:[%s765 + $0xb4] sm:$0xf]
        %v812 = vld [vmem:[%s765 + $0xb8] sm:$0xf]
        %v813 = vld [vmem:[%s765 + $0xbc] sm:$0x7]
        %vm814 = vcmask 19456
        %815 = vst.msk [vmem:[#allocation3] sm:$0xf] %vm814, %v766
        %816 = vst.msk [vmem:[#allocation3 + $0x4] sm:$0xf] %vm814, %v767
        %vm817 = vcmask 18432
        %818 = vst.msk [vmem:[#allocation3 + $0x8] sm:$0x7] %vm817, %v768
        %819 = vst.msk [vmem:[#allocation3 + $0xc] sm:$0xf] %vm814, %v769
        %820 = vst.msk [vmem:[#allocation3 + $0x10] sm:$0xf] %vm814, %v770
        %821 = vst.msk [vmem:[#allocation3 + $0x14] sm:$0x7] %vm817, %v771
        %822 = vst.msk [vmem:[#allocation3 + $0x18] sm:$0xf] %vm814, %v772
        %823 = vst.msk [vmem:[#allocation3 + $0x1c] sm:$0xf] %vm814, %v773
        %824 = vst.msk [vmem:[#allocation3 + $0x20] sm:$0x7] %vm817, %v774
        %825 = vst.msk [vmem:[#allocation3 + $0x24] sm:$0xf] %vm814, %v775
        %826 = vst.msk [vmem:[#allocation3 + $0x28] sm:$0xf] %vm814, %v776
        %827 = vst.msk [vmem:[#allocation3 + $0x2c] sm:$0x7] %vm817, %v777
        %828 = vst.msk [vmem:[#allocation3 + $0x30] sm:$0xf] %vm814, %v778
        %829 = vst.msk [vmem:[#allocation3 + $0x34] sm:$0xf] %vm814, %v779
        %830 = vst.msk [vmem:[#allocation3 + $0x38] sm:$0x7] %vm817, %v780
        %831 = vst.msk [vmem:[#allocation3 + $0x3c] sm:$0xf] %vm814, %v781
        %832 = vst.msk [vmem:[#allocation3 + $0x40] sm:$0xf] %vm814, %v782
        %833 = vst.msk [vmem:[#allocation3 + $0x44] sm:$0x7] %vm817, %v783
        %834 = vst.msk [vmem:[#allocation3 + $0x48] sm:$0xf] %vm814, %v784
        %835 = vst.msk [vmem:[#allocation3 + $0x4c] sm:$0xf] %vm814, %v785
        %836 = vst.msk [vmem:[#allocation3 + $0x50] sm:$0x7] %vm817, %v786
        %837 = vst.msk [vmem:[#allocation3 + $0x54] sm:$0xf] %vm814, %v787
        %838 = vst.msk [vmem:[#allocation3 + $0x58] sm:$0xf] %vm814, %v788
        %839 = vst.msk [vmem:[#allocation3 + $0x5c] sm:$0x7] %vm817, %v789
        %840 = vst.msk [vmem:[#allocation3 + $0x60] sm:$0xf] %vm814, %v790
        %841 = vst.msk [vmem:[#allocation3 + $0x64] sm:$0xf] %vm814, %v791
        %842 = vst.msk [vmem:[#allocation3 + $0x68] sm:$0x7] %vm817, %v792
        %843 = vst.msk [vmem:[#allocation3 + $0x6c] sm:$0xf] %vm814, %v793
        %844 = vst.msk [vmem:[#allocation3 + $0x70] sm:$0xf] %vm814, %v794
        %845 = vst.msk [vmem:[#allocation3 + $0x74] sm:$0x7] %vm817, %v795
        %846 = vst.msk [vmem:[#allocation3 + $0x78] sm:$0xf] %vm814, %v796
        %847 = vst.msk [vmem:[#allocation3 + $0x7c] sm:$0xf] %vm814, %v797
        %848 = vst.msk [vmem:[#allocation3 + $0x80] sm:$0x7] %vm817, %v798
        %849 = vst.msk [vmem:[#allocation3 + $0x84] sm:$0xf] %vm814, %v799
        %850 = vst.msk [vmem:[#allocation3 + $0x88] sm:$0xf] %vm814, %v800
        %851 = vst.msk [vmem:[#allocation3 + $0x8c] sm:$0x7] %vm817, %v801
        %852 = vst.msk [vmem:[#allocation3 + $0x90] sm:$0xf] %vm814, %v802
        %853 = vst.msk [vmem:[#allocation3 + $0x94] sm:$0xf] %vm814, %v803
        %854 = vst.msk [vmem:[#allocation3 + $0x98] sm:$0x7] %vm817, %v804
        %855 = vst.msk [vmem:[#allocation3 + $0x9c] sm:$0xf] %vm814, %v805
        %856 = vst.msk [vmem:[#allocation3 + $0xa0] sm:$0xf] %vm814, %v806
        %857 = vst.msk [vmem:[#allocation3 + $0xa4] sm:$0x7] %vm817, %v807
        %858 = vst.msk [vmem:[#allocation3 + $0xa8] sm:$0xf] %vm814, %v808
        %859 = vst.msk [vmem:[#allocation3 + $0xac] sm:$0xf] %vm814, %v809
        %860 = vst.msk [vmem:[#allocation3 + $0xb0] sm:$0x7] %vm817, %v810
        %861 = vst.msk [vmem:[#allocation3 + $0xb4] sm:$0xf] %vm814, %v811
        %862 = vst.msk [vmem:[#allocation3 + $0xb8] sm:$0xf] %vm814, %v812
        %863 = vst.msk [vmem:[#allocation3 + $0xbc] sm:$0x7] %vm817, %v813
        %s864 = sadd.s32 %s762, 1
        %s865 = smul.u32 %s864, 3
        %s866 = smul.addr %s865, 4
        %s867 = scalar_lea.vmem [#allocation2], %s866
        %v868 = vld [vmem:[%s867] sm:$0xf]
        %v869 = vld [vmem:[%s867 + $0x4] sm:$0xf]
        %v870 = vld [vmem:[%s867 + $0x8] sm:$0x7]
        %v871 = vld [vmem:[%s867 + $0xc] sm:$0xf]
        %v872 = vld [vmem:[%s867 + $0x10] sm:$0xf]
        %v873 = vld [vmem:[%s867 + $0x14] sm:$0x7]
        %v874 = vld [vmem:[%s867 + $0x18] sm:$0xf]
        %v875 = vld [vmem:[%s867 + $0x1c] sm:$0xf]
        %v876 = vld [vmem:[%s867 + $0x20] sm:$0x7]
        %v877 = vld [vmem:[%s867 + $0x24] sm:$0xf]
        %v878 = vld [vmem:[%s867 + $0x28] sm:$0xf]
        %v879 = vld [vmem:[%s867 + $0x2c] sm:$0x7]
        %v880 = vld [vmem:[%s867 + $0x30] sm:$0xf]
        %v881 = vld [vmem:[%s867 + $0x34] sm:$0xf]
        %v882 = vld [vmem:[%s867 + $0x38] sm:$0x7]
        %v883 = vld [vmem:[%s867 + $0x3c] sm:$0xf]
        %v884 = vld [vmem:[%s867 + $0x40] sm:$0xf]
        %v885 = vld [vmem:[%s867 + $0x44] sm:$0x7]
        %v886 = vld [vmem:[%s867 + $0x48] sm:$0xf]
        %v887 = vld [vmem:[%s867 + $0x4c] sm:$0xf]
        %v888 = vld [vmem:[%s867 + $0x50] sm:$0x7]
        %v889 = vld [vmem:[%s867 + $0x54] sm:$0xf]
        %v890 = vld [vmem:[%s867 + $0x58] sm:$0xf]
        %v891 = vld [vmem:[%s867 + $0x5c] sm:$0x7]
        %v892 = vld [vmem:[%s867 + $0x60] sm:$0xf]
        %v893 = vld [vmem:[%s867 + $0x64] sm:$0xf]
        %v894 = vld [vmem:[%s867 + $0x68] sm:$0x7]
        %v895 = vld [vmem:[%s867 + $0x6c] sm:$0xf]
        %v896 = vld [vmem:[%s867 + $0x70] sm:$0xf]
        %v897 = vld [vmem:[%s867 + $0x74] sm:$0x7]
        %v898 = vld [vmem:[%s867 + $0x78] sm:$0xf]
        %v899 = vld [vmem:[%s867 + $0x7c] sm:$0xf]
        %v900 = vld [vmem:[%s867 + $0x80] sm:$0x7]
        %v901 = vld [vmem:[%s867 + $0x84] sm:$0xf]
        %v902 = vld [vmem:[%s867 + $0x88] sm:$0xf]
        %v903 = vld [vmem:[%s867 + $0x8c] sm:$0x7]
        %v904 = vld [vmem:[%s867 + $0x90] sm:$0xf]
        %v905 = vld [vmem:[%s867 + $0x94] sm:$0xf]
        %v906 = vld [vmem:[%s867 + $0x98] sm:$0x7]
        %v907 = vld [vmem:[%s867 + $0x9c] sm:$0xf]
        %v908 = vld [vmem:[%s867 + $0xa0] sm:$0xf]
        %v909 = vld [vmem:[%s867 + $0xa4] sm:$0x7]
        %v910 = vld [vmem:[%s867 + $0xa8] sm:$0xf]
        %v911 = vld [vmem:[%s867 + $0xac] sm:$0xf]
        %v912 = vld [vmem:[%s867 + $0xb0] sm:$0x7]
        %v913 = vld [vmem:[%s867 + $0xb4] sm:$0xf]
        %v914 = vld [vmem:[%s867 + $0xb8] sm:$0xf]
        %v915 = vld [vmem:[%s867 + $0xbc] sm:$0x7]
        %964 = vrot.lane.b32.xlu0 %v868, 3
        %v965 = vpop.permute.xlu0 %964
        %966 = vrot.lane.b32.xlu0 %v869, 3
        %v967 = vpop.permute.xlu0 %966
        %968 = vrot.lane.b32.xlu0 %v870, 3
        %v969 = vpop.permute.xlu0 %968
        %970 = vrot.lane.b32.xlu0 %v871, 3
        %v971 = vpop.permute.xlu0 %970
        %972 = vrot.lane.b32.xlu0 %v872, 3
        %v973 = vpop.permute.xlu0 %972
        %974 = vrot.lane.b32.xlu0 %v873, 3
        %v975 = vpop.permute.xlu0 %974
        %976 = vrot.lane.b32.xlu0 %v874, 3
        %v977 = vpop.permute.xlu0 %976
        %978 = vrot.lane.b32.xlu0 %v875, 3
        %v979 = vpop.permute.xlu0 %978
        %980 = vrot.lane.b32.xlu0 %v876, 3
        %v981 = vpop.permute.xlu0 %980
        %982 = vrot.lane.b32.xlu0 %v877, 3
        %v983 = vpop.permute.xlu0 %982
        %984 = vrot.lane.b32.xlu0 %v878, 3
        %v985 = vpop.permute.xlu0 %984
        %986 = vrot.lane.b32.xlu0 %v879, 3
        %v987 = vpop.permute.xlu0 %986
        %988 = vrot.lane.b32.xlu0 %v880, 3
        %v989 = vpop.permute.xlu0 %988
        %990 = vrot.lane.b32.xlu0 %v881, 3
        %v991 = vpop.permute.xlu0 %990
        %992 = vrot.lane.b32.xlu0 %v882, 3
        %v993 = vpop.permute.xlu0 %992
        %994 = vrot.lane.b32.xlu0 %v883, 3
        %v995 = vpop.permute.xlu0 %994
        %996 = vrot.lane.b32.xlu0 %v884, 3
        %v997 = vpop.permute.xlu0 %996
        %998 = vrot.lane.b32.xlu0 %v885, 3
        %v999 = vpop.permute.xlu0 %998
        %1000 = vrot.lane.b32.xlu0 %v886, 3
        %v1001 = vpop.permute.xlu0 %1000
        %1002 = vrot.lane.b32.xlu0 %v887, 3
        %v1003 = vpop.permute.xlu0 %1002
        %1004 = vrot.lane.b32.xlu0 %v888, 3
        %v1005 = vpop.permute.xlu0 %1004
        %1006 = vrot.lane.b32.xlu0 %v889, 3
        %v1007 = vpop.permute.xlu0 %1006
        %1008 = vrot.lane.b32.xlu0 %v890, 3
        %v1009 = vpop.permute.xlu0 %1008
        %1010 = vrot.lane.b32.xlu0 %v891, 3
        %v1011 = vpop.permute.xlu0 %1010
        %1012 = vrot.lane.b32.xlu0 %v892, 3
        %v1013 = vpop.permute.xlu0 %1012
        %1014 = vrot.lane.b32.xlu0 %v893, 3
        %v1015 = vpop.permute.xlu0 %1014
        %1016 = vrot.lane.b32.xlu0 %v894, 3
        %v1017 = vpop.permute.xlu0 %1016
        %1018 = vrot.lane.b32.xlu0 %v895, 3
        %v1019 = vpop.permute.xlu0 %1018
        %1020 = vrot.lane.b32.xlu0 %v896, 3
        %v1021 = vpop.permute.xlu0 %1020
        %1022 = vrot.lane.b32.xlu0 %v897, 3
        %v1023 = vpop.permute.xlu0 %1022
        %1024 = vrot.lane.b32.xlu0 %v898, 3
        %v1025 = vpop.permute.xlu0 %1024
        %1026 = vrot.lane.b32.xlu0 %v899, 3
        %v1027 = vpop.permute.xlu0 %1026
        %1028 = vrot.lane.b32.xlu0 %v900, 3
        %v1029 = vpop.permute.xlu0 %1028
        %1030 = vrot.lane.b32.xlu0 %v901, 3
        %v1031 = vpop.permute.xlu0 %1030
        %1032 = vrot.lane.b32.xlu0 %v902, 3
        %v1033 = vpop.permute.xlu0 %1032
        %1034 = vrot.lane.b32.xlu0 %v903, 3
        %v1035 = vpop.permute.xlu0 %1034
        %1036 = vrot.lane.b32.xlu0 %v904, 3
        %v1037 = vpop.permute.xlu0 %1036
        %1038 = vrot.lane.b32.xlu0 %v905, 3
        %v1039 = vpop.permute.xlu0 %1038
        %1040 = vrot.lane.b32.xlu0 %v906, 3
        %v1041 = vpop.permute.xlu0 %1040
        %1042 = vrot.lane.b32.xlu0 %v907, 3
        %v1043 = vpop.permute.xlu0 %1042
        %1044 = vrot.lane.b32.xlu0 %v908, 3
        %v1045 = vpop.permute.xlu0 %1044
        %1046 = vrot.lane.b32.xlu0 %v909, 3
        %v1047 = vpop.permute.xlu0 %1046
        %1048 = vrot.lane.b32.xlu0 %v910, 3
        %v1049 = vpop.permute.xlu0 %1048
        %1050 = vrot.lane.b32.xlu0 %v911, 3
        %v1051 = vpop.permute.xlu0 %1050
        %1052 = vrot.lane.b32.xlu0 %v912, 3
        %v1053 = vpop.permute.xlu0 %1052
        %1054 = vrot.lane.b32.xlu0 %v913, 3
        %v1055 = vpop.permute.xlu0 %1054
        %1056 = vrot.lane.b32.xlu0 %v914, 3
        %v1057 = vpop.permute.xlu0 %1056
        %1058 = vrot.lane.b32.xlu0 %v915, 3
        %v1059 = vpop.permute.xlu0 %1058
        %vm1108 = vcmask 44056
        %1109 = vst.msk [vmem:[#allocation3] sm:$0xf] %vm1108, %v965
        %1110 = vst.msk [vmem:[#allocation3 + $0x4] sm:$0xf] %vm1108, %v967
        %vm1111 = vcmask 43032
        %1112 = vst.msk [vmem:[#allocation3 + $0x8] sm:$0x7] %vm1111, %v969
        %1113 = vst.msk [vmem:[#allocation3 + $0xc] sm:$0xf] %vm1108, %v971
        %1114 = vst.msk [vmem:[#allocation3 + $0x10] sm:$0xf] %vm1108, %v973
        %1115 = vst.msk [vmem:[#allocation3 + $0x14] sm:$0x7] %vm1111, %v975
        %1116 = vst.msk [vmem:[#allocation3 + $0x18] sm:$0xf] %vm1108, %v977
        %1117 = vst.msk [vmem:[#allocation3 + $0x1c] sm:$0xf] %vm1108, %v979
        %1118 = vst.msk [vmem:[#allocation3 + $0x20] sm:$0x7] %vm1111, %v981
        %1119 = vst.msk [vmem:[#allocation3 + $0x24] sm:$0xf] %vm1108, %v983
        %1120 = vst.msk [vmem:[#allocation3 + $0x28] sm:$0xf] %vm1108, %v985
        %1121 = vst.msk [vmem:[#allocation3 + $0x2c] sm:$0x7] %vm1111, %v987
        %1122 = vst.msk [vmem:[#allocation3 + $0x30] sm:$0xf] %vm1108, %v989
        %1123 = vst.msk [vmem:[#allocation3 + $0x34] sm:$0xf] %vm1108, %v991
        %1124 = vst.msk [vmem:[#allocation3 + $0x38] sm:$0x7] %vm1111, %v993
        %1125 = vst.msk [vmem:[#allocation3 + $0x3c] sm:$0xf] %vm1108, %v995
        %1126 = vst.msk [vmem:[#allocation3 + $0x40] sm:$0xf] %vm1108, %v997
        %1127 = vst.msk [vmem:[#allocation3 + $0x44] sm:$0x7] %vm1111, %v999
        %1128 = vst.msk [vmem:[#allocation3 + $0x48] sm:$0xf] %vm1108, %v1001
        %1129 = vst.msk [vmem:[#allocation3 + $0x4c] sm:$0xf] %vm1108, %v1003
        %1130 = vst.msk [vmem:[#allocation3 + $0x50] sm:$0x7] %vm1111, %v1005
        %1131 = vst.msk [vmem:[#allocation3 + $0x54] sm:$0xf] %vm1108, %v1007
        %1132 = vst.msk [vmem:[#allocation3 + $0x58] sm:$0xf] %vm1108, %v1009
        %1133 = vst.msk [vmem:[#allocation3 + $0x5c] sm:$0x7] %vm1111, %v1011
        %1134 = vst.msk [vmem:[#allocation3 + $0x60] sm:$0xf] %vm1108, %v1013
        %1135 = vst.msk [vmem:[#allocation3 + $0x64] sm:$0xf] %vm1108, %v1015
        %1136 = vst.msk [vmem:[#allocation3 + $0x68] sm:$0x7] %vm1111, %v1017
        %1137 = vst.msk [vmem:[#allocation3 + $0x6c] sm:$0xf] %vm1108, %v1019
        %1138 = vst.msk [vmem:[#allocation3 + $0x70] sm:$0xf] %vm1108, %v1021
        %1139 = vst.msk [vmem:[#allocation3 + $0x74] sm:$0x7] %vm1111, %v1023
        %1140 = vst.msk [vmem:[#allocation3 + $0x78] sm:$0xf] %vm1108, %v1025
        %1141 = vst.msk [vmem:[#allocation3 + $0x7c] sm:$0xf] %vm1108, %v1027
        %1142 = vst.msk [vmem:[#allocation3 + $0x80] sm:$0x7] %vm1111, %v1029
        %1143 = vst.msk [vmem:[#allocation3 + $0x84] sm:$0xf] %vm1108, %v1031
        %1144 = vst.msk [vmem:[#allocation3 + $0x88] sm:$0xf] %vm1108, %v1033
        %1145 = vst.msk [vmem:[#allocation3 + $0x8c] sm:$0x7] %vm1111, %v1035
        %1146 = vst.msk [vmem:[#allocation3 + $0x90] sm:$0xf] %vm1108, %v1037
        %1147 = vst.msk [vmem:[#allocation3 + $0x94] sm:$0xf] %vm1108, %v1039
        %1148 = vst.msk [vmem:[#allocation3 + $0x98] sm:$0x7] %vm1111, %v1041
        %1149 = vst.msk [vmem:[#allocation3 + $0x9c] sm:$0xf] %vm1108, %v1043
        %1150 = vst.msk [vmem:[#allocation3 + $0xa0] sm:$0xf] %vm1108, %v1045
        %1151 = vst.msk [vmem:[#allocation3 + $0xa4] sm:$0x7] %vm1111, %v1047
        %1152 = vst.msk [vmem:[#allocation3 + $0xa8] sm:$0xf] %vm1108, %v1049
        %1153 = vst.msk [vmem:[#allocation3 + $0xac] sm:$0xf] %vm1108, %v1051
        %1154 = vst.msk [vmem:[#allocation3 + $0xb0] sm:$0x7] %vm1111, %v1053
        %1155 = vst.msk [vmem:[#allocation3 + $0xb4] sm:$0xf] %vm1108, %v1055
        %1156 = vst.msk [vmem:[#allocation3 + $0xb8] sm:$0xf] %vm1108, %v1057
        %1157 = vst.msk [vmem:[#allocation3 + $0xbc] sm:$0x7] %vm1111, %v1059
        %s1158 = sadd.s32 %s762, 2
        %s1159 = smul.u32 %s1158, 3
        %s1160 = smul.addr %s1159, 4
        %s1161 = scalar_lea.vmem [#allocation2], %s1160
        %v1162 = vld [vmem:[%s1161] sm:$0xf]
        %v1163 = vld [vmem:[%s1161 + $0x4] sm:$0xf]
        %v1164 = vld [vmem:[%s1161 + $0x8] sm:$0x7]
        %v1165 = vld [vmem:[%s1161 + $0xc] sm:$0xf]
        %v1166 = vld [vmem:[%s1161 + $0x10] sm:$0xf]
        %v1167 = vld [vmem:[%s1161 + $0x14] sm:$0x7]
        %v1168 = vld [vmem:[%s1161 + $0x18] sm:$0xf]
        %v1169 = vld [vmem:[%s1161 + $0x1c] sm:$0xf]
        %v1170 = vld [vmem:[%s1161 + $0x20] sm:$0x7]
        %v1171 = vld [vmem:[%s1161 + $0x24] sm:$0xf]
        %v1172 = vld [vmem:[%s1161 + $0x28] sm:$0xf]
        %v1173 = vld [vmem:[%s1161 + $0x2c] sm:$0x7]
        %v1174 = vld [vmem:[%s1161 + $0x30] sm:$0xf]
        %v1175 = vld [vmem:[%s1161 + $0x34] sm:$0xf]
        %v1176 = vld [vmem:[%s1161 + $0x38] sm:$0x7]
        %v1177 = vld [vmem:[%s1161 + $0x3c] sm:$0xf]
        %v1178 = vld [vmem:[%s1161 + $0x40] sm:$0xf]
        %v1179 = vld [vmem:[%s1161 + $0x44] sm:$0x7]
        %v1180 = vld [vmem:[%s1161 + $0x48] sm:$0xf]
        %v1181 = vld [vmem:[%s1161 + $0x4c] sm:$0xf]
        %v1182 = vld [vmem:[%s1161 + $0x50] sm:$0x7]
        %v1183 = vld [vmem:[%s1161 + $0x54] sm:$0xf]
        %v1184 = vld [vmem:[%s1161 + $0x58] sm:$0xf]
        %v1185 = vld [vmem:[%s1161 + $0x5c] sm:$0x7]
        %v1186 = vld [vmem:[%s1161 + $0x60] sm:$0xf]
        %v1187 = vld [vmem:[%s1161 + $0x64] sm:$0xf]
        %v1188 = vld [vmem:[%s1161 + $0x68] sm:$0x7]
        %v1189 = vld [vmem:[%s1161 + $0x6c] sm:$0xf]
        %v1190 = vld [vmem:[%s1161 + $0x70] sm:$0xf]
        %v1191 = vld [vmem:[%s1161 + $0x74] sm:$0x7]
        %v1192 = vld [vmem:[%s1161 + $0x78] sm:$0xf]
        %v1193 = vld [vmem:[%s1161 + $0x7c] sm:$0xf]
        %v1194 = vld [vmem:[%s1161 + $0x80] sm:$0x7]
        %v1195 = vld [vmem:[%s1161 + $0x84] sm:$0xf]
        %v1196 = vld [vmem:[%s1161 + $0x88] sm:$0xf]
        %v1197 = vld [vmem:[%s1161 + $0x8c] sm:$0x7]
        %v1198 = vld [vmem:[%s1161 + $0x90] sm:$0xf]
        %v1199 = vld [vmem:[%s1161 + $0x94] sm:$0xf]
        %v1200 = vld [vmem:[%s1161 + $0x98] sm:$0x7]
        %v1201 = vld [vmem:[%s1161 + $0x9c] sm:$0xf]
        %v1202 = vld [vmem:[%s1161 + $0xa0] sm:$0xf]
        %v1203 = vld [vmem:[%s1161 + $0xa4] sm:$0x7]
        %v1204 = vld [vmem:[%s1161 + $0xa8] sm:$0xf]
        %v1205 = vld [vmem:[%s1161 + $0xac] sm:$0xf]
        %v1206 = vld [vmem:[%s1161 + $0xb0] sm:$0x7]
        %v1207 = vld [vmem:[%s1161 + $0xb4] sm:$0xf]
        %v1208 = vld [vmem:[%s1161 + $0xb8] sm:$0xf]
        %v1209 = vld [vmem:[%s1161 + $0xbc] sm:$0x7]
        %1258 = vrot.lane.b32.xlu0 %v1162, 6
        %v1259 = vpop.permute.xlu0 %1258
        %1260 = vrot.lane.b32.xlu0 %v1163, 6
        %v1261 = vpop.permute.xlu0 %1260
        %1262 = vrot.lane.b32.xlu0 %v1164, 6
        %v1263 = vpop.permute.xlu0 %1262
        %1264 = vrot.lane.b32.xlu0 %v1165, 6
        %v1265 = vpop.permute.xlu0 %1264
        %1266 = vrot.lane.b32.xlu0 %v1166, 6
        %v1267 = vpop.permute.xlu0 %1266
        %1268 = vrot.lane.b32.xlu0 %v1167, 6
        %v1269 = vpop.permute.xlu0 %1268
        %1270 = vrot.lane.b32.xlu0 %v1168, 6
        %v1271 = vpop.permute.xlu0 %1270
        %1272 = vrot.lane.b32.xlu0 %v1169, 6
        %v1273 = vpop.permute.xlu0 %1272
        %1274 = vrot.lane.b32.xlu0 %v1170, 6
        %v1275 = vpop.permute.xlu0 %1274
        %1276 = vrot.lane.b32.xlu0 %v1171, 6
        %v1277 = vpop.permute.xlu0 %1276
        %1278 = vrot.lane.b32.xlu0 %v1172, 6
        %v1279 = vpop.permute.xlu0 %1278
        %1280 = vrot.lane.b32.xlu0 %v1173, 6
        %v1281 = vpop.permute.xlu0 %1280
        %1282 = vrot.lane.b32.xlu0 %v1174, 6
        %v1283 = vpop.permute.xlu0 %1282
        %1284 = vrot.lane.b32.xlu0 %v1175, 6
        %v1285 = vpop.permute.xlu0 %1284
        %1286 = vrot.lane.b32.xlu0 %v1176, 6
        %v1287 = vpop.permute.xlu0 %1286
        %1288 = vrot.lane.b32.xlu0 %v1177, 6
        %v1289 = vpop.permute.xlu0 %1288
        %1290 = vrot.lane.b32.xlu0 %v1178, 6
        %v1291 = vpop.permute.xlu0 %1290
        %1292 = vrot.lane.b32.xlu0 %v1179, 6
        %v1293 = vpop.permute.xlu0 %1292
        %1294 = vrot.lane.b32.xlu0 %v1180, 6
        %v1295 = vpop.permute.xlu0 %1294
        %1296 = vrot.lane.b32.xlu0 %v1181, 6
        %v1297 = vpop.permute.xlu0 %1296
        %1298 = vrot.lane.b32.xlu0 %v1182, 6
        %v1299 = vpop.permute.xlu0 %1298
        %1300 = vrot.lane.b32.xlu0 %v1183, 6
        %v1301 = vpop.permute.xlu0 %1300
        %1302 = vrot.lane.b32.xlu0 %v1184, 6
        %v1303 = vpop.permute.xlu0 %1302
        %1304 = vrot.lane.b32.xlu0 %v1185, 6
        %v1305 = vpop.permute.xlu0 %1304
        %1306 = vrot.lane.b32.xlu0 %v1186, 6
        %v1307 = vpop.permute.xlu0 %1306
        %1308 = vrot.lane.b32.xlu0 %v1187, 6
        %v1309 = vpop.permute.xlu0 %1308
        %1310 = vrot.lane.b32.xlu0 %v1188, 6
        %v1311 = vpop.permute.xlu0 %1310
        %1312 = vrot.lane.b32.xlu0 %v1189, 6
        %v1313 = vpop.permute.xlu0 %1312
        %1314 = vrot.lane.b32.xlu0 %v1190, 6
        %v1315 = vpop.permute.xlu0 %1314
        %1316 = vrot.lane.b32.xlu0 %v1191, 6
        %v1317 = vpop.permute.xlu0 %1316
        %1318 = vrot.lane.b32.xlu0 %v1192, 6
        %v1319 = vpop.permute.xlu0 %1318
        %1320 = vrot.lane.b32.xlu0 %v1193, 6
        %v1321 = vpop.permute.xlu0 %1320
        %1322 = vrot.lane.b32.xlu0 %v1194, 6
        %v1323 = vpop.permute.xlu0 %1322
        %1324 = vrot.lane.b32.xlu0 %v1195, 6
        %v1325 = vpop.permute.xlu0 %1324
        %1326 = vrot.lane.b32.xlu0 %v1196, 6
        %v1327 = vpop.permute.xlu0 %1326
        %1328 = vrot.lane.b32.xlu0 %v1197, 6
        %v1329 = vpop.permute.xlu0 %1328
        %1330 = vrot.lane.b32.xlu0 %v1198, 6
        %v1331 = vpop.permute.xlu0 %1330
        %1332 = vrot.lane.b32.xlu0 %v1199, 6
        %v1333 = vpop.permute.xlu0 %1332
        %1334 = vrot.lane.b32.xlu0 %v1200, 6
        %v1335 = vpop.permute.xlu0 %1334
        %1336 = vrot.lane.b32.xlu0 %v1201, 6
        %v1337 = vpop.permute.xlu0 %1336
        %1338 = vrot.lane.b32.xlu0 %v1202, 6
        %v1339 = vpop.permute.xlu0 %1338
        %1340 = vrot.lane.b32.xlu0 %v1203, 6
        %v1341 = vpop.permute.xlu0 %1340
        %1342 = vrot.lane.b32.xlu0 %v1204, 6
        %v1343 = vpop.permute.xlu0 %1342
        %1344 = vrot.lane.b32.xlu0 %v1205, 6
        %v1345 = vpop.permute.xlu0 %1344
        %1346 = vrot.lane.b32.xlu0 %v1206, 6
        %v1347 = vpop.permute.xlu0 %1346
        %1348 = vrot.lane.b32.xlu0 %v1207, 6
        %v1349 = vpop.permute.xlu0 %1348
        %1350 = vrot.lane.b32.xlu0 %v1208, 6
        %v1351 = vpop.permute.xlu0 %1350
        %1352 = vrot.lane.b32.xlu0 %v1209, 6
        %v1353 = vpop.permute.xlu0 %1352
        %vm1402 = vcmask 68656
        %1403 = vst.msk [vmem:[#allocation3] sm:$0xf] %vm1402, %v1259
        %1404 = vst.msk [vmem:[#allocation3 + $0x4] sm:$0xf] %vm1402, %v1261
        %vm1405 = vcmask 67632
        %1406 = vst.msk [vmem:[#allocation3 + $0x8] sm:$0x7] %vm1405, %v1263
        %1407 = vst.msk [vmem:[#allocation3 + $0xc] sm:$0xf] %vm1402, %v1265
        %1408 = vst.msk [vmem:[#allocation3 + $0x10] sm:$0xf] %vm1402, %v1267
        %1409 = vst.msk [vmem:[#allocation3 + $0x14] sm:$0x7] %vm1405, %v1269
        %1410 = vst.msk [vmem:[#allocation3 + $0x18] sm:$0xf] %vm1402, %v1271
        %1411 = vst.msk [vmem:[#allocation3 + $0x1c] sm:$0xf] %vm1402, %v1273
        %1412 = vst.msk [vmem:[#allocation3 + $0x20] sm:$0x7] %vm1405, %v1275
        %1413 = vst.msk [vmem:[#allocation3 + $0x24] sm:$0xf] %vm1402, %v1277
        %1414 = vst.msk [vmem:[#allocation3 + $0x28] sm:$0xf] %vm1402, %v1279
        %1415 = vst.msk [vmem:[#allocation3 + $0x2c] sm:$0x7] %vm1405, %v1281
        %1416 = vst.msk [vmem:[#allocation3 + $0x30] sm:$0xf] %vm1402, %v1283
        %1417 = vst.msk [vmem:[#allocation3 + $0x34] sm:$0xf] %vm1402, %v1285
        %1418 = vst.msk [vmem:[#allocation3 + $0x38] sm:$0x7] %vm1405, %v1287
        %1419 = vst.msk [vmem:[#allocation3 + $0x3c] sm:$0xf] %vm1402, %v1289
        %1420 = vst.msk [vmem:[#allocation3 + $0x40] sm:$0xf] %vm1402, %v1291
        %1421 = vst.msk [vmem:[#allocation3 + $0x44] sm:$0x7] %vm1405, %v1293
        %1422 = vst.msk [vmem:[#allocation3 + $0x48] sm:$0xf] %vm1402, %v1295
        %1423 = vst.msk [vmem:[#allocation3 + $0x4c] sm:$0xf] %vm1402, %v1297
        %1424 = vst.msk [vmem:[#allocation3 + $0x50] sm:$0x7] %vm1405, %v1299
        %1425 = vst.msk [vmem:[#allocation3 + $0x54] sm:$0xf] %vm1402, %v1301
        %1426 = vst.msk [vmem:[#allocation3 + $0x58] sm:$0xf] %vm1402, %v1303
        %1427 = vst.msk [vmem:[#allocation3 + $0x5c] sm:$0x7] %vm1405, %v1305
        %1428 = vst.msk [vmem:[#allocation3 + $0x60] sm:$0xf] %vm1402, %v1307
        %1429 = vst.msk [vmem:[#allocation3 + $0x64] sm:$0xf] %vm1402, %v1309
        %1430 = vst.msk [vmem:[#allocation3 + $0x68] sm:$0x7] %vm1405, %v1311
        %1431 = vst.msk [vmem:[#allocation3 + $0x6c] sm:$0xf] %vm1402, %v1313
        %1432 = vst.msk [vmem:[#allocation3 + $0x70] sm:$0xf] %vm1402, %v1315
        %1433 = vst.msk [vmem:[#allocation3 + $0x74] sm:$0x7] %vm1405, %v1317
        %1434 = vst.msk [vmem:[#allocation3 + $0x78] sm:$0xf] %vm1402, %v1319
        %1435 = vst.msk [vmem:[#allocation3 + $0x7c] sm:$0xf] %vm1402, %v1321
        %1436 = vst.msk [vmem:[#allocation3 + $0x80] sm:$0x7] %vm1405, %v1323
        %1437 = vst.msk [vmem:[#allocation3 + $0x84] sm:$0xf] %vm1402, %v1325
        %1438 = vst.msk [vmem:[#allocation3 + $0x88] sm:$0xf] %vm1402, %v1327
        %1439 = vst.msk [vmem:[#allocation3 + $0x8c] sm:$0x7] %vm1405, %v1329
        %1440 = vst.msk [vmem:[#allocation3 + $0x90] sm:$0xf] %vm1402, %v1331
        %1441 = vst.msk [vmem:[#allocation3 + $0x94] sm:$0xf] %vm1402, %v1333
        %1442 = vst.msk [vmem:[#allocation3 + $0x98] sm:$0x7] %vm1405, %v1335
        %1443 = vst.msk [vmem:[#allocation3 + $0x9c] sm:$0xf] %vm1402, %v1337
        %1444 = vst.msk [vmem:[#allocation3 + $0xa0] sm:$0xf] %vm1402, %v1339
        %1445 = vst.msk [vmem:[#allocation3 + $0xa4] sm:$0x7] %vm1405, %v1341
        %1446 = vst.msk [vmem:[#allocation3 + $0xa8] sm:$0xf] %vm1402, %v1343
        %1447 = vst.msk [vmem:[#allocation3 + $0xac] sm:$0xf] %vm1402, %v1345
        %1448 = vst.msk [vmem:[#allocation3 + $0xb0] sm:$0x7] %vm1405, %v1347
        %1449 = vst.msk [vmem:[#allocation3 + $0xb4] sm:$0xf] %vm1402, %v1349
        %1450 = vst.msk [vmem:[#allocation3 + $0xb8] sm:$0xf] %vm1402, %v1351
        %1451 = vst.msk [vmem:[#allocation3 + $0xbc] sm:$0x7] %vm1405, %v1353
        %s1452 = sadd.s32 %s762, 3
        %s1453 = smul.u32 %s1452, 3
        %s1454 = smul.addr %s1453, 4
        %s1455 = scalar_lea.vmem [#allocation2], %s1454
        %v1456 = vld [vmem:[%s1455] sm:$0xf]
        %v1457 = vld [vmem:[%s1455 + $0x4] sm:$0xf]
        %v1458 = vld [vmem:[%s1455 + $0x8] sm:$0x7]
        %v1459 = vld [vmem:[%s1455 + $0xc] sm:$0xf]
        %v1460 = vld [vmem:[%s1455 + $0x10] sm:$0xf]
        %v1461 = vld [vmem:[%s1455 + $0x14] sm:$0x7]
        %v1462 = vld [vmem:[%s1455 + $0x18] sm:$0xf]
        %v1463 = vld [vmem:[%s1455 + $0x1c] sm:$0xf]
        %v1464 = vld [vmem:[%s1455 + $0x20] sm:$0x7]
        %v1465 = vld [vmem:[%s1455 + $0x24] sm:$0xf]
        %v1466 = vld [vmem:[%s1455 + $0x28] sm:$0xf]
        %v1467 = vld [vmem:[%s1455 + $0x2c] sm:$0x7]
        %v1468 = vld [vmem:[%s1455 + $0x30] sm:$0xf]
        %v1469 = vld [vmem:[%s1455 + $0x34] sm:$0xf]
        %v1470 = vld [vmem:[%s1455 + $0x38] sm:$0x7]
        %v1471 = vld [vmem:[%s1455 + $0x3c] sm:$0xf]
        %v1472 = vld [vmem:[%s1455 + $0x40] sm:$0xf]
        %v1473 = vld [vmem:[%s1455 + $0x44] sm:$0x7]
        %v1474 = vld [vmem:[%s1455 + $0x48] sm:$0xf]
        %v1475 = vld [vmem:[%s1455 + $0x4c] sm:$0xf]
        %v1476 = vld [vmem:[%s1455 + $0x50] sm:$0x7]
        %v1477 = vld [vmem:[%s1455 + $0x54] sm:$0xf]
        %v1478 = vld [vmem:[%s1455 + $0x58] sm:$0xf]
        %v1479 = vld [vmem:[%s1455 + $0x5c] sm:$0x7]
        %v1480 = vld [vmem:[%s1455 + $0x60] sm:$0xf]
        %v1481 = vld [vmem:[%s1455 + $0x64] sm:$0xf]
        %v1482 = vld [vmem:[%s1455 + $0x68] sm:$0x7]
        %v1483 = vld [vmem:[%s1455 + $0x6c] sm:$0xf]
        %v1484 = vld [vmem:[%s1455 + $0x70] sm:$0xf]
        %v1485 = vld [vmem:[%s1455 + $0x74] sm:$0x7]
        %v1486 = vld [vmem:[%s1455 + $0x78] sm:$0xf]
        %v1487 = vld [vmem:[%s1455 + $0x7c] sm:$0xf]
        %v1488 = vld [vmem:[%s1455 + $0x80] sm:$0x7]
        %v1489 = vld [vmem:[%s1455 + $0x84] sm:$0xf]
        %v1490 = vld [vmem:[%s1455 + $0x88] sm:$0xf]
        %v1491 = vld [vmem:[%s1455 + $0x8c] sm:$0x7]
        %v1492 = vld [vmem:[%s1455 + $0x90] sm:$0xf]
        %v1493 = vld [vmem:[%s1455 + $0x94] sm:$0xf]
        %v1494 = vld [vmem:[%s1455 + $0x98] sm:$0x7]
        %v1495 = vld [vmem:[%s1455 + $0x9c] sm:$0xf]
        %v1496 = vld [vmem:[%s1455 + $0xa0] sm:$0xf]
        %v1497 = vld [vmem:[%s1455 + $0xa4] sm:$0x7]
        %v1498 = vld [vmem:[%s1455 + $0xa8] sm:$0xf]
        %v1499 = vld [vmem:[%s1455 + $0xac] sm:$0xf]
        %v1500 = vld [vmem:[%s1455 + $0xb0] sm:$0x7]
        %v1501 = vld [vmem:[%s1455 + $0xb4] sm:$0xf]
        %v1502 = vld [vmem:[%s1455 + $0xb8] sm:$0xf]
        %v1503 = vld [vmem:[%s1455 + $0xbc] sm:$0x7]
        %1552 = vrot.lane.b32.xlu0 %v1456, 9
        %v1553 = vpop.permute.xlu0 %1552
        %1554 = vrot.lane.b32.xlu0 %v1457, 9
        %v1555 = vpop.permute.xlu0 %1554
        %1556 = vrot.lane.b32.xlu0 %v1458, 9
        %v1557 = vpop.permute.xlu0 %1556
        %1558 = vrot.lane.b32.xlu0 %v1459, 9
        %v1559 = vpop.permute.xlu0 %1558
        %1560 = vrot.lane.b32.xlu0 %v1460, 9
        %v1561 = vpop.permute.xlu0 %1560
        %1562 = vrot.lane.b32.xlu0 %v1461, 9
        %v1563 = vpop.permute.xlu0 %1562
        %1564 = vrot.lane.b32.xlu0 %v1462, 9
        %v1565 = vpop.permute.xlu0 %1564
        %1566 = vrot.lane.b32.xlu0 %v1463, 9
        %v1567 = vpop.permute.xlu0 %1566
        %1568 = vrot.lane.b32.xlu0 %v1464, 9
        %v1569 = vpop.permute.xlu0 %1568
        %1570 = vrot.lane.b32.xlu0 %v1465, 9
        %v1571 = vpop.permute.xlu0 %1570
        %1572 = vrot.lane.b32.xlu0 %v1466, 9
        %v1573 = vpop.permute.xlu0 %1572
        %1574 = vrot.lane.b32.xlu0 %v1467, 9
        %v1575 = vpop.permute.xlu0 %1574
        %1576 = vrot.lane.b32.xlu0 %v1468, 9
        %v1577 = vpop.permute.xlu0 %1576
        %1578 = vrot.lane.b32.xlu0 %v1469, 9
        %v1579 = vpop.permute.xlu0 %1578
        %1580 = vrot.lane.b32.xlu0 %v1470, 9
        %v1581 = vpop.permute.xlu0 %1580
        %1582 = vrot.lane.b32.xlu0 %v1471, 9
        %v1583 = vpop.permute.xlu0 %1582
        %1584 = vrot.lane.b32.xlu0 %v1472, 9
        %v1585 = vpop.permute.xlu0 %1584
        %1586 = vrot.lane.b32.xlu0 %v1473, 9
        %v1587 = vpop.permute.xlu0 %1586
        %1588 = vrot.lane.b32.xlu0 %v1474, 9
        %v1589 = vpop.permute.xlu0 %1588
        %1590 = vrot.lane.b32.xlu0 %v1475, 9
        %v1591 = vpop.permute.xlu0 %1590
        %1592 = vrot.lane.b32.xlu0 %v1476, 9
        %v1593 = vpop.permute.xlu0 %1592
        %1594 = vrot.lane.b32.xlu0 %v1477, 9
        %v1595 = vpop.permute.xlu0 %1594
        %1596 = vrot.lane.b32.xlu0 %v1478, 9
        %v1597 = vpop.permute.xlu0 %1596
        %1598 = vrot.lane.b32.xlu0 %v1479, 9
        %v1599 = vpop.permute.xlu0 %1598
        %1600 = vrot.lane.b32.xlu0 %v1480, 9
        %v1601 = vpop.permute.xlu0 %1600
        %1602 = vrot.lane.b32.xlu0 %v1481, 9
        %v1603 = vpop.permute.xlu0 %1602
        %1604 = vrot.lane.b32.xlu0 %v1482, 9
        %v1605 = vpop.permute.xlu0 %1604
        %1606 = vrot.lane.b32.xlu0 %v1483, 9
        %v1607 = vpop.permute.xlu0 %1606
        %1608 = vrot.lane.b32.xlu0 %v1484, 9
        %v1609 = vpop.permute.xlu0 %1608
        %1610 = vrot.lane.b32.xlu0 %v1485, 9
        %v1611 = vpop.permute.xlu0 %1610
        %1612 = vrot.lane.b32.xlu0 %v1486, 9
        %v1613 = vpop.permute.xlu0 %1612
        %1614 = vrot.lane.b32.xlu0 %v1487, 9
        %v1615 = vpop.permute.xlu0 %1614
        %1616 = vrot.lane.b32.xlu0 %v1488, 9
        %v1617 = vpop.permute.xlu0 %1616
        %1618 = vrot.lane.b32.xlu0 %v1489, 9
        %v1619 = vpop.permute.xlu0 %1618
        %1620 = vrot.lane.b32.xlu0 %v1490, 9
        %v1621 = vpop.permute.xlu0 %1620
        %1622 = vrot.lane.b32.xlu0 %v1491, 9
        %v1623 = vpop.permute.xlu0 %1622
        %1624 = vrot.lane.b32.xlu0 %v1492, 9
        %v1625 = vpop.permute.xlu0 %1624
        %1626 = vrot.lane.b32.xlu0 %v1493, 9
        %v1627 = vpop.permute.xlu0 %1626
        %1628 = vrot.lane.b32.xlu0 %v1494, 9
        %v1629 = vpop.permute.xlu0 %1628
        %1630 = vrot.lane.b32.xlu0 %v1495, 9
        %v1631 = vpop.permute.xlu0 %1630
        %1632 = vrot.lane.b32.xlu0 %v1496, 9
        %v1633 = vpop.permute.xlu0 %1632
        %1634 = vrot.lane.b32.xlu0 %v1497, 9
        %v1635 = vpop.permute.xlu0 %1634
        %1636 = vrot.lane.b32.xlu0 %v1498, 9
        %v1637 = vpop.permute.xlu0 %1636
        %1638 = vrot.lane.b32.xlu0 %v1499, 9
        %v1639 = vpop.permute.xlu0 %1638
        %1640 = vrot.lane.b32.xlu0 %v1500, 9
        %v1641 = vpop.permute.xlu0 %1640
        %1642 = vrot.lane.b32.xlu0 %v1501, 9
        %v1643 = vpop.permute.xlu0 %1642
        %1644 = vrot.lane.b32.xlu0 %v1502, 9
        %v1645 = vpop.permute.xlu0 %1644
        %1646 = vrot.lane.b32.xlu0 %v1503, 9
        %v1647 = vpop.permute.xlu0 %1646
        %vm1696 = vcmask 93256
        %1697 = vst.msk [vmem:[#allocation3] sm:$0xf] %vm1696, %v1553
        %1698 = vst.msk [vmem:[#allocation3 + $0x4] sm:$0xf] %vm1696, %v1555
        %vm1699 = vcmask 92232
        %1700 = vst.msk [vmem:[#allocation3 + $0x8] sm:$0x7] %vm1699, %v1557
        %1701 = vst.msk [vmem:[#allocation3 + $0xc] sm:$0xf] %vm1696, %v1559
        %1702 = vst.msk [vmem:[#allocation3 + $0x10] sm:$0xf] %vm1696, %v1561
        %1703 = vst.msk [vmem:[#allocation3 + $0x14] sm:$0x7] %vm1699, %v1563
        %1704 = vst.msk [vmem:[#allocation3 + $0x18] sm:$0xf] %vm1696, %v1565
        %1705 = vst.msk [vmem:[#allocation3 + $0x1c] sm:$0xf] %vm1696, %v1567
        %1706 = vst.msk [vmem:[#allocation3 + $0x20] sm:$0x7] %vm1699, %v1569
        %1707 = vst.msk [vmem:[#allocation3 + $0x24] sm:$0xf] %vm1696, %v1571
        %1708 = vst.msk [vmem:[#allocation3 + $0x28] sm:$0xf] %vm1696, %v1573
        %1709 = vst.msk [vmem:[#allocation3 + $0x2c] sm:$0x7] %vm1699, %v1575
        %1710 = vst.msk [vmem:[#allocation3 + $0x30] sm:$0xf] %vm1696, %v1577
        %1711 = vst.msk [vmem:[#allocation3 + $0x34] sm:$0xf] %vm1696, %v1579
        %1712 = vst.msk [vmem:[#allocation3 + $0x38] sm:$0x7] %vm1699, %v1581
        %1713 = vst.msk [vmem:[#allocation3 + $0x3c] sm:$0xf] %vm1696, %v1583
        %1714 = vst.msk [vmem:[#allocation3 + $0x40] sm:$0xf] %vm1696, %v1585
        %1715 = vst.msk [vmem:[#allocation3 + $0x44] sm:$0x7] %vm1699, %v1587
        %1716 = vst.msk [vmem:[#allocation3 + $0x48] sm:$0xf] %vm1696, %v1589
        %1717 = vst.msk [vmem:[#allocation3 + $0x4c] sm:$0xf] %vm1696, %v1591
        %1718 = vst.msk [vmem:[#allocation3 + $0x50] sm:$0x7] %vm1699, %v1593
        %1719 = vst.msk [vmem:[#allocation3 + $0x54] sm:$0xf] %vm1696, %v1595
        %1720 = vst.msk [vmem:[#allocation3 + $0x58] sm:$0xf] %vm1696, %v1597
        %1721 = vst.msk [vmem:[#allocation3 + $0x5c] sm:$0x7] %vm1699, %v1599
        %1722 = vst.msk [vmem:[#allocation3 + $0x60] sm:$0xf] %vm1696, %v1601
        %1723 = vst.msk [vmem:[#allocation3 + $0x64] sm:$0xf] %vm1696, %v1603
        %1724 = vst.msk [vmem:[#allocation3 + $0x68] sm:$0x7] %vm1699, %v1605
        %1725 = vst.msk [vmem:[#allocation3 + $0x6c] sm:$0xf] %vm1696, %v1607
        %1726 = vst.msk [vmem:[#allocation3 + $0x70] sm:$0xf] %vm1696, %v1609
        %1727 = vst.msk [vmem:[#allocation3 + $0x74] sm:$0x7] %vm1699, %v1611
        %1728 = vst.msk [vmem:[#allocation3 + $0x78] sm:$0xf] %vm1696, %v1613
        %1729 = vst.msk [vmem:[#allocation3 + $0x7c] sm:$0xf] %vm1696, %v1615
        %1730 = vst.msk [vmem:[#allocation3 + $0x80] sm:$0x7] %vm1699, %v1617
        %1731 = vst.msk [vmem:[#allocation3 + $0x84] sm:$0xf] %vm1696, %v1619
        %1732 = vst.msk [vmem:[#allocation3 + $0x88] sm:$0xf] %vm1696, %v1621
        %1733 = vst.msk [vmem:[#allocation3 + $0x8c] sm:$0x7] %vm1699, %v1623
        %1734 = vst.msk [vmem:[#allocation3 + $0x90] sm:$0xf] %vm1696, %v1625
        %1735 = vst.msk [vmem:[#allocation3 + $0x94] sm:$0xf] %vm1696, %v1627
        %1736 = vst.msk [vmem:[#allocation3 + $0x98] sm:$0x7] %vm1699, %v1629
        %1737 = vst.msk [vmem:[#allocation3 + $0x9c] sm:$0xf] %vm1696, %v1631
        %1738 = vst.msk [vmem:[#allocation3 + $0xa0] sm:$0xf] %vm1696, %v1633
        %1739 = vst.msk [vmem:[#allocation3 + $0xa4] sm:$0x7] %vm1699, %v1635
        %1740 = vst.msk [vmem:[#allocation3 + $0xa8] sm:$0xf] %vm1696, %v1637
        %1741 = vst.msk [vmem:[#allocation3 + $0xac] sm:$0xf] %vm1696, %v1639
        %1742 = vst.msk [vmem:[#allocation3 + $0xb0] sm:$0x7] %vm1699, %v1641
        %1743 = vst.msk [vmem:[#allocation3 + $0xb4] sm:$0xf] %vm1696, %v1643
        %1744 = vst.msk [vmem:[#allocation3 + $0xb8] sm:$0xf] %vm1696, %v1645
        %1745 = vst.msk [vmem:[#allocation3 + $0xbc] sm:$0x7] %vm1699, %v1647
        %s1746 = sadd.s32 %s762, 4
        %s1747 = smul.u32 %s1746, 3
        %s1748 = smul.addr %s1747, 4
        %s1749 = scalar_lea.vmem [#allocation2], %s1748
        %v1750 = vld [vmem:[%s1749] sm:$0xf]
        %v1751 = vld [vmem:[%s1749 + $0x4] sm:$0xf]
        %v1752 = vld [vmem:[%s1749 + $0x8] sm:$0x7]
        %v1753 = vld [vmem:[%s1749 + $0xc] sm:$0xf]
        %v1754 = vld [vmem:[%s1749 + $0x10] sm:$0xf]
        %v1755 = vld [vmem:[%s1749 + $0x14] sm:$0x7]
        %v1756 = vld [vmem:[%s1749 + $0x18] sm:$0xf]
        %v1757 = vld [vmem:[%s1749 + $0x1c] sm:$0xf]
        %v1758 = vld [vmem:[%s1749 + $0x20] sm:$0x7]
        %v1759 = vld [vmem:[%s1749 + $0x24] sm:$0xf]
        %v1760 = vld [vmem:[%s1749 + $0x28] sm:$0xf]
        %v1761 = vld [vmem:[%s1749 + $0x2c] sm:$0x7]
        %v1762 = vld [vmem:[%s1749 + $0x30] sm:$0xf]
        %v1763 = vld [vmem:[%s1749 + $0x34] sm:$0xf]
        %v1764 = vld [vmem:[%s1749 + $0x38] sm:$0x7]
        %v1765 = vld [vmem:[%s1749 + $0x3c] sm:$0xf]
        %v1766 = vld [vmem:[%s1749 + $0x40] sm:$0xf]
        %v1767 = vld [vmem:[%s1749 + $0x44] sm:$0x7]
        %v1768 = vld [vmem:[%s1749 + $0x48] sm:$0xf]
        %v1769 = vld [vmem:[%s1749 + $0x4c] sm:$0xf]
        %v1770 = vld [vmem:[%s1749 + $0x50] sm:$0x7]
        %v1771 = vld [vmem:[%s1749 + $0x54] sm:$0xf]
        %v1772 = vld [vmem:[%s1749 + $0x58] sm:$0xf]
        %v1773 = vld [vmem:[%s1749 + $0x5c] sm:$0x7]
        %v1774 = vld [vmem:[%s1749 + $0x60] sm:$0xf]
        %v1775 = vld [vmem:[%s1749 + $0x64] sm:$0xf]
        %v1776 = vld [vmem:[%s1749 + $0x68] sm:$0x7]
        %v1777 = vld [vmem:[%s1749 + $0x6c] sm:$0xf]
        %v1778 = vld [vmem:[%s1749 + $0x70] sm:$0xf]
        %v1779 = vld [vmem:[%s1749 + $0x74] sm:$0x7]
        %v1780 = vld [vmem:[%s1749 + $0x78] sm:$0xf]
        %v1781 = vld [vmem:[%s1749 + $0x7c] sm:$0xf]
        %v1782 = vld [vmem:[%s1749 + $0x80] sm:$0x7]
        %v1783 = vld [vmem:[%s1749 + $0x84] sm:$0xf]
        %v1784 = vld [vmem:[%s1749 + $0x88] sm:$0xf]
        %v1785 = vld [vmem:[%s1749 + $0x8c] sm:$0x7]
        %v1786 = vld [vmem:[%s1749 + $0x90] sm:$0xf]
        %v1787 = vld [vmem:[%s1749 + $0x94] sm:$0xf]
        %v1788 = vld [vmem:[%s1749 + $0x98] sm:$0x7]
        %v1789 = vld [vmem:[%s1749 + $0x9c] sm:$0xf]
        %v1790 = vld [vmem:[%s1749 + $0xa0] sm:$0xf]
        %v1791 = vld [vmem:[%s1749 + $0xa4] sm:$0x7]
        %v1792 = vld [vmem:[%s1749 + $0xa8] sm:$0xf]
        %v1793 = vld [vmem:[%s1749 + $0xac] sm:$0xf]
        %v1794 = vld [vmem:[%s1749 + $0xb0] sm:$0x7]
        %v1795 = vld [vmem:[%s1749 + $0xb4] sm:$0xf]
        %v1796 = vld [vmem:[%s1749 + $0xb8] sm:$0xf]
        %v1797 = vld [vmem:[%s1749 + $0xbc] sm:$0x7]
        %1846 = vrot.lane.b32.xlu0 %v1750, 12
        %v1847 = vpop.permute.xlu0 %1846
        %1848 = vrot.lane.b32.xlu0 %v1751, 12
        %v1849 = vpop.permute.xlu0 %1848
        %1850 = vrot.lane.b32.xlu0 %v1752, 12
        %v1851 = vpop.permute.xlu0 %1850
        %1852 = vrot.lane.b32.xlu0 %v1753, 12
        %v1853 = vpop.permute.xlu0 %1852
        %1854 = vrot.lane.b32.xlu0 %v1754, 12
        %v1855 = vpop.permute.xlu0 %1854
        %1856 = vrot.lane.b32.xlu0 %v1755, 12
        %v1857 = vpop.permute.xlu0 %1856
        %1858 = vrot.lane.b32.xlu0 %v1756, 12
        %v1859 = vpop.permute.xlu0 %1858
        %1860 = vrot.lane.b32.xlu0 %v1757, 12
        %v1861 = vpop.permute.xlu0 %1860
        %1862 = vrot.lane.b32.xlu0 %v1758, 12
        %v1863 = vpop.permute.xlu0 %1862
        %1864 = vrot.lane.b32.xlu0 %v1759, 12
        %v1865 = vpop.permute.xlu0 %1864
        %1866 = vrot.lane.b32.xlu0 %v1760, 12
        %v1867 = vpop.permute.xlu0 %1866
        %1868 = vrot.lane.b32.xlu0 %v1761, 12
        %v1869 = vpop.permute.xlu0 %1868
        %1870 = vrot.lane.b32.xlu0 %v1762, 12
        %v1871 = vpop.permute.xlu0 %1870
        %1872 = vrot.lane.b32.xlu0 %v1763, 12
        %v1873 = vpop.permute.xlu0 %1872
        %1874 = vrot.lane.b32.xlu0 %v1764, 12
        %v1875 = vpop.permute.xlu0 %1874
        %1876 = vrot.lane.b32.xlu0 %v1765, 12
        %v1877 = vpop.permute.xlu0 %1876
        %1878 = vrot.lane.b32.xlu0 %v1766, 12
        %v1879 = vpop.permute.xlu0 %1878
        %1880 = vrot.lane.b32.xlu0 %v1767, 12
        %v1881 = vpop.permute.xlu0 %1880
        %1882 = vrot.lane.b32.xlu0 %v1768, 12
        %v1883 = vpop.permute.xlu0 %1882
        %1884 = vrot.lane.b32.xlu0 %v1769, 12
        %v1885 = vpop.permute.xlu0 %1884
        %1886 = vrot.lane.b32.xlu0 %v1770, 12
        %v1887 = vpop.permute.xlu0 %1886
        %1888 = vrot.lane.b32.xlu0 %v1771, 12
        %v1889 = vpop.permute.xlu0 %1888
        %1890 = vrot.lane.b32.xlu0 %v1772, 12
        %v1891 = vpop.permute.xlu0 %1890
        %1892 = vrot.lane.b32.xlu0 %v1773, 12
        %v1893 = vpop.permute.xlu0 %1892
        %1894 = vrot.lane.b32.xlu0 %v1774, 12
        %v1895 = vpop.permute.xlu0 %1894
        %1896 = vrot.lane.b32.xlu0 %v1775, 12
        %v1897 = vpop.permute.xlu0 %1896
        %1898 = vrot.lane.b32.xlu0 %v1776, 12
        %v1899 = vpop.permute.xlu0 %1898
        %1900 = vrot.lane.b32.xlu0 %v1777, 12
        %v1901 = vpop.permute.xlu0 %1900
        %1902 = vrot.lane.b32.xlu0 %v1778, 12
        %v1903 = vpop.permute.xlu0 %1902
        %1904 = vrot.lane.b32.xlu0 %v1779, 12
        %v1905 = vpop.permute.xlu0 %1904
        %1906 = vrot.lane.b32.xlu0 %v1780, 12
        %v1907 = vpop.permute.xlu0 %1906
        %1908 = vrot.lane.b32.xlu0 %v1781, 12
        %v1909 = vpop.permute.xlu0 %1908
        %1910 = vrot.lane.b32.xlu0 %v1782, 12
        %v1911 = vpop.permute.xlu0 %1910
        %1912 = vrot.lane.b32.xlu0 %v1783, 12
        %v1913 = vpop.permute.xlu0 %1912
        %1914 = vrot.lane.b32.xlu0 %v1784, 12
        %v1915 = vpop.permute.xlu0 %1914
        %1916 = vrot.lane.b32.xlu0 %v1785, 12
        %v1917 = vpop.permute.xlu0 %1916
        %1918 = vrot.lane.b32.xlu0 %v1786, 12
        %v1919 = vpop.permute.xlu0 %1918
        %1920 = vrot.lane.b32.xlu0 %v1787, 12
        %v1921 = vpop.permute.xlu0 %1920
        %1922 = vrot.lane.b32.xlu0 %v1788, 12
        %v1923 = vpop.permute.xlu0 %1922
        %1924 = vrot.lane.b32.xlu0 %v1789, 12
        %v1925 = vpop.permute.xlu0 %1924
        %1926 = vrot.lane.b32.xlu0 %v1790, 12
        %v1927 = vpop.permute.xlu0 %1926
        %1928 = vrot.lane.b32.xlu0 %v1791, 12
        %v1929 = vpop.permute.xlu0 %1928
        %1930 = vrot.lane.b32.xlu0 %v1792, 12
        %v1931 = vpop.permute.xlu0 %1930
        %1932 = vrot.lane.b32.xlu0 %v1793, 12
        %v1933 = vpop.permute.xlu0 %1932
        %1934 = vrot.lane.b32.xlu0 %v1794, 12
        %v1935 = vpop.permute.xlu0 %1934
        %1936 = vrot.lane.b32.xlu0 %v1795, 12
        %v1937 = vpop.permute.xlu0 %1936
        %1938 = vrot.lane.b32.xlu0 %v1796, 12
        %v1939 = vpop.permute.xlu0 %1938
        %1940 = vrot.lane.b32.xlu0 %v1797, 12
        %v1941 = vpop.permute.xlu0 %1940
        %vm1990 = vcmask 117856
        %1991 = vst.msk [vmem:[#allocation3] sm:$0xf] %vm1990, %v1847
        %1992 = vst.msk [vmem:[#allocation3 + $0x4] sm:$0xf] %vm1990, %v1849
        %vm1993 = vcmask 116832
        %1994 = vst.msk [vmem:[#allocation3 + $0x8] sm:$0x7] %vm1993, %v1851
        %1995 = vst.msk [vmem:[#allocation3 + $0xc] sm:$0xf] %vm1990, %v1853
        %1996 = vst.msk [vmem:[#allocation3 + $0x10] sm:$0xf] %vm1990, %v1855
        %1997 = vst.msk [vmem:[#allocation3 + $0x14] sm:$0x7] %vm1993, %v1857
        %1998 = vst.msk [vmem:[#allocation3 + $0x18] sm:$0xf] %vm1990, %v1859
        %1999 = vst.msk [vmem:[#allocation3 + $0x1c] sm:$0xf] %vm1990, %v1861
        %2000 = vst.msk [vmem:[#allocation3 + $0x20] sm:$0x7] %vm1993, %v1863
        %2001 = vst.msk [vmem:[#allocation3 + $0x24] sm:$0xf] %vm1990, %v1865
        %2002 = vst.msk [vmem:[#allocation3 + $0x28] sm:$0xf] %vm1990, %v1867
        %2003 = vst.msk [vmem:[#allocation3 + $0x2c] sm:$0x7] %vm1993, %v1869
        %2004 = vst.msk [vmem:[#allocation3 + $0x30] sm:$0xf] %vm1990, %v1871
        %2005 = vst.msk [vmem:[#allocation3 + $0x34] sm:$0xf] %vm1990, %v1873
        %2006 = vst.msk [vmem:[#allocation3 + $0x38] sm:$0x7] %vm1993, %v1875
        %2007 = vst.msk [vmem:[#allocation3 + $0x3c] sm:$0xf] %vm1990, %v1877
        %2008 = vst.msk [vmem:[#allocation3 + $0x40] sm:$0xf] %vm1990, %v1879
        %2009 = vst.msk [vmem:[#allocation3 + $0x44] sm:$0x7] %vm1993, %v1881
        %2010 = vst.msk [vmem:[#allocation3 + $0x48] sm:$0xf] %vm1990, %v1883
        %2011 = vst.msk [vmem:[#allocation3 + $0x4c] sm:$0xf] %vm1990, %v1885
        %2012 = vst.msk [vmem:[#allocation3 + $0x50] sm:$0x7] %vm1993, %v1887
        %2013 = vst.msk [vmem:[#allocation3 + $0x54] sm:$0xf] %vm1990, %v1889
        %2014 = vst.msk [vmem:[#allocation3 + $0x58] sm:$0xf] %vm1990, %v1891
        %2015 = vst.msk [vmem:[#allocation3 + $0x5c] sm:$0x7] %vm1993, %v1893
        %2016 = vst.msk [vmem:[#allocation3 + $0x60] sm:$0xf] %vm1990, %v1895
        %2017 = vst.msk [vmem:[#allocation3 + $0x64] sm:$0xf] %vm1990, %v1897
        %2018 = vst.msk [vmem:[#allocation3 + $0x68] sm:$0x7] %vm1993, %v1899
        %2019 = vst.msk [vmem:[#allocation3 + $0x6c] sm:$0xf] %vm1990, %v1901
        %2020 = vst.msk [vmem:[#allocation3 + $0x70] sm:$0xf] %vm1990, %v1903
        %2021 = vst.msk [vmem:[#allocation3 + $0x74] sm:$0x7] %vm1993, %v1905
        %2022 = vst.msk [vmem:[#allocation3 + $0x78] sm:$0xf] %vm1990, %v1907
        %2023 = vst.msk [vmem:[#allocation3 + $0x7c] sm:$0xf] %vm1990, %v1909
        %2024 = vst.msk [vmem:[#allocation3 + $0x80] sm:$0x7] %vm1993, %v1911
        %2025 = vst.msk [vmem:[#allocation3 + $0x84] sm:$0xf] %vm1990, %v1913
        %2026 = vst.msk [vmem:[#allocation3 + $0x88] sm:$0xf] %vm1990, %v1915
        %2027 = vst.msk [vmem:[#allocation3 + $0x8c] sm:$0x7] %vm1993, %v1917
        %2028 = vst.msk [vmem:[#allocation3 + $0x90] sm:$0xf] %vm1990, %v1919
        %2029 = vst.msk [vmem:[#allocation3 + $0x94] sm:$0xf] %vm1990, %v1921
        %2030 = vst.msk [vmem:[#allocation3 + $0x98] sm:$0x7] %vm1993, %v1923
        %2031 = vst.msk [vmem:[#allocation3 + $0x9c] sm:$0xf] %vm1990, %v1925
        %2032 = vst.msk [vmem:[#allocation3 + $0xa0] sm:$0xf] %vm1990, %v1927
        %2033 = vst.msk [vmem:[#allocation3 + $0xa4] sm:$0x7] %vm1993, %v1929
        %2034 = vst.msk [vmem:[#allocation3 + $0xa8] sm:$0xf] %vm1990, %v1931
        %2035 = vst.msk [vmem:[#allocation3 + $0xac] sm:$0xf] %vm1990, %v1933
        %2036 = vst.msk [vmem:[#allocation3 + $0xb0] sm:$0x7] %vm1993, %v1935
        %2037 = vst.msk [vmem:[#allocation3 + $0xb4] sm:$0xf] %vm1990, %v1937
        %2038 = vst.msk [vmem:[#allocation3 + $0xb8] sm:$0xf] %vm1990, %v1939
        %2039 = vst.msk [vmem:[#allocation3 + $0xbc] sm:$0x7] %vm1993, %v1941
        %s2040 = sadd.s32 %s762, 5
        %s2041 = smul.u32 %s2040, 3
        %s2042 = smul.addr %s2041, 4
        %s2043 = scalar_lea.vmem [#allocation2], %s2042
        %v2044 = vld [vmem:[%s2043] sm:$0xf]
        %v2045 = vld [vmem:[%s2043 + $0x4] sm:$0xf]
        %v2046 = vld [vmem:[%s2043 + $0x8] sm:$0x7]
        %v2047 = vld [vmem:[%s2043 + $0xc] sm:$0xf]
        %v2048 = vld [vmem:[%s2043 + $0x10] sm:$0xf]
        %v2049 = vld [vmem:[%s2043 + $0x14] sm:$0x7]
        %v2050 = vld [vmem:[%s2043 + $0x18] sm:$0xf]
        %v2051 = vld [vmem:[%s2043 + $0x1c] sm:$0xf]
        %v2052 = vld [vmem:[%s2043 + $0x20] sm:$0x7]
        %v2053 = vld [vmem:[%s2043 + $0x24] sm:$0xf]
        %v2054 = vld [vmem:[%s2043 + $0x28] sm:$0xf]
        %v2055 = vld [vmem:[%s2043 + $0x2c] sm:$0x7]
        %v2056 = vld [vmem:[%s2043 + $0x30] sm:$0xf]
        %v2057 = vld [vmem:[%s2043 + $0x34] sm:$0xf]
        %v2058 = vld [vmem:[%s2043 + $0x38] sm:$0x7]
        %v2059 = vld [vmem:[%s2043 + $0x3c] sm:$0xf]
        %v2060 = vld [vmem:[%s2043 + $0x40] sm:$0xf]
        %v2061 = vld [vmem:[%s2043 + $0x44] sm:$0x7]
        %v2062 = vld [vmem:[%s2043 + $0x48] sm:$0xf]
        %v2063 = vld [vmem:[%s2043 + $0x4c] sm:$0xf]
        %v2064 = vld [vmem:[%s2043 + $0x50] sm:$0x7]
        %v2065 = vld [vmem:[%s2043 + $0x54] sm:$0xf]
        %v2066 = vld [vmem:[%s2043 + $0x58] sm:$0xf]
        %v2067 = vld [vmem:[%s2043 + $0x5c] sm:$0x7]
        %v2068 = vld [vmem:[%s2043 + $0x60] sm:$0xf]
        %v2069 = vld [vmem:[%s2043 + $0x64] sm:$0xf]
        %v2070 = vld [vmem:[%s2043 + $0x68] sm:$0x7]
        %v2071 = vld [vmem:[%s2043 + $0x6c] sm:$0xf]
        %v2072 = vld [vmem:[%s2043 + $0x70] sm:$0xf]
        %v2073 = vld [vmem:[%s2043 + $0x74] sm:$0x7]
        %v2074 = vld [vmem:[%s2043 + $0x78] sm:$0xf]
        %v2075 = vld [vmem:[%s2043 + $0x7c] sm:$0xf]
        %v2076 = vld [vmem:[%s2043 + $0x80] sm:$0x7]
        %v2077 = vld [vmem:[%s2043 + $0x84] sm:$0xf]
        %v2078 = vld [vmem:[%s2043 + $0x88] sm:$0xf]
        %v2079 = vld [vmem:[%s2043 + $0x8c] sm:$0x7]
        %v2080 = vld [vmem:[%s2043 + $0x90] sm:$0xf]
        %v2081 = vld [vmem:[%s2043 + $0x94] sm:$0xf]
        %v2082 = vld [vmem:[%s2043 + $0x98] sm:$0x7]
        %v2083 = vld [vmem:[%s2043 + $0x9c] sm:$0xf]
        %v2084 = vld [vmem:[%s2043 + $0xa0] sm:$0xf]
        %v2085 = vld [vmem:[%s2043 + $0xa4] sm:$0x7]
        %v2086 = vld [vmem:[%s2043 + $0xa8] sm:$0xf]
        %v2087 = vld [vmem:[%s2043 + $0xac] sm:$0xf]
        %v2088 = vld [vmem:[%s2043 + $0xb0] sm:$0x7]
        %v2089 = vld [vmem:[%s2043 + $0xb4] sm:$0xf]
        %v2090 = vld [vmem:[%s2043 + $0xb8] sm:$0xf]
        %v2091 = vld [vmem:[%s2043 + $0xbc] sm:$0x7]
        %2140 = vrot.lane.b32.xlu0 %v2044, 15
        %v2141 = vpop.permute.xlu0 %2140
        %2142 = vrot.lane.b32.xlu0 %v2045, 15
        %v2143 = vpop.permute.xlu0 %2142
        %2144 = vrot.lane.b32.xlu0 %v2046, 15
        %v2145 = vpop.permute.xlu0 %2144
        %2146 = vrot.lane.b32.xlu0 %v2047, 15
        %v2147 = vpop.permute.xlu0 %2146
        %2148 = vrot.lane.b32.xlu0 %v2048, 15
        %v2149 = vpop.permute.xlu0 %2148
        %2150 = vrot.lane.b32.xlu0 %v2049, 15
        %v2151 = vpop.permute.xlu0 %2150
        %2152 = vrot.lane.b32.xlu0 %v2050, 15
        %v2153 = vpop.permute.xlu0 %2152
        %2154 = vrot.lane.b32.xlu0 %v2051, 15
        %v2155 = vpop.permute.xlu0 %2154
        %2156 = vrot.lane.b32.xlu0 %v2052, 15
        %v2157 = vpop.permute.xlu0 %2156
        %2158 = vrot.lane.b32.xlu0 %v2053, 15
        %v2159 = vpop.permute.xlu0 %2158
        %2160 = vrot.lane.b32.xlu0 %v2054, 15
        %v2161 = vpop.permute.xlu0 %2160
        %2162 = vrot.lane.b32.xlu0 %v2055, 15
        %v2163 = vpop.permute.xlu0 %2162
        %2164 = vrot.lane.b32.xlu0 %v2056, 15
        %v2165 = vpop.permute.xlu0 %2164
        %2166 = vrot.lane.b32.xlu0 %v2057, 15
        %v2167 = vpop.permute.xlu0 %2166
        %2168 = vrot.lane.b32.xlu0 %v2058, 15
        %v2169 = vpop.permute.xlu0 %2168
        %2170 = vrot.lane.b32.xlu0 %v2059, 15
        %v2171 = vpop.permute.xlu0 %2170
        %2172 = vrot.lane.b32.xlu0 %v2060, 15
        %v2173 = vpop.permute.xlu0 %2172
        %2174 = vrot.lane.b32.xlu0 %v2061, 15
        %v2175 = vpop.permute.xlu0 %2174
        %2176 = vrot.lane.b32.xlu0 %v2062, 15
        %v2177 = vpop.permute.xlu0 %2176
        %2178 = vrot.lane.b32.xlu0 %v2063, 15
        %v2179 = vpop.permute.xlu0 %2178
        %2180 = vrot.lane.b32.xlu0 %v2064, 15
        %v2181 = vpop.permute.xlu0 %2180
        %2182 = vrot.lane.b32.xlu0 %v2065, 15
        %v2183 = vpop.permute.xlu0 %2182
        %2184 = vrot.lane.b32.xlu0 %v2066, 15
        %v2185 = vpop.permute.xlu0 %2184
        %2186 = vrot.lane.b32.xlu0 %v2067, 15
        %v2187 = vpop.permute.xlu0 %2186
        %2188 = vrot.lane.b32.xlu0 %v2068, 15
        %v2189 = vpop.permute.xlu0 %2188
        %2190 = vrot.lane.b32.xlu0 %v2069, 15
        %v2191 = vpop.permute.xlu0 %2190
        %2192 = vrot.lane.b32.xlu0 %v2070, 15
        %v2193 = vpop.permute.xlu0 %2192
        %2194 = vrot.lane.b32.xlu0 %v2071, 15
        %v2195 = vpop.permute.xlu0 %2194
        %2196 = vrot.lane.b32.xlu0 %v2072, 15
        %v2197 = vpop.permute.xlu0 %2196
        %2198 = vrot.lane.b32.xlu0 %v2073, 15
        %v2199 = vpop.permute.xlu0 %2198
        %2200 = vrot.lane.b32.xlu0 %v2074, 15
        %v2201 = vpop.permute.xlu0 %2200
        %2202 = vrot.lane.b32.xlu0 %v2075, 15
        %v2203 = vpop.permute.xlu0 %2202
        %2204 = vrot.lane.b32.xlu0 %v2076, 15
        %v2205 = vpop.permute.xlu0 %2204
        %2206 = vrot.lane.b32.xlu0 %v2077, 15
        %v2207 = vpop.permute.xlu0 %2206
        %2208 = vrot.lane.b32.xlu0 %v2078, 15
        %v2209 = vpop.permute.xlu0 %2208
        %2210 = vrot.lane.b32.xlu0 %v2079, 15
        %v2211 = vpop.permute.xlu0 %2210
        %2212 = vrot.lane.b32.xlu0 %v2080, 15
        %v2213 = vpop.permute.xlu0 %2212
        %2214 = vrot.lane.b32.xlu0 %v2081, 15
        %v2215 = vpop.permute.xlu0 %2214
        %2216 = vrot.lane.b32.xlu0 %v2082, 15
        %v2217 = vpop.permute.xlu0 %2216
        %2218 = vrot.lane.b32.xlu0 %v2083, 15
        %v2219 = vpop.permute.xlu0 %2218
        %2220 = vrot.lane.b32.xlu0 %v2084, 15
        %v2221 = vpop.permute.xlu0 %2220
        %2222 = vrot.lane.b32.xlu0 %v2085, 15
        %v2223 = vpop.permute.xlu0 %2222
        %2224 = vrot.lane.b32.xlu0 %v2086, 15
        %v2225 = vpop.permute.xlu0 %2224
        %2226 = vrot.lane.b32.xlu0 %v2087, 15
        %v2227 = vpop.permute.xlu0 %2226
        %2228 = vrot.lane.b32.xlu0 %v2088, 15
        %v2229 = vpop.permute.xlu0 %2228
        %2230 = vrot.lane.b32.xlu0 %v2089, 15
        %v2231 = vpop.permute.xlu0 %2230
        %2232 = vrot.lane.b32.xlu0 %v2090, 15
        %v2233 = vpop.permute.xlu0 %2232
        %2234 = vrot.lane.b32.xlu0 %v2091, 15
        %v2235 = vpop.permute.xlu0 %2234
        %vm2284 = vcmask 142456
        %2285 = vst.msk [vmem:[#allocation3] sm:$0xf] %vm2284, %v2141
        %2286 = vst.msk [vmem:[#allocation3 + $0x4] sm:$0xf] %vm2284, %v2143
        %vm2287 = vcmask 141432
        %2288 = vst.msk [vmem:[#allocation3 + $0x8] sm:$0x7] %vm2287, %v2145
        %2289 = vst.msk [vmem:[#allocation3 + $0xc] sm:$0xf] %vm2284, %v2147
        %2290 = vst.msk [vmem:[#allocation3 + $0x10] sm:$0xf] %vm2284, %v2149
        %2291 = vst.msk [vmem:[#allocation3 + $0x14] sm:$0x7] %vm2287, %v2151
        %2292 = vst.msk [vmem:[#allocation3 + $0x18] sm:$0xf] %vm2284, %v2153
        %2293 = vst.msk [vmem:[#allocation3 + $0x1c] sm:$0xf] %vm2284, %v2155
        %2294 = vst.msk [vmem:[#allocation3 + $0x20] sm:$0x7] %vm2287, %v2157
        %2295 = vst.msk [vmem:[#allocation3 + $0x24] sm:$0xf] %vm2284, %v2159
        %2296 = vst.msk [vmem:[#allocation3 + $0x28] sm:$0xf] %vm2284, %v2161
        %2297 = vst.msk [vmem:[#allocation3 + $0x2c] sm:$0x7] %vm2287, %v2163
        %2298 = vst.msk [vmem:[#allocation3 + $0x30] sm:$0xf] %vm2284, %v2165
        %2299 = vst.msk [vmem:[#allocation3 + $0x34] sm:$0xf] %vm2284, %v2167
        %2300 = vst.msk [vmem:[#allocation3 + $0x38] sm:$0x7] %vm2287, %v2169
        %2301 = vst.msk [vmem:[#allocation3 + $0x3c] sm:$0xf] %vm2284, %v2171
        %2302 = vst.msk [vmem:[#allocation3 + $0x40] sm:$0xf] %vm2284, %v2173
        %2303 = vst.msk [vmem:[#allocation3 + $0x44] sm:$0x7] %vm2287, %v2175
        %2304 = vst.msk [vmem:[#allocation3 + $0x48] sm:$0xf] %vm2284, %v2177
        %2305 = vst.msk [vmem:[#allocation3 + $0x4c] sm:$0xf] %vm2284, %v2179
        %2306 = vst.msk [vmem:[#allocation3 + $0x50] sm:$0x7] %vm2287, %v2181
        %2307 = vst.msk [vmem:[#allocation3 + $0x54] sm:$0xf] %vm2284, %v2183
        %2308 = vst.msk [vmem:[#allocation3 + $0x58] sm:$0xf] %vm2284, %v2185
        %2309 = vst.msk [vmem:[#allocation3 + $0x5c] sm:$0x7] %vm2287, %v2187
        %2310 = vst.msk [vmem:[#allocation3 + $0x60] sm:$0xf] %vm2284, %v2189
        %2311 = vst.msk [vmem:[#allocation3 + $0x64] sm:$0xf] %vm2284, %v2191
        %2312 = vst.msk [vmem:[#allocation3 + $0x68] sm:$0x7] %vm2287, %v2193
        %2313 = vst.msk [vmem:[#allocation3 + $0x6c] sm:$0xf] %vm2284, %v2195
        %2314 = vst.msk [vmem:[#allocation3 + $0x70] sm:$0xf] %vm2284, %v2197
        %2315 = vst.msk [vmem:[#allocation3 + $0x74] sm:$0x7] %vm2287, %v2199
        %2316 = vst.msk [vmem:[#allocation3 + $0x78] sm:$0xf] %vm2284, %v2201
        %2317 = vst.msk [vmem:[#allocation3 + $0x7c] sm:$0xf] %vm2284, %v2203
        %2318 = vst.msk [vmem:[#allocation3 + $0x80] sm:$0x7] %vm2287, %v2205
        %2319 = vst.msk [vmem:[#allocation3 + $0x84] sm:$0xf] %vm2284, %v2207
        %2320 = vst.msk [vmem:[#allocation3 + $0x88] sm:$0xf] %vm2284, %v2209
        %2321 = vst.msk [vmem:[#allocation3 + $0x8c] sm:$0x7] %vm2287, %v2211
        %2322 = vst.msk [vmem:[#allocation3 + $0x90] sm:$0xf] %vm2284, %v2213
        %2323 = vst.msk [vmem:[#allocation3 + $0x94] sm:$0xf] %vm2284, %v2215
        %2324 = vst.msk [vmem:[#allocation3 + $0x98] sm:$0x7] %vm2287, %v2217
        %2325 = vst.msk [vmem:[#allocation3 + $0x9c] sm:$0xf] %vm2284, %v2219
        %2326 = vst.msk [vmem:[#allocation3 + $0xa0] sm:$0xf] %vm2284, %v2221
        %2327 = vst.msk [vmem:[#allocation3 + $0xa4] sm:$0x7] %vm2287, %v2223
        %2328 = vst.msk [vmem:[#allocation3 + $0xa8] sm:$0xf] %vm2284, %v2225
        %2329 = vst.msk [vmem:[#allocation3 + $0xac] sm:$0xf] %vm2284, %v2227
        %2330 = vst.msk [vmem:[#allocation3 + $0xb0] sm:$0x7] %vm2287, %v2229
        %2331 = vst.msk [vmem:[#allocation3 + $0xb4] sm:$0xf] %vm2284, %v2231
        %2332 = vst.msk [vmem:[#allocation3 + $0xb8] sm:$0xf] %vm2284, %v2233
        %2333 = vst.msk [vmem:[#allocation3 + $0xbc] sm:$0x7] %vm2287, %v2235
        %s2334 = sadd.s32 %s762, 6
        %s2335 = smul.u32 %s2334, 3
        %s2336 = smul.addr %s2335, 4
        %s2337 = scalar_lea.vmem [#allocation2], %s2336
        %v2338 = vld [vmem:[%s2337] sm:$0xf]
        %v2339 = vld [vmem:[%s2337 + $0x4] sm:$0xf]
        %v2340 = vld [vmem:[%s2337 + $0x8] sm:$0x7]
        %v2341 = vld [vmem:[%s2337 + $0xc] sm:$0xf]
        %v2342 = vld [vmem:[%s2337 + $0x10] sm:$0xf]
        %v2343 = vld [vmem:[%s2337 + $0x14] sm:$0x7]
        %v2344 = vld [vmem:[%s2337 + $0x18] sm:$0xf]
        %v2345 = vld [vmem:[%s2337 + $0x1c] sm:$0xf]
        %v2346 = vld [vmem:[%s2337 + $0x20] sm:$0x7]
        %v2347 = vld [vmem:[%s2337 + $0x24] sm:$0xf]
        %v2348 = vld [vmem:[%s2337 + $0x28] sm:$0xf]
        %v2349 = vld [vmem:[%s2337 + $0x2c] sm:$0x7]
        %v2350 = vld [vmem:[%s2337 + $0x30] sm:$0xf]
        %v2351 = vld [vmem:[%s2337 + $0x34] sm:$0xf]
        %v2352 = vld [vmem:[%s2337 + $0x38] sm:$0x7]
        %v2353 = vld [vmem:[%s2337 + $0x3c] sm:$0xf]
        %v2354 = vld [vmem:[%s2337 + $0x40] sm:$0xf]
        %v2355 = vld [vmem:[%s2337 + $0x44] sm:$0x7]
        %v2356 = vld [vmem:[%s2337 + $0x48] sm:$0xf]
        %v2357 = vld [vmem:[%s2337 + $0x4c] sm:$0xf]
        %v2358 = vld [vmem:[%s2337 + $0x50] sm:$0x7]
        %v2359 = vld [vmem:[%s2337 + $0x54] sm:$0xf]
        %v2360 = vld [vmem:[%s2337 + $0x58] sm:$0xf]
        %v2361 = vld [vmem:[%s2337 + $0x5c] sm:$0x7]
        %v2362 = vld [vmem:[%s2337 + $0x60] sm:$0xf]
        %v2363 = vld [vmem:[%s2337 + $0x64] sm:$0xf]
        %v2364 = vld [vmem:[%s2337 + $0x68] sm:$0x7]
        %v2365 = vld [vmem:[%s2337 + $0x6c] sm:$0xf]
        %v2366 = vld [vmem:[%s2337 + $0x70] sm:$0xf]
        %v2367 = vld [vmem:[%s2337 + $0x74] sm:$0x7]
        %v2368 = vld [vmem:[%s2337 + $0x78] sm:$0xf]
        %v2369 = vld [vmem:[%s2337 + $0x7c] sm:$0xf]
        %v2370 = vld [vmem:[%s2337 + $0x80] sm:$0x7]
        %v2371 = vld [vmem:[%s2337 + $0x84] sm:$0xf]
        %v2372 = vld [vmem:[%s2337 + $0x88] sm:$0xf]
        %v2373 = vld [vmem:[%s2337 + $0x8c] sm:$0x7]
        %v2374 = vld [vmem:[%s2337 + $0x90] sm:$0xf]
        %v2375 = vld [vmem:[%s2337 + $0x94] sm:$0xf]
        %v2376 = vld [vmem:[%s2337 + $0x98] sm:$0x7]
        %v2377 = vld [vmem:[%s2337 + $0x9c] sm:$0xf]
        %v2378 = vld [vmem:[%s2337 + $0xa0] sm:$0xf]
        %v2379 = vld [vmem:[%s2337 + $0xa4] sm:$0x7]
        %v2380 = vld [vmem:[%s2337 + $0xa8] sm:$0xf]
        %v2381 = vld [vmem:[%s2337 + $0xac] sm:$0xf]
        %v2382 = vld [vmem:[%s2337 + $0xb0] sm:$0x7]
        %v2383 = vld [vmem:[%s2337 + $0xb4] sm:$0xf]
        %v2384 = vld [vmem:[%s2337 + $0xb8] sm:$0xf]
        %v2385 = vld [vmem:[%s2337 + $0xbc] sm:$0x7]
        %2434 = vrot.lane.b32.xlu0 %v2338, 18
        %v2435 = vpop.permute.xlu0 %2434
        %2436 = vrot.lane.b32.xlu0 %v2339, 18
        %v2437 = vpop.permute.xlu0 %2436
        %2438 = vrot.lane.b32.xlu0 %v2340, 18
        %v2439 = vpop.permute.xlu0 %2438
        %2440 = vrot.lane.b32.xlu0 %v2341, 18
        %v2441 = vpop.permute.xlu0 %2440
        %2442 = vrot.lane.b32.xlu0 %v2342, 18
        %v2443 = vpop.permute.xlu0 %2442
        %2444 = vrot.lane.b32.xlu0 %v2343, 18
        %v2445 = vpop.permute.xlu0 %2444
        %2446 = vrot.lane.b32.xlu0 %v2344, 18
        %v2447 = vpop.permute.xlu0 %2446
        %2448 = vrot.lane.b32.xlu0 %v2345, 18
        %v2449 = vpop.permute.xlu0 %2448
        %2450 = vrot.lane.b32.xlu0 %v2346, 18
        %v2451 = vpop.permute.xlu0 %2450
        %2452 = vrot.lane.b32.xlu0 %v2347, 18
        %v2453 = vpop.permute.xlu0 %2452
        %2454 = vrot.lane.b32.xlu0 %v2348, 18
        %v2455 = vpop.permute.xlu0 %2454
        %2456 = vrot.lane.b32.xlu0 %v2349, 18
        %v2457 = vpop.permute.xlu0 %2456
        %2458 = vrot.lane.b32.xlu0 %v2350, 18
        %v2459 = vpop.permute.xlu0 %2458
        %2460 = vrot.lane.b32.xlu0 %v2351, 18
        %v2461 = vpop.permute.xlu0 %2460
        %2462 = vrot.lane.b32.xlu0 %v2352, 18
        %v2463 = vpop.permute.xlu0 %2462
        %2464 = vrot.lane.b32.xlu0 %v2353, 18
        %v2465 = vpop.permute.xlu0 %2464
        %2466 = vrot.lane.b32.xlu0 %v2354, 18
        %v2467 = vpop.permute.xlu0 %2466
        %2468 = vrot.lane.b32.xlu0 %v2355, 18
        %v2469 = vpop.permute.xlu0 %2468
        %2470 = vrot.lane.b32.xlu0 %v2356, 18
        %v2471 = vpop.permute.xlu0 %2470
        %2472 = vrot.lane.b32.xlu0 %v2357, 18
        %v2473 = vpop.permute.xlu0 %2472
        %2474 = vrot.lane.b32.xlu0 %v2358, 18
        %v2475 = vpop.permute.xlu0 %2474
        %2476 = vrot.lane.b32.xlu0 %v2359, 18
        %v2477 = vpop.permute.xlu0 %2476
        %2478 = vrot.lane.b32.xlu0 %v2360, 18
        %v2479 = vpop.permute.xlu0 %2478
        %2480 = vrot.lane.b32.xlu0 %v2361, 18
        %v2481 = vpop.permute.xlu0 %2480
        %2482 = vrot.lane.b32.xlu0 %v2362, 18
        %v2483 = vpop.permute.xlu0 %2482
        %2484 = vrot.lane.b32.xlu0 %v2363, 18
        %v2485 = vpop.permute.xlu0 %2484
        %2486 = vrot.lane.b32.xlu0 %v2364, 18
        %v2487 = vpop.permute.xlu0 %2486
        %2488 = vrot.lane.b32.xlu0 %v2365, 18
        %v2489 = vpop.permute.xlu0 %2488
        %2490 = vrot.lane.b32.xlu0 %v2366, 18
        %v2491 = vpop.permute.xlu0 %2490
        %2492 = vrot.lane.b32.xlu0 %v2367, 18
        %v2493 = vpop.permute.xlu0 %2492
        %2494 = vrot.lane.b32.xlu0 %v2368, 18
        %v2495 = vpop.permute.xlu0 %2494
        %2496 = vrot.lane.b32.xlu0 %v2369, 18
        %v2497 = vpop.permute.xlu0 %2496
        %2498 = vrot.lane.b32.xlu0 %v2370, 18
        %v2499 = vpop.permute.xlu0 %2498
        %2500 = vrot.lane.b32.xlu0 %v2371, 18
        %v2501 = vpop.permute.xlu0 %2500
        %2502 = vrot.lane.b32.xlu0 %v2372, 18
        %v2503 = vpop.permute.xlu0 %2502
        %2504 = vrot.lane.b32.xlu0 %v2373, 18
        %v2505 = vpop.permute.xlu0 %2504
        %2506 = vrot.lane.b32.xlu0 %v2374, 18
        %v2507 = vpop.permute.xlu0 %2506
        %2508 = vrot.lane.b32.xlu0 %v2375, 18
        %v2509 = vpop.permute.xlu0 %2508
        %2510 = vrot.lane.b32.xlu0 %v2376, 18
        %v2511 = vpop.permute.xlu0 %2510
        %2512 = vrot.lane.b32.xlu0 %v2377, 18
        %v2513 = vpop.permute.xlu0 %2512
        %2514 = vrot.lane.b32.xlu0 %v2378, 18
        %v2515 = vpop.permute.xlu0 %2514
        %2516 = vrot.lane.b32.xlu0 %v2379, 18
        %v2517 = vpop.permute.xlu0 %2516
        %2518 = vrot.lane.b32.xlu0 %v2380, 18
        %v2519 = vpop.permute.xlu0 %2518
        %2520 = vrot.lane.b32.xlu0 %v2381, 18
        %v2521 = vpop.permute.xlu0 %2520
        %2522 = vrot.lane.b32.xlu0 %v2382, 18
        %v2523 = vpop.permute.xlu0 %2522
        %2524 = vrot.lane.b32.xlu0 %v2383, 18
        %v2525 = vpop.permute.xlu0 %2524
        %2526 = vrot.lane.b32.xlu0 %v2384, 18
        %v2527 = vpop.permute.xlu0 %2526
        %2528 = vrot.lane.b32.xlu0 %v2385, 18
        %v2529 = vpop.permute.xlu0 %2528
        %vm2578 = vcmask 167056
        %2579 = vst.msk [vmem:[#allocation3] sm:$0xf] %vm2578, %v2435
        %2580 = vst.msk [vmem:[#allocation3 + $0x4] sm:$0xf] %vm2578, %v2437
        %vm2581 = vcmask 166032
        %2582 = vst.msk [vmem:[#allocation3 + $0x8] sm:$0x7] %vm2581, %v2439
        %2583 = vst.msk [vmem:[#allocation3 + $0xc] sm:$0xf] %vm2578, %v2441
        %2584 = vst.msk [vmem:[#allocation3 + $0x10] sm:$0xf] %vm2578, %v2443
        %2585 = vst.msk [vmem:[#allocation3 + $0x14] sm:$0x7] %vm2581, %v2445
        %2586 = vst.msk [vmem:[#allocation3 + $0x18] sm:$0xf] %vm2578, %v2447
        %2587 = vst.msk [vmem:[#allocation3 + $0x1c] sm:$0xf] %vm2578, %v2449
        %2588 = vst.msk [vmem:[#allocation3 + $0x20] sm:$0x7] %vm2581, %v2451
        %2589 = vst.msk [vmem:[#allocation3 + $0x24] sm:$0xf] %vm2578, %v2453
        %2590 = vst.msk [vmem:[#allocation3 + $0x28] sm:$0xf] %vm2578, %v2455
        %2591 = vst.msk [vmem:[#allocation3 + $0x2c] sm:$0x7] %vm2581, %v2457
        %2592 = vst.msk [vmem:[#allocation3 + $0x30] sm:$0xf] %vm2578, %v2459
        %2593 = vst.msk [vmem:[#allocation3 + $0x34] sm:$0xf] %vm2578, %v2461
        %2594 = vst.msk [vmem:[#allocation3 + $0x38] sm:$0x7] %vm2581, %v2463
        %2595 = vst.msk [vmem:[#allocation3 + $0x3c] sm:$0xf] %vm2578, %v2465
        %2596 = vst.msk [vmem:[#allocation3 + $0x40] sm:$0xf] %vm2578, %v2467
        %2597 = vst.msk [vmem:[#allocation3 + $0x44] sm:$0x7] %vm2581, %v2469
        %2598 = vst.msk [vmem:[#allocation3 + $0x48] sm:$0xf] %vm2578, %v2471
        %2599 = vst.msk [vmem:[#allocation3 + $0x4c] sm:$0xf] %vm2578, %v2473
        %2600 = vst.msk [vmem:[#allocation3 + $0x50] sm:$0x7] %vm2581, %v2475
        %2601 = vst.msk [vmem:[#allocation3 + $0x54] sm:$0xf] %vm2578, %v2477
        %2602 = vst.msk [vmem:[#allocation3 + $0x58] sm:$0xf] %vm2578, %v2479
        %2603 = vst.msk [vmem:[#allocation3 + $0x5c] sm:$0x7] %vm2581, %v2481
        %2604 = vst.msk [vmem:[#allocation3 + $0x60] sm:$0xf] %vm2578, %v2483
        %2605 = vst.msk [vmem:[#allocation3 + $0x64] sm:$0xf] %vm2578, %v2485
        %2606 = vst.msk [vmem:[#allocation3 + $0x68] sm:$0x7] %vm2581, %v2487
        %2607 = vst.msk [vmem:[#allocation3 + $0x6c] sm:$0xf] %vm2578, %v2489
        %2608 = vst.msk [vmem:[#allocation3 + $0x70] sm:$0xf] %vm2578, %v2491
        %2609 = vst.msk [vmem:[#allocation3 + $0x74] sm:$0x7] %vm2581, %v2493
        %2610 = vst.msk [vmem:[#allocation3 + $0x78] sm:$0xf] %vm2578, %v2495
        %2611 = vst.msk [vmem:[#allocation3 + $0x7c] sm:$0xf] %vm2578, %v2497
        %2612 = vst.msk [vmem:[#allocation3 + $0x80] sm:$0x7] %vm2581, %v2499
        %2613 = vst.msk [vmem:[#allocation3 + $0x84] sm:$0xf] %vm2578, %v2501
        %2614 = vst.msk [vmem:[#allocation3 + $0x88] sm:$0xf] %vm2578, %v2503
        %2615 = vst.msk [vmem:[#allocation3 + $0x8c] sm:$0x7] %vm2581, %v2505
        %2616 = vst.msk [vmem:[#allocation3 + $0x90] sm:$0xf] %vm2578, %v2507
        %2617 = vst.msk [vmem:[#allocation3 + $0x94] sm:$0xf] %vm2578, %v2509
        %2618 = vst.msk [vmem:[#allocation3 + $0x98] sm:$0x7] %vm2581, %v2511
        %2619 = vst.msk [vmem:[#allocation3 + $0x9c] sm:$0xf] %vm2578, %v2513
        %2620 = vst.msk [vmem:[#allocation3 + $0xa0] sm:$0xf] %vm2578, %v2515
        %2621 = vst.msk [vmem:[#allocation3 + $0xa4] sm:$0x7] %vm2581, %v2517
        %2622 = vst.msk [vmem:[#allocation3 + $0xa8] sm:$0xf] %vm2578, %v2519
        %2623 = vst.msk [vmem:[#allocation3 + $0xac] sm:$0xf] %vm2578, %v2521
        %2624 = vst.msk [vmem:[#allocation3 + $0xb0] sm:$0x7] %vm2581, %v2523
        %2625 = vst.msk [vmem:[#allocation3 + $0xb4] sm:$0xf] %vm2578, %v2525
        %2626 = vst.msk [vmem:[#allocation3 + $0xb8] sm:$0xf] %vm2578, %v2527
        %2627 = vst.msk [vmem:[#allocation3 + $0xbc] sm:$0x7] %vm2581, %v2529
        %v2628 = vld [vmem:[#allocation3] sm:$0xf]
        %v2629 = vld [vmem:[#allocation3 + $0x4] sm:$0xf]
        %v2630 = vld [vmem:[#allocation3 + $0xc] sm:$0xf]
        %v2631 = vld [vmem:[#allocation3 + $0x10] sm:$0xf]
        %v2632 = vld [vmem:[#allocation3 + $0x18] sm:$0xf]
        %v2633 = vld [vmem:[#allocation3 + $0x1c] sm:$0xf]
        %v2634 = vld [vmem:[#allocation3 + $0x24] sm:$0xf]
        %v2635 = vld [vmem:[#allocation3 + $0x28] sm:$0xf]
        %v2636 = vld [vmem:[#allocation3 + $0x30] sm:$0xf]
        %v2637 = vld [vmem:[#allocation3 + $0x34] sm:$0xf]
        %v2638 = vld [vmem:[#allocation3 + $0x3c] sm:$0xf]
        %v2639 = vld [vmem:[#allocation3 + $0x40] sm:$0xf]
        %v2640 = vld [vmem:[#allocation3 + $0x48] sm:$0xf]
        %v2641 = vld [vmem:[#allocation3 + $0x4c] sm:$0xf]
        %v2642 = vld [vmem:[#allocation3 + $0x54] sm:$0xf]
        %v2643 = vld [vmem:[#allocation3 + $0x58] sm:$0xf]
        %v2644 = vld [vmem:[#allocation3 + $0x60] sm:$0xf]
        %v2645 = vld [vmem:[#allocation3 + $0x64] sm:$0xf]
        %v2646 = vld [vmem:[#allocation3 + $0x6c] sm:$0xf]
        %v2647 = vld [vmem:[#allocation3 + $0x70] sm:$0xf]
        %v2648 = vld [vmem:[#allocation3 + $0x78] sm:$0xf]
        %v2649 = vld [vmem:[#allocation3 + $0x7c] sm:$0xf]
        %v2650 = vld [vmem:[#allocation3 + $0x84] sm:$0xf]
        %v2651 = vld [vmem:[#allocation3 + $0x88] sm:$0xf]
        %v2652 = vld [vmem:[#allocation3 + $0x90] sm:$0xf]
        %v2653 = vld [vmem:[#allocation3 + $0x94] sm:$0xf]
        %v2654 = vld [vmem:[#allocation3 + $0x9c] sm:$0xf]
        %v2655 = vld [vmem:[#allocation3 + $0xa0] sm:$0xf]
        %v2656 = vld [vmem:[#allocation3 + $0xa8] sm:$0xf]
        %v2657 = vld [vmem:[#allocation3 + $0xac] sm:$0xf]
        %v2658 = vld [vmem:[#allocation3 + $0xb4] sm:$0xf]
        %v2659 = vld [vmem:[#allocation3 + $0xb8] sm:$0xf]
        %vm2660 = vcmask 166912
        %2661 = vst.msk [vmem:[#allocation4] sm:$0xf] %vm2660, %v2628
        %2662 = vst.msk [vmem:[#allocation4 + $0x8] sm:$0xf] %vm2660, %v2629
        %2663 = vst.msk [vmem:[#allocation4 + $0x10] sm:$0xf] %vm2660, %v2630
        %2664 = vst.msk [vmem:[#allocation4 + $0x18] sm:$0xf] %vm2660, %v2631
        %2665 = vst.msk [vmem:[#allocation4 + $0x20] sm:$0xf] %vm2660, %v2632
        %2666 = vst.msk [vmem:[#allocation4 + $0x28] sm:$0xf] %vm2660, %v2633
        %2667 = vst.msk [vmem:[#allocation4 + $0x30] sm:$0xf] %vm2660, %v2634
        %2668 = vst.msk [vmem:[#allocation4 + $0x38] sm:$0xf] %vm2660, %v2635
        %2669 = vst.msk [vmem:[#allocation4 + $0x40] sm:$0xf] %vm2660, %v2636
        %2670 = vst.msk [vmem:[#allocation4 + $0x48] sm:$0xf] %vm2660, %v2637
        %2671 = vst.msk [vmem:[#allocation4 + $0x50] sm:$0xf] %vm2660, %v2638
        %2672 = vst.msk [vmem:[#allocation4 + $0x58] sm:$0xf] %vm2660, %v2639
        %2673 = vst.msk [vmem:[#allocation4 + $0x60] sm:$0xf] %vm2660, %v2640
        %2674 = vst.msk [vmem:[#allocation4 + $0x68] sm:$0xf] %vm2660, %v2641
        %2675 = vst.msk [vmem:[#allocation4 + $0x70] sm:$0xf] %vm2660, %v2642
        %2676 = vst.msk [vmem:[#allocation4 + $0x78] sm:$0xf] %vm2660, %v2643
        %2677 = vst.msk [vmem:[#allocation4 + $0x80] sm:$0xf] %vm2660, %v2644
        %2678 = vst.msk [vmem:[#allocation4 + $0x88] sm:$0xf] %vm2660, %v2645
        %2679 = vst.msk [vmem:[#allocation4 + $0x90] sm:$0xf] %vm2660, %v2646
        %2680 = vst.msk [vmem:[#allocation4 + $0x98] sm:$0xf] %vm2660, %v2647
        %2681 = vst.msk [vmem:[#allocation4 + $0xa0] sm:$0xf] %vm2660, %v2648
        %2682 = vst.msk [vmem:[#allocation4 + $0xa8] sm:$0xf] %vm2660, %v2649
        %2683 = vst.msk [vmem:[#allocation4 + $0xb0] sm:$0xf] %vm2660, %v2650
        %2684 = vst.msk [vmem:[#allocation4 + $0xb8] sm:$0xf] %vm2660, %v2651
        %2685 = vst.msk [vmem:[#allocation4 + $0xc0] sm:$0xf] %vm2660, %v2652
        %2686 = vst.msk [vmem:[#allocation4 + $0xc8] sm:$0xf] %vm2660, %v2653
        %2687 = vst.msk [vmem:[#allocation4 + $0xd0] sm:$0xf] %vm2660, %v2654
        %2688 = vst.msk [vmem:[#allocation4 + $0xd8] sm:$0xf] %vm2660, %v2655
        %2689 = vst.msk [vmem:[#allocation4 + $0xe0] sm:$0xf] %vm2660, %v2656
        %2690 = vst.msk [vmem:[#allocation4 + $0xe8] sm:$0xf] %vm2660, %v2657
        %2691 = vst.msk [vmem:[#allocation4 + $0xf0] sm:$0xf] %vm2660, %v2658
        %2692 = vst.msk [vmem:[#allocation4 + $0xf8] sm:$0xf] %vm2660, %v2659
        %v2693 = vld [vmem:[#allocation3] sm:$0xf]
        %v2694 = vld [vmem:[#allocation3 + $0x4] sm:$0xf]
        %v2695 = vld [vmem:[#allocation3 + $0x8] sm:$0x1]
        %v2696 = vld [vmem:[#allocation3 + $0xc] sm:$0xf]
        %v2697 = vld [vmem:[#allocation3 + $0x10] sm:$0xf]
        %v2698 = vld [vmem:[#allocation3 + $0x14] sm:$0x1]
        %v2699 = vld [vmem:[#allocation3 + $0x18] sm:$0xf]
        %v2700 = vld [vmem:[#allocation3 + $0x1c] sm:$0xf]
        %v2701 = vld [vmem:[#allocation3 + $0x20] sm:$0x1]
        %v2702 = vld [vmem:[#allocation3 + $0x24] sm:$0xf]
        %v2703 = vld [vmem:[#allocation3 + $0x28] sm:$0xf]
        %v2704 = vld [vmem:[#allocation3 + $0x2c] sm:$0x1]
        %v2705 = vld [vmem:[#allocation3 + $0x30] sm:$0xf]
        %v2706 = vld [vmem:[#allocation3 + $0x34] sm:$0xf]
        %v2707 = vld [vmem:[#allocation3 + $0x38] sm:$0x1]
        %v2708 = vld [vmem:[#allocation3 + $0x3c] sm:$0xf]
        %v2709 = vld [vmem:[#allocation3 + $0x40] sm:$0xf]
        %v2710 = vld [vmem:[#allocation3 + $0x44] sm:$0x1]
        %v2711 = vld [vmem:[#allocation3 + $0x48] sm:$0xf]
        %v2712 = vld [vmem:[#allocation3 + $0x4c] sm:$0xf]
        %v2713 = vld [vmem:[#allocation3 + $0x50] sm:$0x1]
        %v2714 = vld [vmem:[#allocation3 + $0x54] sm:$0xf]
        %v2715 = vld [vmem:[#allocation3 + $0x58] sm:$0xf]
        %v2716 = vld [vmem:[#allocation3 + $0x5c] sm:$0x1]
        %v2717 = vld [vmem:[#allocation3 + $0x60] sm:$0xf]
        %v2718 = vld [vmem:[#allocation3 + $0x64] sm:$0xf]
        %v2719 = vld [vmem:[#allocation3 + $0x68] sm:$0x1]
        %v2720 = vld [vmem:[#allocation3 + $0x6c] sm:$0xf]
        %v2721 = vld [vmem:[#allocation3 + $0x70] sm:$0xf]
        %v2722 = vld [vmem:[#allocation3 + $0x74] sm:$0x1]
        %v2723 = vld [vmem:[#allocation3 + $0x78] sm:$0xf]
        %v2724 = vld [vmem:[#allocation3 + $0x7c] sm:$0xf]
        %v2725 = vld [vmem:[#allocation3 + $0x80] sm:$0x1]
        %v2726 = vld [vmem:[#allocation3 + $0x84] sm:$0xf]
        %v2727 = vld [vmem:[#allocation3 + $0x88] sm:$0xf]
        %v2728 = vld [vmem:[#allocation3 + $0x8c] sm:$0x1]
        %v2729 = vld [vmem:[#allocation3 + $0x90] sm:$0xf]
        %v2730 = vld [vmem:[#allocation3 + $0x94] sm:$0xf]
        %v2731 = vld [vmem:[#allocation3 + $0x98] sm:$0x1]
        %v2732 = vld [vmem:[#allocation3 + $0x9c] sm:$0xf]
        %v2733 = vld [vmem:[#allocation3 + $0xa0] sm:$0xf]
        %v2734 = vld [vmem:[#allocation3 + $0xa4] sm:$0x1]
        %v2735 = vld [vmem:[#allocation3 + $0xa8] sm:$0xf]
        %v2736 = vld [vmem:[#allocation3 + $0xac] sm:$0xf]
        %v2737 = vld [vmem:[#allocation3 + $0xb0] sm:$0x1]
        %v2738 = vld [vmem:[#allocation3 + $0xb4] sm:$0xf]
        %v2739 = vld [vmem:[#allocation3 + $0xb8] sm:$0xf]
        %v2740 = vld [vmem:[#allocation3 + $0xbc] sm:$0x1]
        %vm2741 = vsmask.f32 3328
        %vm2742 = vsmask.f32 7440
        %vm2743 = vmor %vm2741, %vm2742
        %v2745 = vshrl.u32 %v2693, 16
        %v2747 = vrot.slane %v2745, 4
        %v2748 = vshll.u32 %v2693, 16
        %v2750 = vrot.slane %v2748, 5
        %v2751 = vor.u32 %v2747, %v2750
        %v2752 = vrot.slane %v2751, 4
        %v2754 = vshll.u32 %v2694, 16
        %v2756 = vrot.slane %v2754, 5
        %v2757 = vsel %vm2743, %v2752, %v2756
        %v2758 = vshrl.u32 %v2694, 16
        %v2760 = vrot.slane %v2758, 4
        %v2761 = vor.u32 %v2760, %v2756
        %v2762 = vrot.slane %v2761, 4
        %v2764 = vshll.u32 %v2695, 16
        %v2766 = vrot.slane %v2764, 5
        %v2767 = vsel %vm2743, %v2762, %v2766
        %v2769 = vshrl.u32 %v2696, 16
        %v2771 = vrot.slane %v2769, 4
        %v2772 = vshll.u32 %v2696, 16
        %v2774 = vrot.slane %v2772, 5
        %v2775 = vor.u32 %v2771, %v2774
        %v2776 = vrot.slane %v2775, 4
        %v2778 = vshll.u32 %v2697, 16
        %v2780 = vrot.slane %v2778, 5
        %v2781 = vsel %vm2743, %v2776, %v2780
        %v2782 = vshrl.u32 %v2697, 16
        %v2784 = vrot.slane %v2782, 4
        %v2785 = vor.u32 %v2784, %v2780
        %v2786 = vrot.slane %v2785, 4
        %v2788 = vshll.u32 %v2698, 16
        %v2790 = vrot.slane %v2788, 5
        %v2791 = vsel %vm2743, %v2786, %v2790
        %v2793 = vshrl.u32 %v2699, 16
        %v2795 = vrot.slane %v2793, 4
        %v2796 = vshll.u32 %v2699, 16
        %v2798 = vrot.slane %v2796, 5
        %v2799 = vor.u32 %v2795, %v2798
        %v2800 = vrot.slane %v2799, 4
        %v2802 = vshll.u32 %v2700, 16
        %v2804 = vrot.slane %v2802, 5
        %v2805 = vsel %vm2743, %v2800, %v2804
        %v2806 = vshrl.u32 %v2700, 16
        %v2808 = vrot.slane %v2806, 4
        %v2809 = vor.u32 %v2808, %v2804
        %v2810 = vrot.slane %v2809, 4
        %v2812 = vshll.u32 %v2701, 16
        %v2814 = vrot.slane %v2812, 5
        %v2815 = vsel %vm2743, %v2810, %v2814
        %v2817 = vshrl.u32 %v2702, 16
        %v2819 = vrot.slane %v2817, 4
        %v2820 = vshll.u32 %v2702, 16
        %v2822 = vrot.slane %v2820, 5
        %v2823 = vor.u32 %v2819, %v2822
        %v2824 = vrot.slane %v2823, 4
        %v2826 = vshll.u32 %v2703, 16
        %v2828 = vrot.slane %v2826, 5
        %v2829 = vsel %vm2743, %v2824, %v2828
        %v2830 = vshrl.u32 %v2703, 16
        %v2832 = vrot.slane %v2830, 4
        %v2833 = vor.u32 %v2832, %v2828
        %v2834 = vrot.slane %v2833, 4
        %v2836 = vshll.u32 %v2704, 16
        %v2838 = vrot.slane %v2836, 5
        %v2839 = vsel %vm2743, %v2834, %v2838
        %v2841 = vshrl.u32 %v2705, 16
        %v2843 = vrot.slane %v2841, 4
        %v2844 = vshll.u32 %v2705, 16
        %v2846 = vrot.slane %v2844, 5
        %v2847 = vor.u32 %v2843, %v2846
        %v2848 = vrot.slane %v2847, 4
        %v2850 = vshll.u32 %v2706, 16
        %v2852 = vrot.slane %v2850, 5
        %v2853 = vsel %vm2743, %v2848, %v2852
        %v2854 = vshrl.u32 %v2706, 16
        %v2856 = vrot.slane %v2854, 4
        %v2857 = vor.u32 %v2856, %v2852
        %v2858 = vrot.slane %v2857, 4
        %v2860 = vshll.u32 %v2707, 16
        %v2862 = vrot.slane %v2860, 5
        %v2863 = vsel %vm2743, %v2858, %v2862
        %v2865 = vshrl.u32 %v2708, 16
        %v2867 = vrot.slane %v2865, 4
        %v2868 = vshll.u32 %v2708, 16
        %v2870 = vrot.slane %v2868, 5
        %v2871 = vor.u32 %v2867, %v2870
        %v2872 = vrot.slane %v2871, 4
        %v2874 = vshll.u32 %v2709, 16
        %v2876 = vrot.slane %v2874, 5
        %v2877 = vsel %vm2743, %v2872, %v2876
        %v2878 = vshrl.u32 %v2709, 16
        %v2880 = vrot.slane %v2878, 4
        %v2881 = vor.u32 %v2880, %v2876
        %v2882 = vrot.slane %v2881, 4
        %v2884 = vshll.u32 %v2710, 16
        %v2886 = vrot.slane %v2884, 5
        %v2887 = vsel %vm2743, %v2882, %v2886
        %v2889 = vshrl.u32 %v2711, 16
        %v2891 = vrot.slane %v2889, 4
        %v2892 = vshll.u32 %v2711, 16
        %v2894 = vrot.slane %v2892, 5
        %v2895 = vor.u32 %v2891, %v2894
        %v2896 = vrot.slane %v2895, 4
        %v2898 = vshll.u32 %v2712, 16
        %v2900 = vrot.slane %v2898, 5
        %v2901 = vsel %vm2743, %v2896, %v2900
        %v2902 = vshrl.u32 %v2712, 16
        %v2904 = vrot.slane %v2902, 4
        %v2905 = vor.u32 %v2904, %v2900
        %v2906 = vrot.slane %v2905, 4
        %v2908 = vshll.u32 %v2713, 16
        %v2910 = vrot.slane %v2908, 5
        %v2911 = vsel %vm2743, %v2906, %v2910
        %v2913 = vshrl.u32 %v2714, 16
        %v2915 = vrot.slane %v2913, 4
        %v2916 = vshll.u32 %v2714, 16
        %v2918 = vrot.slane %v2916, 5
        %v2919 = vor.u32 %v2915, %v2918
        %v2920 = vrot.slane %v2919, 4
        %v2922 = vshll.u32 %v2715, 16
        %v2924 = vrot.slane %v2922, 5
        %v2925 = vsel %vm2743, %v2920, %v2924
        %v2926 = vshrl.u32 %v2715, 16
        %v2928 = vrot.slane %v2926, 4
        %v2929 = vor.u32 %v2928, %v2924
        %v2930 = vrot.slane %v2929, 4
        %v2932 = vshll.u32 %v2716, 16
        %v2934 = vrot.slane %v2932, 5
        %v2935 = vsel %vm2743, %v2930, %v2934
        %v2937 = vshrl.u32 %v2717, 16
        %v2939 = vrot.slane %v2937, 4
        %v2940 = vshll.u32 %v2717, 16
        %v2942 = vrot.slane %v2940, 5
        %v2943 = vor.u32 %v2939, %v2942
        %v2944 = vrot.slane %v2943, 4
        %v2946 = vshll.u32 %v2718, 16
        %v2948 = vrot.slane %v2946, 5
        %v2949 = vsel %vm2743, %v2944, %v2948
        %v2950 = vshrl.u32 %v2718, 16
        %v2952 = vrot.slane %v2950, 4
        %v2953 = vor.u32 %v2952, %v2948
        %v2954 = vrot.slane %v2953, 4
        %v2956 = vshll.u32 %v2719, 16
        %v2958 = vrot.slane %v2956, 5
        %v2959 = vsel %vm2743, %v2954, %v2958
        %v2961 = vshrl.u32 %v2720, 16
        %v2963 = vrot.slane %v2961, 4
        %v2964 = vshll.u32 %v2720, 16
        %v2966 = vrot.slane %v2964, 5
        %v2967 = vor.u32 %v2963, %v2966
        %v2968 = vrot.slane %v2967, 4
        %v2970 = vshll.u32 %v2721, 16
        %v2972 = vrot.slane %v2970, 5
        %v2973 = vsel %vm2743, %v2968, %v2972
        %v2974 = vshrl.u32 %v2721, 16
        %v2976 = vrot.slane %v2974, 4
        %v2977 = vor.u32 %v2976, %v2972
        %v2978 = vrot.slane %v2977, 4
        %v2980 = vshll.u32 %v2722, 16
        %v2982 = vrot.slane %v2980, 5
        %v2983 = vsel %vm2743, %v2978, %v2982
        %v2985 = vshrl.u32 %v2723, 16
        %v2987 = vrot.slane %v2985, 4
        %v2988 = vshll.u32 %v2723, 16
        %v2990 = vrot.slane %v2988, 5
        %v2991 = vor.u32 %v2987, %v2990
        %v2992 = vrot.slane %v2991, 4
        %v2994 = vshll.u32 %v2724, 16
        %v2996 = vrot.slane %v2994, 5
        %v2997 = vsel %vm2743, %v2992, %v2996
        %v2998 = vshrl.u32 %v2724, 16
        %v3000 = vrot.slane %v2998, 4
        %v3001 = vor.u32 %v3000, %v2996
        %v3002 = vrot.slane %v3001, 4
        %v3004 = vshll.u32 %v2725, 16
        %v3006 = vrot.slane %v3004, 5
        %v3007 = vsel %vm2743, %v3002, %v3006
        %v3009 = vshrl.u32 %v2726, 16
        %v3011 = vrot.slane %v3009, 4
        %v3012 = vshll.u32 %v2726, 16
        %v3014 = vrot.slane %v3012, 5
        %v3015 = vor.u32 %v3011, %v3014
        %v3016 = vrot.slane %v3015, 4
        %v3018 = vshll.u32 %v2727, 16
        %v3020 = vrot.slane %v3018, 5
        %v3021 = vsel %vm2743, %v3016, %v3020
        %v3022 = vshrl.u32 %v2727, 16
        %v3024 = vrot.slane %v3022, 4
        %v3025 = vor.u32 %v3024, %v3020
        %v3026 = vrot.slane %v3025, 4
        %v3028 = vshll.u32 %v2728, 16
        %v3030 = vrot.slane %v3028, 5
        %v3031 = vsel %vm2743, %v3026, %v3030
        %v3033 = vshrl.u32 %v2729, 16
        %v3035 = vrot.slane %v3033, 4
        %v3036 = vshll.u32 %v2729, 16
        %v3038 = vrot.slane %v3036, 5
        %v3039 = vor.u32 %v3035, %v3038
        %v3040 = vrot.slane %v3039, 4
        %v3042 = vshll.u32 %v2730, 16
        %v3044 = vrot.slane %v3042, 5
        %v3045 = vsel %vm2743, %v3040, %v3044
        %v3046 = vshrl.u32 %v2730, 16
        %v3048 = vrot.slane %v3046, 4
        %v3049 = vor.u32 %v3048, %v3044
        %v3050 = vrot.slane %v3049, 4
        %v3052 = vshll.u32 %v2731, 16
        %v3054 = vrot.slane %v3052, 5
        %v3055 = vsel %vm2743, %v3050, %v3054
        %v3057 = vshrl.u32 %v2732, 16
        %v3059 = vrot.slane %v3057, 4
        %v3060 = vshll.u32 %v2732, 16
        %v3062 = vrot.slane %v3060, 5
        %v3063 = vor.u32 %v3059, %v3062
        %v3064 = vrot.slane %v3063, 4
        %v3066 = vshll.u32 %v2733, 16
        %v3068 = vrot.slane %v3066, 5
        %v3069 = vsel %vm2743, %v3064, %v3068
        %v3070 = vshrl.u32 %v2733, 16
        %v3072 = vrot.slane %v3070, 4
        %v3073 = vor.u32 %v3072, %v3068
        %v3074 = vrot.slane %v3073, 4
        %v3076 = vshll.u32 %v2734, 16
        %v3078 = vrot.slane %v3076, 5
        %v3079 = vsel %vm2743, %v3074, %v3078
        %v3081 = vshrl.u32 %v2735, 16
        %v3083 = vrot.slane %v3081, 4
        %v3084 = vshll.u32 %v2735, 16
        %v3086 = vrot.slane %v3084, 5
        %v3087 = vor.u32 %v3083, %v3086
        %v3088 = vrot.slane %v3087, 4
        %v3090 = vshll.u32 %v2736, 16
        %v3092 = vrot.slane %v3090, 5
        %v3093 = vsel %vm2743, %v3088, %v3092
        %v3094 = vshrl.u32 %v2736, 16
        %v3096 = vrot.slane %v3094, 4
        %v3097 = vor.u32 %v3096, %v3092
        %v3098 = vrot.slane %v3097, 4
        %v3100 = vshll.u32 %v2737, 16
        %v3102 = vrot.slane %v3100, 5
        %v3103 = vsel %vm2743, %v3098, %v3102
        %v3105 = vshrl.u32 %v2738, 16
        %v3107 = vrot.slane %v3105, 4
        %v3108 = vshll.u32 %v2738, 16
        %v3110 = vrot.slane %v3108, 5
        %v3111 = vor.u32 %v3107, %v3110
        %v3112 = vrot.slane %v3111, 4
        %v3114 = vshll.u32 %v2739, 16
        %v3116 = vrot.slane %v3114, 5
        %v3117 = vsel %vm2743, %v3112, %v3116
        %v3118 = vshrl.u32 %v2739, 16
        %v3120 = vrot.slane %v3118, 4
        %v3121 = vor.u32 %v3120, %v3116
        %v3122 = vrot.slane %v3121, 4
        %v3124 = vshll.u32 %v2740, 16
        %v3126 = vrot.slane %v3124, 5
        %v3127 = vsel %vm2743, %v3122, %v3126
        %3128 = vrot.lane.b32.xlu0 %v2757, 21
        %v3129 = vpop.permute.xlu0 %3128
        %3130 = vrot.lane.b32.xlu0 %v2767, 21
        %v3131 = vpop.permute.xlu0 %3130
        %3132 = vrot.lane.b32.xlu0 %v2781, 21
        %v3133 = vpop.permute.xlu0 %3132
        %3134 = vrot.lane.b32.xlu0 %v2791, 21
        %v3135 = vpop.permute.xlu0 %3134
        %3136 = vrot.lane.b32.xlu0 %v2805, 21
        %v3137 = vpop.permute.xlu0 %3136
        %3138 = vrot.lane.b32.xlu0 %v2815, 21
        %v3139 = vpop.permute.xlu0 %3138
        %3140 = vrot.lane.b32.xlu0 %v2829, 21
        %v3141 = vpop.permute.xlu0 %3140
        %3142 = vrot.lane.b32.xlu0 %v2839, 21
        %v3143 = vpop.permute.xlu0 %3142
        %3144 = vrot.lane.b32.xlu0 %v2853, 21
        %v3145 = vpop.permute.xlu0 %3144
        %3146 = vrot.lane.b32.xlu0 %v2863, 21
        %v3147 = vpop.permute.xlu0 %3146
        %3148 = vrot.lane.b32.xlu0 %v2877, 21
        %v3149 = vpop.permute.xlu0 %3148
        %3150 = vrot.lane.b32.xlu0 %v2887, 21
        %v3151 = vpop.permute.xlu0 %3150
        %3152 = vrot.lane.b32.xlu0 %v2901, 21
        %v3153 = vpop.permute.xlu0 %3152
        %3154 = vrot.lane.b32.xlu0 %v2911, 21
        %v3155 = vpop.permute.xlu0 %3154
        %3156 = vrot.lane.b32.xlu0 %v2925, 21
        %v3157 = vpop.permute.xlu0 %3156
        %3158 = vrot.lane.b32.xlu0 %v2935, 21
        %v3159 = vpop.permute.xlu0 %3158
        %3160 = vrot.lane.b32.xlu0 %v2949, 21
        %v3161 = vpop.permute.xlu0 %3160
        %3162 = vrot.lane.b32.xlu0 %v2959, 21
        %v3163 = vpop.permute.xlu0 %3162
        %3164 = vrot.lane.b32.xlu0 %v2973, 21
        %v3165 = vpop.permute.xlu0 %3164
        %3166 = vrot.lane.b32.xlu0 %v2983, 21
        %v3167 = vpop.permute.xlu0 %3166
        %3168 = vrot.lane.b32.xlu0 %v2997, 21
        %v3169 = vpop.permute.xlu0 %3168
        %3170 = vrot.lane.b32.xlu0 %v3007, 21
        %v3171 = vpop.permute.xlu0 %3170
        %3172 = vrot.lane.b32.xlu0 %v3021, 21
        %v3173 = vpop.permute.xlu0 %3172
        %3174 = vrot.lane.b32.xlu0 %v3031, 21
        %v3175 = vpop.permute.xlu0 %3174
        %3176 = vrot.lane.b32.xlu0 %v3045, 21
        %v3177 = vpop.permute.xlu0 %3176
        %3178 = vrot.lane.b32.xlu0 %v3055, 21
        %v3179 = vpop.permute.xlu0 %3178
        %3180 = vrot.lane.b32.xlu0 %v3069, 21
        %v3181 = vpop.permute.xlu0 %3180
        %3182 = vrot.lane.b32.xlu0 %v3079, 21
        %v3183 = vpop.permute.xlu0 %3182
        %3184 = vrot.lane.b32.xlu0 %v3093, 21
        %v3185 = vpop.permute.xlu0 %3184
        %3186 = vrot.lane.b32.xlu0 %v3103, 21
        %v3187 = vpop.permute.xlu0 %3186
        %3188 = vrot.lane.b32.xlu0 %v3117, 21
        %v3189 = vpop.permute.xlu0 %3188
        %3190 = vrot.lane.b32.xlu0 %v3127, 21
        %v3191 = vpop.permute.xlu0 %3190
        %vm3224 = vcmask 339112
        %3225 = vst.msk [vmem:[#allocation4] sm:$0xf] %vm3224, %v3129
        %3226 = vst.msk [vmem:[#allocation4 + $0x8] sm:$0xf] %vm3224, %v3131
        %3227 = vst.msk [vmem:[#allocation4 + $0x10] sm:$0xf] %vm3224, %v3133
        %3228 = vst.msk [vmem:[#allocation4 + $0x18] sm:$0xf] %vm3224, %v3135
        %3229 = vst.msk [vmem:[#allocation4 + $0x20] sm:$0xf] %vm3224, %v3137
        %3230 = vst.msk [vmem:[#allocation4 + $0x28] sm:$0xf] %vm3224, %v3139
        %3231 = vst.msk [vmem:[#allocation4 + $0x30] sm:$0xf] %vm3224, %v3141
        %3232 = vst.msk [vmem:[#allocation4 + $0x38] sm:$0xf] %vm3224, %v3143
        %3233 = vst.msk [vmem:[#allocation4 + $0x40] sm:$0xf] %vm3224, %v3145
        %3234 = vst.msk [vmem:[#allocation4 + $0x48] sm:$0xf] %vm3224, %v3147
        %3235 = vst.msk [vmem:[#allocation4 + $0x50] sm:$0xf] %vm3224, %v3149
        %3236 = vst.msk [vmem:[#allocation4 + $0x58] sm:$0xf] %vm3224, %v3151
        %3237 = vst.msk [vmem:[#allocation4 + $0x60] sm:$0xf] %vm3224, %v3153
        %3238 = vst.msk [vmem:[#allocation4 + $0x68] sm:$0xf] %vm3224, %v3155
        %3239 = vst.msk [vmem:[#allocation4 + $0x70] sm:$0xf] %vm3224, %v3157
        %3240 = vst.msk [vmem:[#allocation4 + $0x78] sm:$0xf] %vm3224, %v3159
        %3241 = vst.msk [vmem:[#allocation4 + $0x80] sm:$0xf] %vm3224, %v3161
        %3242 = vst.msk [vmem:[#allocation4 + $0x88] sm:$0xf] %vm3224, %v3163
        %3243 = vst.msk [vmem:[#allocation4 + $0x90] sm:$0xf] %vm3224, %v3165
        %3244 = vst.msk [vmem:[#allocation4 + $0x98] sm:$0xf] %vm3224, %v3167
        %3245 = vst.msk [vmem:[#allocation4 + $0xa0] sm:$0xf] %vm3224, %v3169
        %3246 = vst.msk [vmem:[#allocation4 + $0xa8] sm:$0xf] %vm3224, %v3171
        %3247 = vst.msk [vmem:[#allocation4 + $0xb0] sm:$0xf] %vm3224, %v3173
        %3248 = vst.msk [vmem:[#allocation4 + $0xb8] sm:$0xf] %vm3224, %v3175
        %3249 = vst.msk [vmem:[#allocation4 + $0xc0] sm:$0xf] %vm3224, %v3177
        %3250 = vst.msk [vmem:[#allocation4 + $0xc8] sm:$0xf] %vm3224, %v3179
        %3251 = vst.msk [vmem:[#allocation4 + $0xd0] sm:$0xf] %vm3224, %v3181
        %3252 = vst.msk [vmem:[#allocation4 + $0xd8] sm:$0xf] %vm3224, %v3183
        %3253 = vst.msk [vmem:[#allocation4 + $0xe0] sm:$0xf] %vm3224, %v3185
        %3254 = vst.msk [vmem:[#allocation4 + $0xe8] sm:$0xf] %vm3224, %v3187
        %3255 = vst.msk [vmem:[#allocation4 + $0xf0] sm:$0xf] %vm3224, %v3189
        %3256 = vst.msk [vmem:[#allocation4 + $0xf8] sm:$0xf] %vm3224, %v3191
        %v3257 = vld [vmem:[#allocation3] sm:$0xe]
        %v3258 = vld [vmem:[#allocation3 + $0x4] sm:$0xf]
        %v3259 = vld [vmem:[#allocation3 + $0x8] sm:$0x1]
        %v3260 = vld [vmem:[#allocation3 + $0xc] sm:$0xe]
        %v3261 = vld [vmem:[#allocation3 + $0x10] sm:$0xf]
        %v3262 = vld [vmem:[#allocation3 + $0x14] sm:$0x1]
        %v3263 = vld [vmem:[#allocation3 + $0x18] sm:$0xe]
        %v3264 = vld [vmem:[#allocation3 + $0x1c] sm:$0xf]
        %v3265 = vld [vmem:[#allocation3 + $0x20] sm:$0x1]
        %v3266 = vld [vmem:[#allocation3 + $0x24] sm:$0xe]
        %v3267 = vld [vmem:[#allocation3 + $0x28] sm:$0xf]
        %v3268 = vld [vmem:[#allocation3 + $0x2c] sm:$0x1]
        %v3269 = vld [vmem:[#allocation3 + $0x30] sm:$0xe]
        %v3270 = vld [vmem:[#allocation3 + $0x34] sm:$0xf]
        %v3271 = vld [vmem:[#allocation3 + $0x38] sm:$0x1]
        %v3272 = vld [vmem:[#allocation3 + $0x3c] sm:$0xe]
        %v3273 = vld [vmem:[#allocation3 + $0x40] sm:$0xf]
        %v3274 = vld [vmem:[#allocation3 + $0x44] sm:$0x1]
        %v3275 = vld [vmem:[#allocation3 + $0x48] sm:$0xe]
        %v3276 = vld [vmem:[#allocation3 + $0x4c] sm:$0xf]
        %v3277 = vld [vmem:[#allocation3 + $0x50] sm:$0x1]
        %v3278 = vld [vmem:[#allocation3 + $0x54] sm:$0xe]
        %v3279 = vld [vmem:[#allocation3 + $0x58] sm:$0xf]
        %v3280 = vld [vmem:[#allocation3 + $0x5c] sm:$0x1]
        %v3281 = vld [vmem:[#allocation3 + $0x60] sm:$0xe]
        %v3282 = vld [vmem:[#allocation3 + $0x64] sm:$0xf]
        %v3283 = vld [vmem:[#allocation3 + $0x68] sm:$0x1]
        %v3284 = vld [vmem:[#allocation3 + $0x6c] sm:$0xe]
        %v3285 = vld [vmem:[#allocation3 + $0x70] sm:$0xf]
        %v3286 = vld [vmem:[#allocation3 + $0x74] sm:$0x1]
        %v3287 = vld [vmem:[#allocation3 + $0x78] sm:$0xe]
        %v3288 = vld [vmem:[#allocation3 + $0x7c] sm:$0xf]
        %v3289 = vld [vmem:[#allocation3 + $0x80] sm:$0x1]
        %v3290 = vld [vmem:[#allocation3 + $0x84] sm:$0xe]
        %v3291 = vld [vmem:[#allocation3 + $0x88] sm:$0xf]
        %v3292 = vld [vmem:[#allocation3 + $0x8c] sm:$0x1]
        %v3293 = vld [vmem:[#allocation3 + $0x90] sm:$0xe]
        %v3294 = vld [vmem:[#allocation3 + $0x94] sm:$0xf]
        %v3295 = vld [vmem:[#allocation3 + $0x98] sm:$0x1]
        %v3296 = vld [vmem:[#allocation3 + $0x9c] sm:$0xe]
        %v3297 = vld [vmem:[#allocation3 + $0xa0] sm:$0xf]
        %v3298 = vld [vmem:[#allocation3 + $0xa4] sm:$0x1]
        %v3299 = vld [vmem:[#allocation3 + $0xa8] sm:$0xe]
        %v3300 = vld [vmem:[#allocation3 + $0xac] sm:$0xf]
        %v3301 = vld [vmem:[#allocation3 + $0xb0] sm:$0x1]
        %v3302 = vld [vmem:[#allocation3 + $0xb4] sm:$0xe]
        %v3303 = vld [vmem:[#allocation3 + $0xb8] sm:$0xf]
        %v3304 = vld [vmem:[#allocation3 + $0xbc] sm:$0x1]
        %vm3353 = vcmask 1042432
        %vm3354 = vcmask 1046532
        %vm3355 = vmor %vm3353, %vm3354
        %v3356 = vrot.slane %v3257, 5
        %v3357 = vrot.slane %v3356, 4
        %v3358 = vrot.slane %v3258, 5
        %v3359 = vsel %vm3355, %v3357, %v3358
        %v3360 = vrot.slane %v3358, 4
        %v3361 = vrot.slane %v3259, 5
        %v3362 = vsel %vm3355, %v3360, %v3361
        %v3363 = vrot.slane %v3260, 5
        %v3364 = vrot.slane %v3363, 4
        %v3365 = vrot.slane %v3261, 5
        %v3366 = vsel %vm3355, %v3364, %v3365
        %v3367 = vrot.slane %v3365, 4
        %v3368 = vrot.slane %v3262, 5
        %v3369 = vsel %vm3355, %v3367, %v3368
        %v3370 = vrot.slane %v3263, 5
        %v3371 = vrot.slane %v3370, 4
        %v3372 = vrot.slane %v3264, 5
        %v3373 = vsel %vm3355, %v3371, %v3372
        %v3374 = vrot.slane %v3372, 4
        %v3375 = vrot.slane %v3265, 5
        %v3376 = vsel %vm3355, %v3374, %v3375
        %v3377 = vrot.slane %v3266, 5
        %v3378 = vrot.slane %v3377, 4
        %v3379 = vrot.slane %v3267, 5
        %v3380 = vsel %vm3355, %v3378, %v3379
        %v3381 = vrot.slane %v3379, 4
        %v3382 = vrot.slane %v3268, 5
        %v3383 = vsel %vm3355, %v3381, %v3382
        %v3384 = vrot.slane %v3269, 5
        %v3385 = vrot.slane %v3384, 4
        %v3386 = vrot.slane %v3270, 5
        %v3387 = vsel %vm3355, %v3385, %v3386
        %v3388 = vrot.slane %v3386, 4
        %v3389 = vrot.slane %v3271, 5
        %v3390 = vsel %vm3355, %v3388, %v3389
        %v3391 = vrot.slane %v3272, 5
        %v3392 = vrot.slane %v3391, 4
        %v3393 = vrot.slane %v3273, 5
        %v3394 = vsel %vm3355, %v3392, %v3393
        %v3395 = vrot.slane %v3393, 4
        %v3396 = vrot.slane %v3274, 5
        %v3397 = vsel %vm3355, %v3395, %v3396
        %v3398 = vrot.slane %v3275, 5
        %v3399 = vrot.slane %v3398, 4
        %v3400 = vrot.slane %v3276, 5
        %v3401 = vsel %vm3355, %v3399, %v3400
        %v3402 = vrot.slane %v3400, 4
        %v3403 = vrot.slane %v3277, 5
        %v3404 = vsel %vm3355, %v3402, %v3403
        %v3405 = vrot.slane %v3278, 5
        %v3406 = vrot.slane %v3405, 4
        %v3407 = vrot.slane %v3279, 5
        %v3408 = vsel %vm3355, %v3406, %v3407
        %v3409 = vrot.slane %v3407, 4
        %v3410 = vrot.slane %v3280, 5
        %v3411 = vsel %vm3355, %v3409, %v3410
        %v3412 = vrot.slane %v3281, 5
        %v3413 = vrot.slane %v3412, 4
        %v3414 = vrot.slane %v3282, 5
        %v3415 = vsel %vm3355, %v3413, %v3414
        %v3416 = vrot.slane %v3414, 4
        %v3417 = vrot.slane %v3283, 5
        %v3418 = vsel %vm3355, %v3416, %v3417
        %v3419 = vrot.slane %v3284, 5
        %v3420 = vrot.slane %v3419, 4
        %v3421 = vrot.slane %v3285, 5
        %v3422 = vsel %vm3355, %v3420, %v3421
        %v3423 = vrot.slane %v3421, 4
        %v3424 = vrot.slane %v3286, 5
        %v3425 = vsel %vm3355, %v3423, %v3424
        %v3426 = vrot.slane %v3287, 5
        %v3427 = vrot.slane %v3426, 4
        %v3428 = vrot.slane %v3288, 5
        %v3429 = vsel %vm3355, %v3427, %v3428
        %v3430 = vrot.slane %v3428, 4
        %v3431 = vrot.slane %v3289, 5
        %v3432 = vsel %vm3355, %v3430, %v3431
        %v3433 = vrot.slane %v3290, 5
        %v3434 = vrot.slane %v3433, 4
        %v3435 = vrot.slane %v3291, 5
        %v3436 = vsel %vm3355, %v3434, %v3435
        %v3437 = vrot.slane %v3435, 4
        %v3438 = vrot.slane %v3292, 5
        %v3439 = vsel %vm3355, %v3437, %v3438
        %v3440 = vrot.slane %v3293, 5
        %v3441 = vrot.slane %v3440, 4
        %v3442 = vrot.slane %v3294, 5
        %v3443 = vsel %vm3355, %v3441, %v3442
        %v3444 = vrot.slane %v3442, 4
        %v3445 = vrot.slane %v3295, 5
        %v3446 = vsel %vm3355, %v3444, %v3445
        %v3447 = vrot.slane %v3296, 5
        %v3448 = vrot.slane %v3447, 4
        %v3449 = vrot.slane %v3297, 5
        %v3450 = vsel %vm3355, %v3448, %v3449
        %v3451 = vrot.slane %v3449, 4
        %v3452 = vrot.slane %v3298, 5
        %v3453 = vsel %vm3355, %v3451, %v3452
        %v3454 = vrot.slane %v3299, 5
        %v3455 = vrot.slane %v3454, 4
        %v3456 = vrot.slane %v3300, 5
        %v3457 = vsel %vm3355, %v3455, %v3456
        %v3458 = vrot.slane %v3456, 4
        %v3459 = vrot.slane %v3301, 5
        %v3460 = vsel %vm3355, %v3458, %v3459
        %v3461 = vrot.slane %v3302, 5
        %v3462 = vrot.slane %v3461, 4
        %v3463 = vrot.slane %v3303, 5
        %v3464 = vsel %vm3355, %v3462, %v3463
        %v3465 = vrot.slane %v3463, 4
        %v3466 = vrot.slane %v3304, 5
        %v3467 = vsel %vm3355, %v3465, %v3466
        %3468 = vrot.lane.b32.xlu0 %v3359, 42
        %v3469 = vpop.permute.xlu0 %3468
        %3470 = vrot.lane.b32.xlu0 %v3362, 42
        %v3471 = vpop.permute.xlu0 %3470
        %3472 = vrot.lane.b32.xlu0 %v3366, 42
        %v3473 = vpop.permute.xlu0 %3472
        %3474 = vrot.lane.b32.xlu0 %v3369, 42
        %v3475 = vpop.permute.xlu0 %3474
        %3476 = vrot.lane.b32.xlu0 %v3373, 42
        %v3477 = vpop.permute.xlu0 %3476
        %3478 = vrot.lane.b32.xlu0 %v3376, 42
        %v3479 = vpop.permute.xlu0 %3478
        %3480 = vrot.lane.b32.xlu0 %v3380, 42
        %v3481 = vpop.permute.xlu0 %3480
        %3482 = vrot.lane.b32.xlu0 %v3383, 42
        %v3483 = vpop.permute.xlu0 %3482
        %3484 = vrot.lane.b32.xlu0 %v3387, 42
        %v3485 = vpop.permute.xlu0 %3484
        %3486 = vrot.lane.b32.xlu0 %v3390, 42
        %v3487 = vpop.permute.xlu0 %3486
        %3488 = vrot.lane.b32.xlu0 %v3394, 42
        %v3489 = vpop.permute.xlu0 %3488
        %3490 = vrot.lane.b32.xlu0 %v3397, 42
        %v3491 = vpop.permute.xlu0 %3490
        %3492 = vrot.lane.b32.xlu0 %v3401, 42
        %v3493 = vpop.permute.xlu0 %3492
        %3494 = vrot.lane.b32.xlu0 %v3404, 42
        %v3495 = vpop.permute.xlu0 %3494
        %3496 = vrot.lane.b32.xlu0 %v3408, 42
        %v3497 = vpop.permute.xlu0 %3496
        %3498 = vrot.lane.b32.xlu0 %v3411, 42
        %v3499 = vpop.permute.xlu0 %3498
        %3500 = vrot.lane.b32.xlu0 %v3415, 42
        %v3501 = vpop.permute.xlu0 %3500
        %3502 = vrot.lane.b32.xlu0 %v3418, 42
        %v3503 = vpop.permute.xlu0 %3502
        %3504 = vrot.lane.b32.xlu0 %v3422, 42
        %v3505 = vpop.permute.xlu0 %3504
        %3506 = vrot.lane.b32.xlu0 %v3425, 42
        %v3507 = vpop.permute.xlu0 %3506
        %3508 = vrot.lane.b32.xlu0 %v3429, 42
        %v3509 = vpop.permute.xlu0 %3508
        %3510 = vrot.lane.b32.xlu0 %v3432, 42
        %v3511 = vpop.permute.xlu0 %3510
        %3512 = vrot.lane.b32.xlu0 %v3436, 42
        %v3513 = vpop.permute.xlu0 %3512
        %3514 = vrot.lane.b32.xlu0 %v3439, 42
        %v3515 = vpop.permute.xlu0 %3514
        %3516 = vrot.lane.b32.xlu0 %v3443, 42
        %v3517 = vpop.permute.xlu0 %3516
        %3518 = vrot.lane.b32.xlu0 %v3446, 42
        %v3519 = vpop.permute.xlu0 %3518
        %3520 = vrot.lane.b32.xlu0 %v3450, 42
        %v3521 = vpop.permute.xlu0 %3520
        %3522 = vrot.lane.b32.xlu0 %v3453, 42
        %v3523 = vpop.permute.xlu0 %3522
        %3524 = vrot.lane.b32.xlu0 %v3457, 42
        %v3525 = vpop.permute.xlu0 %3524
        %3526 = vrot.lane.b32.xlu0 %v3460, 42
        %v3527 = vpop.permute.xlu0 %3526
        %3528 = vrot.lane.b32.xlu0 %v3464, 42
        %v3529 = vpop.permute.xlu0 %3528
        %3530 = vrot.lane.b32.xlu0 %v3467, 42
        %v3531 = vpop.permute.xlu0 %3530
        %vm3564 = vcmask 511312
        %3565 = vst.msk [vmem:[#allocation4] sm:$0xf] %vm3564, %v3469
        %3566 = vst.msk [vmem:[#allocation4 + $0x8] sm:$0xf] %vm3564, %v3471
        %3567 = vst.msk [vmem:[#allocation4 + $0x10] sm:$0xf] %vm3564, %v3473
        %3568 = vst.msk [vmem:[#allocation4 + $0x18] sm:$0xf] %vm3564, %v3475
        %3569 = vst.msk [vmem:[#allocation4 + $0x20] sm:$0xf] %vm3564, %v3477
        %3570 = vst.msk [vmem:[#allocation4 + $0x28] sm:$0xf] %vm3564, %v3479
        %3571 = vst.msk [vmem:[#allocation4 + $0x30] sm:$0xf] %vm3564, %v3481
        %3572 = vst.msk [vmem:[#allocation4 + $0x38] sm:$0xf] %vm3564, %v3483
        %3573 = vst.msk [vmem:[#allocation4 + $0x40] sm:$0xf] %vm3564, %v3485
        %3574 = vst.msk [vmem:[#allocation4 + $0x48] sm:$0xf] %vm3564, %v3487
        %3575 = vst.msk [vmem:[#allocation4 + $0x50] sm:$0xf] %vm3564, %v3489
        %3576 = vst.msk [vmem:[#allocation4 + $0x58] sm:$0xf] %vm3564, %v3491
        %3577 = vst.msk [vmem:[#allocation4 + $0x60] sm:$0xf] %vm3564, %v3493
        %3578 = vst.msk [vmem:[#allocation4 + $0x68] sm:$0xf] %vm3564, %v3495
        %3579 = vst.msk [vmem:[#allocation4 + $0x70] sm:$0xf] %vm3564, %v3497
        %3580 = vst.msk [vmem:[#allocation4 + $0x78] sm:$0xf] %vm3564, %v3499
        %3581 = vst.msk [vmem:[#allocation4 + $0x80] sm:$0xf] %vm3564, %v3501
        %3582 = vst.msk [vmem:[#allocation4 + $0x88] sm:$0xf] %vm3564, %v3503
        %3583 = vst.msk [vmem:[#allocation4 + $0x90] sm:$0xf] %vm3564, %v3505
        %3584 = vst.msk [vmem:[#allocation4 + $0x98] sm:$0xf] %vm3564, %v3507
        %3585 = vst.msk [vmem:[#allocation4 + $0xa0] sm:$0xf] %vm3564, %v3509
        %3586 = vst.msk [vmem:[#allocation4 + $0xa8] sm:$0xf] %vm3564, %v3511
        %3587 = vst.msk [vmem:[#allocation4 + $0xb0] sm:$0xf] %vm3564, %v3513
        %3588 = vst.msk [vmem:[#allocation4 + $0xb8] sm:$0xf] %vm3564, %v3515
        %3589 = vst.msk [vmem:[#allocation4 + $0xc0] sm:$0xf] %vm3564, %v3517
        %3590 = vst.msk [vmem:[#allocation4 + $0xc8] sm:$0xf] %vm3564, %v3519
        %3591 = vst.msk [vmem:[#allocation4 + $0xd0] sm:$0xf] %vm3564, %v3521
        %3592 = vst.msk [vmem:[#allocation4 + $0xd8] sm:$0xf] %vm3564, %v3523
        %3593 = vst.msk [vmem:[#allocation4 + $0xe0] sm:$0xf] %vm3564, %v3525
        %3594 = vst.msk [vmem:[#allocation4 + $0xe8] sm:$0xf] %vm3564, %v3527
        %3595 = vst.msk [vmem:[#allocation4 + $0xf0] sm:$0xf] %vm3564, %v3529
        %3596 = vst.msk [vmem:[#allocation4 + $0xf8] sm:$0xf] %vm3564, %v3531
        %v3597 = vld [vmem:[#allocation3] sm:$0xe]
        %v3598 = vld [vmem:[#allocation3 + $0x4] sm:$0xf]
        %v3599 = vld [vmem:[#allocation3 + $0x8] sm:$0x3]
        %v3600 = vld [vmem:[#allocation3 + $0xc] sm:$0xe]
        %v3601 = vld [vmem:[#allocation3 + $0x10] sm:$0xf]
        %v3602 = vld [vmem:[#allocation3 + $0x14] sm:$0x3]
        %v3603 = vld [vmem:[#allocation3 + $0x18] sm:$0xe]
        %v3604 = vld [vmem:[#allocation3 + $0x1c] sm:$0xf]
        %v3605 = vld [vmem:[#allocation3 + $0x20] sm:$0x3]
        %v3606 = vld [vmem:[#allocation3 + $0x24] sm:$0xe]
        %v3607 = vld [vmem:[#allocation3 + $0x28] sm:$0xf]
        %v3608 = vld [vmem:[#allocation3 + $0x2c] sm:$0x3]
        %v3609 = vld [vmem:[#allocation3 + $0x30] sm:$0xe]
        %v3610 = vld [vmem:[#allocation3 + $0x34] sm:$0xf]
        %v3611 = vld [vmem:[#allocation3 + $0x38] sm:$0x3]
        %v3612 = vld [vmem:[#allocation3 + $0x3c] sm:$0xe]
        %v3613 = vld [vmem:[#allocation3 + $0x40] sm:$0xf]
        %v3614 = vld [vmem:[#allocation3 + $0x44] sm:$0x3]
        %v3615 = vld [vmem:[#allocation3 + $0x48] sm:$0xe]
        %v3616 = vld [vmem:[#allocation3 + $0x4c] sm:$0xf]
        %v3617 = vld [vmem:[#allocation3 + $0x50] sm:$0x3]
        %v3618 = vld [vmem:[#allocation3 + $0x54] sm:$0xe]
        %v3619 = vld [vmem:[#allocation3 + $0x58] sm:$0xf]
        %v3620 = vld [vmem:[#allocation3 + $0x5c] sm:$0x3]
        %v3621 = vld [vmem:[#allocation3 + $0x60] sm:$0xe]
        %v3622 = vld [vmem:[#allocation3 + $0x64] sm:$0xf]
        %v3623 = vld [vmem:[#allocation3 + $0x68] sm:$0x3]
        %v3624 = vld [vmem:[#allocation3 + $0x6c] sm:$0xe]
        %v3625 = vld [vmem:[#allocation3 + $0x70] sm:$0xf]
        %v3626 = vld [vmem:[#allocation3 + $0x74] sm:$0x3]
        %v3627 = vld [vmem:[#allocation3 + $0x78] sm:$0xe]
        %v3628 = vld [vmem:[#allocation3 + $0x7c] sm:$0xf]
        %v3629 = vld [vmem:[#allocation3 + $0x80] sm:$0x3]
        %v3630 = vld [vmem:[#allocation3 + $0x84] sm:$0xe]
        %v3631 = vld [vmem:[#allocation3 + $0x88] sm:$0xf]
        %v3632 = vld [vmem:[#allocation3 + $0x8c] sm:$0x3]
        %v3633 = vld [vmem:[#allocation3 + $0x90] sm:$0xe]
        %v3634 = vld [vmem:[#allocation3 + $0x94] sm:$0xf]
        %v3635 = vld [vmem:[#allocation3 + $0x98] sm:$0x3]
        %v3636 = vld [vmem:[#allocation3 + $0x9c] sm:$0xe]
        %v3637 = vld [vmem:[#allocation3 + $0xa0] sm:$0xf]
        %v3638 = vld [vmem:[#allocation3 + $0xa4] sm:$0x3]
        %v3639 = vld [vmem:[#allocation3 + $0xa8] sm:$0xe]
        %v3640 = vld [vmem:[#allocation3 + $0xac] sm:$0xf]
        %v3641 = vld [vmem:[#allocation3 + $0xb0] sm:$0x3]
        %v3642 = vld [vmem:[#allocation3 + $0xb4] sm:$0xe]
        %v3643 = vld [vmem:[#allocation3 + $0xb8] sm:$0xf]
        %v3644 = vld [vmem:[#allocation3 + $0xbc] sm:$0x3]
        %vm3645 = vsmask.f32 2304
        %vm3646 = vsmask.f32 6416
        %vm3647 = vmor %vm3645, %vm3646
        %v3649 = vshrl.u32 %v3597, 16
        %v3651 = vrot.slane %v3649, 5
        %v3652 = vshll.u32 %v3597, 16
        %v3654 = vrot.slane %v3652, 6
        %v3655 = vor.u32 %v3651, %v3654
        %v3656 = vrot.slane %v3655, 4
        %v3658 = vshrl.u32 %v3598, 16
        %v3660 = vrot.slane %v3658, 5
        %v3661 = vshll.u32 %v3598, 16
        %v3663 = vrot.slane %v3661, 6
        %v3664 = vor.u32 %v3660, %v3663
        %v3665 = vsel %vm3647, %v3656, %v3664
        %v3666 = vrot.slane %v3664, 4
        %v3668 = vshrl.u32 %v3599, 16
        %v3670 = vrot.slane %v3668, 5
        %v3671 = vshll.u32 %v3599, 16
        %v3673 = vrot.slane %v3671, 6
        %v3674 = vor.u32 %v3670, %v3673
        %v3675 = vsel %vm3647, %v3666, %v3674
        %v3677 = vshrl.u32 %v3600, 16
        %v3679 = vrot.slane %v3677, 5
        %v3680 = vshll.u32 %v3600, 16
        %v3682 = vrot.slane %v3680, 6
        %v3683 = vor.u32 %v3679, %v3682
        %v3684 = vrot.slane %v3683, 4
        %v3686 = vshrl.u32 %v3601, 16
        %v3688 = vrot.slane %v3686, 5
        %v3689 = vshll.u32 %v3601, 16
        %v3691 = vrot.slane %v3689, 6
        %v3692 = vor.u32 %v3688, %v3691
        %v3693 = vsel %vm3647, %v3684, %v3692
        %v3694 = vrot.slane %v3692, 4
        %v3696 = vshrl.u32 %v3602, 16
        %v3698 = vrot.slane %v3696, 5
        %v3699 = vshll.u32 %v3602, 16
        %v3701 = vrot.slane %v3699, 6
        %v3702 = vor.u32 %v3698, %v3701
        %v3703 = vsel %vm3647, %v3694, %v3702
        %v3705 = vshrl.u32 %v3603, 16
        %v3707 = vrot.slane %v3705, 5
        %v3708 = vshll.u32 %v3603, 16
        %v3710 = vrot.slane %v3708, 6
        %v3711 = vor.u32 %v3707, %v3710
        %v3712 = vrot.slane %v3711, 4
        %v3714 = vshrl.u32 %v3604, 16
        %v3716 = vrot.slane %v3714, 5
        %v3717 = vshll.u32 %v3604, 16
        %v3719 = vrot.slane %v3717, 6
        %v3720 = vor.u32 %v3716, %v3719
        %v3721 = vsel %vm3647, %v3712, %v3720
        %v3722 = vrot.slane %v3720, 4
        %v3724 = vshrl.u32 %v3605, 16
        %v3726 = vrot.slane %v3724, 5
        %v3727 = vshll.u32 %v3605, 16
        %v3729 = vrot.slane %v3727, 6
        %v3730 = vor.u32 %v3726, %v3729
        %v3731 = vsel %vm3647, %v3722, %v3730
        %v3733 = vshrl.u32 %v3606, 16
        %v3735 = vrot.slane %v3733, 5
        %v3736 = vshll.u32 %v3606, 16
        %v3738 = vrot.slane %v3736, 6
        %v3739 = vor.u32 %v3735, %v3738
        %v3740 = vrot.slane %v3739, 4
        %v3742 = vshrl.u32 %v3607, 16
        %v3744 = vrot.slane %v3742, 5
        %v3745 = vshll.u32 %v3607, 16
        %v3747 = vrot.slane %v3745, 6
        %v3748 = vor.u32 %v3744, %v3747
        %v3749 = vsel %vm3647, %v3740, %v3748
        %v3750 = vrot.slane %v3748, 4
        %v3752 = vshrl.u32 %v3608, 16
        %v3754 = vrot.slane %v3752, 5
        %v3755 = vshll.u32 %v3608, 16
        %v3757 = vrot.slane %v3755, 6
        %v3758 = vor.u32 %v3754, %v3757
        %v3759 = vsel %vm3647, %v3750, %v3758
        %v3761 = vshrl.u32 %v3609, 16
        %v3763 = vrot.slane %v3761, 5
        %v3764 = vshll.u32 %v3609, 16
        %v3766 = vrot.slane %v3764, 6
        %v3767 = vor.u32 %v3763, %v3766
        %v3768 = vrot.slane %v3767, 4
        %v3770 = vshrl.u32 %v3610, 16
        %v3772 = vrot.slane %v3770, 5
        %v3773 = vshll.u32 %v3610, 16
        %v3775 = vrot.slane %v3773, 6
        %v3776 = vor.u32 %v3772, %v3775
        %v3777 = vsel %vm3647, %v3768, %v3776
        %v3778 = vrot.slane %v3776, 4
        %v3780 = vshrl.u32 %v3611, 16
        %v3782 = vrot.slane %v3780, 5
        %v3783 = vshll.u32 %v3611, 16
        %v3785 = vrot.slane %v3783, 6
        %v3786 = vor.u32 %v3782, %v3785
        %v3787 = vsel %vm3647, %v3778, %v3786
        %v3789 = vshrl.u32 %v3612, 16
        %v3791 = vrot.slane %v3789, 5
        %v3792 = vshll.u32 %v3612, 16
        %v3794 = vrot.slane %v3792, 6
        %v3795 = vor.u32 %v3791, %v3794
        %v3796 = vrot.slane %v3795, 4
        %v3798 = vshrl.u32 %v3613, 16
        %v3800 = vrot.slane %v3798, 5
        %v3801 = vshll.u32 %v3613, 16
        %v3803 = vrot.slane %v3801, 6
        %v3804 = vor.u32 %v3800, %v3803
        %v3805 = vsel %vm3647, %v3796, %v3804
        %v3806 = vrot.slane %v3804, 4
        %v3808 = vshrl.u32 %v3614, 16
        %v3810 = vrot.slane %v3808, 5
        %v3811 = vshll.u32 %v3614, 16
        %v3813 = vrot.slane %v3811, 6
        %v3814 = vor.u32 %v3810, %v3813
        %v3815 = vsel %vm3647, %v3806, %v3814
        %v3817 = vshrl.u32 %v3615, 16
        %v3819 = vrot.slane %v3817, 5
        %v3820 = vshll.u32 %v3615, 16
        %v3822 = vrot.slane %v3820, 6
        %v3823 = vor.u32 %v3819, %v3822
        %v3824 = vrot.slane %v3823, 4
        %v3826 = vshrl.u32 %v3616, 16
        %v3828 = vrot.slane %v3826, 5
        %v3829 = vshll.u32 %v3616, 16
        %v3831 = vrot.slane %v3829, 6
        %v3832 = vor.u32 %v3828, %v3831
        %v3833 = vsel %vm3647, %v3824, %v3832
        %v3834 = vrot.slane %v3832, 4
        %v3836 = vshrl.u32 %v3617, 16
        %v3838 = vrot.slane %v3836, 5
        %v3839 = vshll.u32 %v3617, 16
        %v3841 = vrot.slane %v3839, 6
        %v3842 = vor.u32 %v3838, %v3841
        %v3843 = vsel %vm3647, %v3834, %v3842
        %v3845 = vshrl.u32 %v3618, 16
        %v3847 = vrot.slane %v3845, 5
        %v3848 = vshll.u32 %v3618, 16
        %v3850 = vrot.slane %v3848, 6
        %v3851 = vor.u32 %v3847, %v3850
        %v3852 = vrot.slane %v3851, 4
        %v3854 = vshrl.u32 %v3619, 16
        %v3856 = vrot.slane %v3854, 5
        %v3857 = vshll.u32 %v3619, 16
        %v3859 = vrot.slane %v3857, 6
        %v3860 = vor.u32 %v3856, %v3859
        %v3861 = vsel %vm3647, %v3852, %v3860
        %v3862 = vrot.slane %v3860, 4
        %v3864 = vshrl.u32 %v3620, 16
        %v3866 = vrot.slane %v3864, 5
        %v3867 = vshll.u32 %v3620, 16
        %v3869 = vrot.slane %v3867, 6
        %v3870 = vor.u32 %v3866, %v3869
        %v3871 = vsel %vm3647, %v3862, %v3870
        %v3873 = vshrl.u32 %v3621, 16
        %v3875 = vrot.slane %v3873, 5
        %v3876 = vshll.u32 %v3621, 16
        %v3878 = vrot.slane %v3876, 6
        %v3879 = vor.u32 %v3875, %v3878
        %v3880 = vrot.slane %v3879, 4
        %v3882 = vshrl.u32 %v3622, 16
        %v3884 = vrot.slane %v3882, 5
        %v3885 = vshll.u32 %v3622, 16
        %v3887 = vrot.slane %v3885, 6
        %v3888 = vor.u32 %v3884, %v3887
        %v3889 = vsel %vm3647, %v3880, %v3888
        %v3890 = vrot.slane %v3888, 4
        %v3892 = vshrl.u32 %v3623, 16
        %v3894 = vrot.slane %v3892, 5
        %v3895 = vshll.u32 %v3623, 16
        %v3897 = vrot.slane %v3895, 6
        %v3898 = vor.u32 %v3894, %v3897
        %v3899 = vsel %vm3647, %v3890, %v3898
        %v3901 = vshrl.u32 %v3624, 16
        %v3903 = vrot.slane %v3901, 5
        %v3904 = vshll.u32 %v3624, 16
        %v3906 = vrot.slane %v3904, 6
        %v3907 = vor.u32 %v3903, %v3906
        %v3908 = vrot.slane %v3907, 4
        %v3910 = vshrl.u32 %v3625, 16
        %v3912 = vrot.slane %v3910, 5
        %v3913 = vshll.u32 %v3625, 16
        %v3915 = vrot.slane %v3913, 6
        %v3916 = vor.u32 %v3912, %v3915
        %v3917 = vsel %vm3647, %v3908, %v3916
        %v3918 = vrot.slane %v3916, 4
        %v3920 = vshrl.u32 %v3626, 16
        %v3922 = vrot.slane %v3920, 5
        %v3923 = vshll.u32 %v3626, 16
        %v3925 = vrot.slane %v3923, 6
        %v3926 = vor.u32 %v3922, %v3925
        %v3927 = vsel %vm3647, %v3918, %v3926
        %v3929 = vshrl.u32 %v3627, 16
        %v3931 = vrot.slane %v3929, 5
        %v3932 = vshll.u32 %v3627, 16
        %v3934 = vrot.slane %v3932, 6
        %v3935 = vor.u32 %v3931, %v3934
        %v3936 = vrot.slane %v3935, 4
        %v3938 = vshrl.u32 %v3628, 16
        %v3940 = vrot.slane %v3938, 5
        %v3941 = vshll.u32 %v3628, 16
        %v3943 = vrot.slane %v3941, 6
        %v3944 = vor.u32 %v3940, %v3943
        %v3945 = vsel %vm3647, %v3936, %v3944
        %v3946 = vrot.slane %v3944, 4
        %v3948 = vshrl.u32 %v3629, 16
        %v3950 = vrot.slane %v3948, 5
        %v3951 = vshll.u32 %v3629, 16
        %v3953 = vrot.slane %v3951, 6
        %v3954 = vor.u32 %v3950, %v3953
        %v3955 = vsel %vm3647, %v3946, %v3954
        %v3957 = vshrl.u32 %v3630, 16
        %v3959 = vrot.slane %v3957, 5
        %v3960 = vshll.u32 %v3630, 16
        %v3962 = vrot.slane %v3960, 6
        %v3963 = vor.u32 %v3959, %v3962
        %v3964 = vrot.slane %v3963, 4
        %v3966 = vshrl.u32 %v3631, 16
        %v3968 = vrot.slane %v3966, 5
        %v3969 = vshll.u32 %v3631, 16
        %v3971 = vrot.slane %v3969, 6
        %v3972 = vor.u32 %v3968, %v3971
        %v3973 = vsel %vm3647, %v3964, %v3972
        %v3974 = vrot.slane %v3972, 4
        %v3976 = vshrl.u32 %v3632, 16
        %v3978 = vrot.slane %v3976, 5
        %v3979 = vshll.u32 %v3632, 16
        %v3981 = vrot.slane %v3979, 6
        %v3982 = vor.u32 %v3978, %v3981
        %v3983 = vsel %vm3647, %v3974, %v3982
        %v3985 = vshrl.u32 %v3633, 16
        %v3987 = vrot.slane %v3985, 5
        %v3988 = vshll.u32 %v3633, 16
        %v3990 = vrot.slane %v3988, 6
        %v3991 = vor.u32 %v3987, %v3990
        %v3992 = vrot.slane %v3991, 4
        %v3994 = vshrl.u32 %v3634, 16
        %v3996 = vrot.slane %v3994, 5
        %v3997 = vshll.u32 %v3634, 16
        %v3999 = vrot.slane %v3997, 6
        %v4000 = vor.u32 %v3996, %v3999
        %v4001 = vsel %vm3647, %v3992, %v4000
        %v4002 = vrot.slane %v4000, 4
        %v4004 = vshrl.u32 %v3635, 16
        %v4006 = vrot.slane %v4004, 5
        %v4007 = vshll.u32 %v3635, 16
        %v4009 = vrot.slane %v4007, 6
        %v4010 = vor.u32 %v4006, %v4009
        %v4011 = vsel %vm3647, %v4002, %v4010
        %v4013 = vshrl.u32 %v3636, 16
        %v4015 = vrot.slane %v4013, 5
        %v4016 = vshll.u32 %v3636, 16
        %v4018 = vrot.slane %v4016, 6
        %v4019 = vor.u32 %v4015, %v4018
        %v4020 = vrot.slane %v4019, 4
        %v4022 = vshrl.u32 %v3637, 16
        %v4024 = vrot.slane %v4022, 5
        %v4025 = vshll.u32 %v3637, 16
        %v4027 = vrot.slane %v4025, 6
        %v4028 = vor.u32 %v4024, %v4027
        %v4029 = vsel %vm3647, %v4020, %v4028
        %v4030 = vrot.slane %v4028, 4
        %v4032 = vshrl.u32 %v3638, 16
        %v4034 = vrot.slane %v4032, 5
        %v4035 = vshll.u32 %v3638, 16
        %v4037 = vrot.slane %v4035, 6
        %v4038 = vor.u32 %v4034, %v4037
        %v4039 = vsel %vm3647, %v4030, %v4038
        %v4041 = vshrl.u32 %v3639, 16
        %v4043 = vrot.slane %v4041, 5
        %v4044 = vshll.u32 %v3639, 16
        %v4046 = vrot.slane %v4044, 6
        %v4047 = vor.u32 %v4043, %v4046
        %v4048 = vrot.slane %v4047, 4
        %v4050 = vshrl.u32 %v3640, 16
        %v4052 = vrot.slane %v4050, 5
        %v4053 = vshll.u32 %v3640, 16
        %v4055 = vrot.slane %v4053, 6
        %v4056 = vor.u32 %v4052, %v4055
        %v4057 = vsel %vm3647, %v4048, %v4056
        %v4058 = vrot.slane %v4056, 4
        %v4060 = vshrl.u32 %v3641, 16
        %v4062 = vrot.slane %v4060, 5
        %v4063 = vshll.u32 %v3641, 16
        %v4065 = vrot.slane %v4063, 6
        %v4066 = vor.u32 %v4062, %v4065
        %v4067 = vsel %vm3647, %v4058, %v4066
        %v4069 = vshrl.u32 %v3642, 16
        %v4071 = vrot.slane %v4069, 5
        %v4072 = vshll.u32 %v3642, 16
        %v4074 = vrot.slane %v4072, 6
        %v4075 = vor.u32 %v4071, %v4074
        %v4076 = vrot.slane %v4075, 4
        %v4078 = vshrl.u32 %v3643, 16
        %v4080 = vrot.slane %v4078, 5
        %v4081 = vshll.u32 %v3643, 16
        %v4083 = vrot.slane %v4081, 6
        %v4084 = vor.u32 %v4080, %v4083
        %v4085 = vsel %vm3647, %v4076, %v4084
        %v4086 = vrot.slane %v4084, 4
        %v4088 = vshrl.u32 %v3644, 16
        %v4090 = vrot.slane %v4088, 5
        %v4091 = vshll.u32 %v3644, 16
        %v4093 = vrot.slane %v4091, 6
        %v4094 = vor.u32 %v4090, %v4093
        %v4095 = vsel %vm3647, %v4086, %v4094
        %4096 = vrot.lane.b32.xlu0 %v3665, 63
        %v4097 = vpop.permute.xlu0 %4096
        %4098 = vrot.lane.b32.xlu0 %v3675, 63
        %v4099 = vpop.permute.xlu0 %4098
        %4100 = vrot.lane.b32.xlu0 %v3693, 63
        %v4101 = vpop.permute.xlu0 %4100
        %4102 = vrot.lane.b32.xlu0 %v3703, 63
        %v4103 = vpop.permute.xlu0 %4102
        %4104 = vrot.lane.b32.xlu0 %v3721, 63
        %v4105 = vpop.permute.xlu0 %4104
        %4106 = vrot.lane.b32.xlu0 %v3731, 63
        %v4107 = vpop.permute.xlu0 %4106
        %4108 = vrot.lane.b32.xlu0 %v3749, 63
        %v4109 = vpop.permute.xlu0 %4108
        %4110 = vrot.lane.b32.xlu0 %v3759, 63
        %v4111 = vpop.permute.xlu0 %4110
        %4112 = vrot.lane.b32.xlu0 %v3777, 63
        %v4113 = vpop.permute.xlu0 %4112
        %4114 = vrot.lane.b32.xlu0 %v3787, 63
        %v4115 = vpop.permute.xlu0 %4114
        %4116 = vrot.lane.b32.xlu0 %v3805, 63
        %v4117 = vpop.permute.xlu0 %4116
        %4118 = vrot.lane.b32.xlu0 %v3815, 63
        %v4119 = vpop.permute.xlu0 %4118
        %4120 = vrot.lane.b32.xlu0 %v3833, 63
        %v4121 = vpop.permute.xlu0 %4120
        %4122 = vrot.lane.b32.xlu0 %v3843, 63
        %v4123 = vpop.permute.xlu0 %4122
        %4124 = vrot.lane.b32.xlu0 %v3861, 63
        %v4125 = vpop.permute.xlu0 %4124
        %4126 = vrot.lane.b32.xlu0 %v3871, 63
        %v4127 = vpop.permute.xlu0 %4126
        %4128 = vrot.lane.b32.xlu0 %v3889, 63
        %v4129 = vpop.permute.xlu0 %4128
        %4130 = vrot.lane.b32.xlu0 %v3899, 63
        %v4131 = vpop.permute.xlu0 %4130
        %4132 = vrot.lane.b32.xlu0 %v3917, 63
        %v4133 = vpop.permute.xlu0 %4132
        %4134 = vrot.lane.b32.xlu0 %v3927, 63
        %v4135 = vpop.permute.xlu0 %4134
        %4136 = vrot.lane.b32.xlu0 %v3945, 63
        %v4137 = vpop.permute.xlu0 %4136
        %4138 = vrot.lane.b32.xlu0 %v3955, 63
        %v4139 = vpop.permute.xlu0 %4138
        %4140 = vrot.lane.b32.xlu0 %v3973, 63
        %v4141 = vpop.permute.xlu0 %4140
        %4142 = vrot.lane.b32.xlu0 %v3983, 63
        %v4143 = vpop.permute.xlu0 %4142
        %4144 = vrot.lane.b32.xlu0 %v4001, 63
        %v4145 = vpop.permute.xlu0 %4144
        %4146 = vrot.lane.b32.xlu0 %v4011, 63
        %v4147 = vpop.permute.xlu0 %4146
        %4148 = vrot.lane.b32.xlu0 %v4029, 63
        %v4149 = vpop.permute.xlu0 %4148
        %4150 = vrot.lane.b32.xlu0 %v4039, 63
        %v4151 = vpop.permute.xlu0 %4150
        %4152 = vrot.lane.b32.xlu0 %v4057, 63
        %v4153 = vpop.permute.xlu0 %4152
        %4154 = vrot.lane.b32.xlu0 %v4067, 63
        %v4155 = vpop.permute.xlu0 %4154
        %4156 = vrot.lane.b32.xlu0 %v4085, 63
        %v4157 = vpop.permute.xlu0 %4156
        %4158 = vrot.lane.b32.xlu0 %v4095, 63
        %v4159 = vpop.permute.xlu0 %4158
        %vm4192 = vcmask 683512
        %4193 = vst.msk [vmem:[#allocation4] sm:$0xf] %vm4192, %v4097
        %4194 = vst.msk [vmem:[#allocation4 + $0x8] sm:$0xf] %vm4192, %v4099
        %4195 = vst.msk [vmem:[#allocation4 + $0x10] sm:$0xf] %vm4192, %v4101
        %4196 = vst.msk [vmem:[#allocation4 + $0x18] sm:$0xf] %vm4192, %v4103
        %4197 = vst.msk [vmem:[#allocation4 + $0x20] sm:$0xf] %vm4192, %v4105
        %4198 = vst.msk [vmem:[#allocation4 + $0x28] sm:$0xf] %vm4192, %v4107
        %4199 = vst.msk [vmem:[#allocation4 + $0x30] sm:$0xf] %vm4192, %v4109
        %4200 = vst.msk [vmem:[#allocation4 + $0x38] sm:$0xf] %vm4192, %v4111
        %4201 = vst.msk [vmem:[#allocation4 + $0x40] sm:$0xf] %vm4192, %v4113
        %4202 = vst.msk [vmem:[#allocation4 + $0x48] sm:$0xf] %vm4192, %v4115
        %4203 = vst.msk [vmem:[#allocation4 + $0x50] sm:$0xf] %vm4192, %v4117
        %4204 = vst.msk [vmem:[#allocation4 + $0x58] sm:$0xf] %vm4192, %v4119
        %4205 = vst.msk [vmem:[#allocation4 + $0x60] sm:$0xf] %vm4192, %v4121
        %4206 = vst.msk [vmem:[#allocation4 + $0x68] sm:$0xf] %vm4192, %v4123
        %4207 = vst.msk [vmem:[#allocation4 + $0x70] sm:$0xf] %vm4192, %v4125
        %4208 = vst.msk [vmem:[#allocation4 + $0x78] sm:$0xf] %vm4192, %v4127
        %4209 = vst.msk [vmem:[#allocation4 + $0x80] sm:$0xf] %vm4192, %v4129
        %4210 = vst.msk [vmem:[#allocation4 + $0x88] sm:$0xf] %vm4192, %v4131
        %4211 = vst.msk [vmem:[#allocation4 + $0x90] sm:$0xf] %vm4192, %v4133
        %4212 = vst.msk [vmem:[#allocation4 + $0x98] sm:$0xf] %vm4192, %v4135
        %4213 = vst.msk [vmem:[#allocation4 + $0xa0] sm:$0xf] %vm4192, %v4137
        %4214 = vst.msk [vmem:[#allocation4 + $0xa8] sm:$0xf] %vm4192, %v4139
        %4215 = vst.msk [vmem:[#allocation4 + $0xb0] sm:$0xf] %vm4192, %v4141
        %4216 = vst.msk [vmem:[#allocation4 + $0xb8] sm:$0xf] %vm4192, %v4143
        %4217 = vst.msk [vmem:[#allocation4 + $0xc0] sm:$0xf] %vm4192, %v4145
        %4218 = vst.msk [vmem:[#allocation4 + $0xc8] sm:$0xf] %vm4192, %v4147
        %4219 = vst.msk [vmem:[#allocation4 + $0xd0] sm:$0xf] %vm4192, %v4149
        %4220 = vst.msk [vmem:[#allocation4 + $0xd8] sm:$0xf] %vm4192, %v4151
        %4221 = vst.msk [vmem:[#allocation4 + $0xe0] sm:$0xf] %vm4192, %v4153
        %4222 = vst.msk [vmem:[#allocation4 + $0xe8] sm:$0xf] %vm4192, %v4155
        %4223 = vst.msk [vmem:[#allocation4 + $0xf0] sm:$0xf] %vm4192, %v4157
        %4224 = vst.msk [vmem:[#allocation4 + $0xf8] sm:$0xf] %vm4192, %v4159
        %v4225 = vld [vmem:[#allocation3] sm:$0xc]
        %v4226 = vld [vmem:[#allocation3 + $0x4] sm:$0xf]
        %v4227 = vld [vmem:[#allocation3 + $0x8] sm:$0x3]
        %v4228 = vld [vmem:[#allocation3 + $0xc] sm:$0xc]
        %v4229 = vld [vmem:[#allocation3 + $0x10] sm:$0xf]
        %v4230 = vld [vmem:[#allocation3 + $0x14] sm:$0x3]
        %v4231 = vld [vmem:[#allocation3 + $0x18] sm:$0xc]
        %v4232 = vld [vmem:[#allocation3 + $0x1c] sm:$0xf]
        %v4233 = vld [vmem:[#allocation3 + $0x20] sm:$0x3]
        %v4234 = vld [vmem:[#allocation3 + $0x24] sm:$0xc]
        %v4235 = vld [vmem:[#allocation3 + $0x28] sm:$0xf]
        %v4236 = vld [vmem:[#allocation3 + $0x2c] sm:$0x3]
        %v4237 = vld [vmem:[#allocation3 + $0x30] sm:$0xc]
        %v4238 = vld [vmem:[#allocation3 + $0x34] sm:$0xf]
        %v4239 = vld [vmem:[#allocation3 + $0x38] sm:$0x3]
        %v4240 = vld [vmem:[#allocation3 + $0x3c] sm:$0xc]
        %v4241 = vld [vmem:[#allocation3 + $0x40] sm:$0xf]
        %v4242 = vld [vmem:[#allocation3 + $0x44] sm:$0x3]
        %v4243 = vld [vmem:[#allocation3 + $0x48] sm:$0xc]
        %v4244 = vld [vmem:[#allocation3 + $0x4c] sm:$0xf]
        %v4245 = vld [vmem:[#allocation3 + $0x50] sm:$0x3]
        %v4246 = vld [vmem:[#allocation3 + $0x54] sm:$0xc]
        %v4247 = vld [vmem:[#allocation3 + $0x58] sm:$0xf]
        %v4248 = vld [vmem:[#allocation3 + $0x5c] sm:$0x3]
        %v4249 = vld [vmem:[#allocation3 + $0x60] sm:$0xc]
        %v4250 = vld [vmem:[#allocation3 + $0x64] sm:$0xf]
        %v4251 = vld [vmem:[#allocation3 + $0x68] sm:$0x3]
        %v4252 = vld [vmem:[#allocation3 + $0x6c] sm:$0xc]
        %v4253 = vld [vmem:[#allocation3 + $0x70] sm:$0xf]
        %v4254 = vld [vmem:[#allocation3 + $0x74] sm:$0x3]
        %v4255 = vld [vmem:[#allocation3 + $0x78] sm:$0xc]
        %v4256 = vld [vmem:[#allocation3 + $0x7c] sm:$0xf]
        %v4257 = vld [vmem:[#allocation3 + $0x80] sm:$0x3]
        %v4258 = vld [vmem:[#allocation3 + $0x84] sm:$0xc]
        %v4259 = vld [vmem:[#allocation3 + $0x88] sm:$0xf]
        %v4260 = vld [vmem:[#allocation3 + $0x8c] sm:$0x3]
        %v4261 = vld [vmem:[#allocation3 + $0x90] sm:$0xc]
        %v4262 = vld [vmem:[#allocation3 + $0x94] sm:$0xf]
        %v4263 = vld [vmem:[#allocation3 + $0x98] sm:$0x3]
        %v4264 = vld [vmem:[#allocation3 + $0x9c] sm:$0xc]
        %v4265 = vld [vmem:[#allocation3 + $0xa0] sm:$0xf]
        %v4266 = vld [vmem:[#allocation3 + $0xa4] sm:$0x3]
        %v4267 = vld [vmem:[#allocation3 + $0xa8] sm:$0xc]
        %v4268 = vld [vmem:[#allocation3 + $0xac] sm:$0xf]
        %v4269 = vld [vmem:[#allocation3 + $0xb0] sm:$0x3]
        %v4270 = vld [vmem:[#allocation3 + $0xb4] sm:$0xc]
        %v4271 = vld [vmem:[#allocation3 + $0xb8] sm:$0xf]
        %v4272 = vld [vmem:[#allocation3 + $0xbc] sm:$0x3]
        %vm4321 = vcmask 1041408
        %vm4322 = vcmask 1045508
        %vm4323 = vmor %vm4321, %vm4322
        %v4324 = vrot.slane %v4225, 6
        %v4325 = vrot.slane %v4324, 4
        %v4326 = vrot.slane %v4226, 6
        %v4327 = vsel %vm4323, %v4325, %v4326
        %v4328 = vrot.slane %v4326, 4
        %v4329 = vrot.slane %v4227, 6
        %v4330 = vsel %vm4323, %v4328, %v4329
        %v4331 = vrot.slane %v4228, 6
        %v4332 = vrot.slane %v4331, 4
        %v4333 = vrot.slane %v4229, 6
        %v4334 = vsel %vm4323, %v4332, %v4333
        %v4335 = vrot.slane %v4333, 4
        %v4336 = vrot.slane %v4230, 6
        %v4337 = vsel %vm4323, %v4335, %v4336
        %v4338 = vrot.slane %v4231, 6
        %v4339 = vrot.slane %v4338, 4
        %v4340 = vrot.slane %v4232, 6
        %v4341 = vsel %vm4323, %v4339, %v4340
        %v4342 = vrot.slane %v4340, 4
        %v4343 = vrot.slane %v4233, 6
        %v4344 = vsel %vm4323, %v4342, %v4343
        %v4345 = vrot.slane %v4234, 6
        %v4346 = vrot.slane %v4345, 4
        %v4347 = vrot.slane %v4235, 6
        %v4348 = vsel %vm4323, %v4346, %v4347
        %v4349 = vrot.slane %v4347, 4
        %v4350 = vrot.slane %v4236, 6
        %v4351 = vsel %vm4323, %v4349, %v4350
        %v4352 = vrot.slane %v4237, 6
        %v4353 = vrot.slane %v4352, 4
        %v4354 = vrot.slane %v4238, 6
        %v4355 = vsel %vm4323, %v4353, %v4354
        %v4356 = vrot.slane %v4354, 4
        %v4357 = vrot.slane %v4239, 6
        %v4358 = vsel %vm4323, %v4356, %v4357
        %v4359 = vrot.slane %v4240, 6
        %v4360 = vrot.slane %v4359, 4
        %v4361 = vrot.slane %v4241, 6
        %v4362 = vsel %vm4323, %v4360, %v4361
        %v4363 = vrot.slane %v4361, 4
        %v4364 = vrot.slane %v4242, 6
        %v4365 = vsel %vm4323, %v4363, %v4364
        %v4366 = vrot.slane %v4243, 6
        %v4367 = vrot.slane %v4366, 4
        %v4368 = vrot.slane %v4244, 6
        %v4369 = vsel %vm4323, %v4367, %v4368
        %v4370 = vrot.slane %v4368, 4
        %v4371 = vrot.slane %v4245, 6
        %v4372 = vsel %vm4323, %v4370, %v4371
        %v4373 = vrot.slane %v4246, 6
        %v4374 = vrot.slane %v4373, 4
        %v4375 = vrot.slane %v4247, 6
        %v4376 = vsel %vm4323, %v4374, %v4375
        %v4377 = vrot.slane %v4375, 4
        %v4378 = vrot.slane %v4248, 6
        %v4379 = vsel %vm4323, %v4377, %v4378
        %v4380 = vrot.slane %v4249, 6
        %v4381 = vrot.slane %v4380, 4
        %v4382 = vrot.slane %v4250, 6
        %v4383 = vsel %vm4323, %v4381, %v4382
        %v4384 = vrot.slane %v4382, 4
        %v4385 = vrot.slane %v4251, 6
        %v4386 = vsel %vm4323, %v4384, %v4385
        %v4387 = vrot.slane %v4252, 6
        %v4388 = vrot.slane %v4387, 4
        %v4389 = vrot.slane %v4253, 6
        %v4390 = vsel %vm4323, %v4388, %v4389
        %v4391 = vrot.slane %v4389, 4
        %v4392 = vrot.slane %v4254, 6
        %v4393 = vsel %vm4323, %v4391, %v4392
        %v4394 = vrot.slane %v4255, 6
        %v4395 = vrot.slane %v4394, 4
        %v4396 = vrot.slane %v4256, 6
        %v4397 = vsel %vm4323, %v4395, %v4396
        %v4398 = vrot.slane %v4396, 4
        %v4399 = vrot.slane %v4257, 6
        %v4400 = vsel %vm4323, %v4398, %v4399
        %v4401 = vrot.slane %v4258, 6
        %v4402 = vrot.slane %v4401, 4
        %v4403 = vrot.slane %v4259, 6
        %v4404 = vsel %vm4323, %v4402, %v4403
        %v4405 = vrot.slane %v4403, 4
        %v4406 = vrot.slane %v4260, 6
        %v4407 = vsel %vm4323, %v4405, %v4406
        %v4408 = vrot.slane %v4261, 6
        %v4409 = vrot.slane %v4408, 4
        %v4410 = vrot.slane %v4262, 6
        %v4411 = vsel %vm4323, %v4409, %v4410
        %v4412 = vrot.slane %v4410, 4
        %v4413 = vrot.slane %v4263, 6
        %v4414 = vsel %vm4323, %v4412, %v4413
        %v4415 = vrot.slane %v4264, 6
        %v4416 = vrot.slane %v4415, 4
        %v4417 = vrot.slane %v4265, 6
        %v4418 = vsel %vm4323, %v4416, %v4417
        %v4419 = vrot.slane %v4417, 4
        %v4420 = vrot.slane %v4266, 6
        %v4421 = vsel %vm4323, %v4419, %v4420
        %v4422 = vrot.slane %v4267, 6
        %v4423 = vrot.slane %v4422, 4
        %v4424 = vrot.slane %v4268, 6
        %v4425 = vsel %vm4323, %v4423, %v4424
        %v4426 = vrot.slane %v4424, 4
        %v4427 = vrot.slane %v4269, 6
        %v4428 = vsel %vm4323, %v4426, %v4427
        %v4429 = vrot.slane %v4270, 6
        %v4430 = vrot.slane %v4429, 4
        %v4431 = vrot.slane %v4271, 6
        %v4432 = vsel %vm4323, %v4430, %v4431
        %v4433 = vrot.slane %v4431, 4
        %v4434 = vrot.slane %v4272, 6
        %v4435 = vsel %vm4323, %v4433, %v4434
        %4436 = vrot.lane.b32.xlu0 %v4327, 84
        %v4437 = vpop.permute.xlu0 %4436
        %4438 = vrot.lane.b32.xlu0 %v4330, 84
        %v4439 = vpop.permute.xlu0 %4438
        %4440 = vrot.lane.b32.xlu0 %v4334, 84
        %v4441 = vpop.permute.xlu0 %4440
        %4442 = vrot.lane.b32.xlu0 %v4337, 84
        %v4443 = vpop.permute.xlu0 %4442
        %4444 = vrot.lane.b32.xlu0 %v4341, 84
        %v4445 = vpop.permute.xlu0 %4444
        %4446 = vrot.lane.b32.xlu0 %v4344, 84
        %v4447 = vpop.permute.xlu0 %4446
        %4448 = vrot.lane.b32.xlu0 %v4348, 84
        %v4449 = vpop.permute.xlu0 %4448
        %4450 = vrot.lane.b32.xlu0 %v4351, 84
        %v4451 = vpop.permute.xlu0 %4450
        %4452 = vrot.lane.b32.xlu0 %v4355, 84
        %v4453 = vpop.permute.xlu0 %4452
        %4454 = vrot.lane.b32.xlu0 %v4358, 84
        %v4455 = vpop.permute.xlu0 %4454
        %4456 = vrot.lane.b32.xlu0 %v4362, 84
        %v4457 = vpop.permute.xlu0 %4456
        %4458 = vrot.lane.b32.xlu0 %v4365, 84
        %v4459 = vpop.permute.xlu0 %4458
        %4460 = vrot.lane.b32.xlu0 %v4369, 84
        %v4461 = vpop.permute.xlu0 %4460
        %4462 = vrot.lane.b32.xlu0 %v4372, 84
        %v4463 = vpop.permute.xlu0 %4462
        %4464 = vrot.lane.b32.xlu0 %v4376, 84
        %v4465 = vpop.permute.xlu0 %4464
        %4466 = vrot.lane.b32.xlu0 %v4379, 84
        %v4467 = vpop.permute.xlu0 %4466
        %4468 = vrot.lane.b32.xlu0 %v4383, 84
        %v4469 = vpop.permute.xlu0 %4468
        %4470 = vrot.lane.b32.xlu0 %v4386, 84
        %v4471 = vpop.permute.xlu0 %4470
        %4472 = vrot.lane.b32.xlu0 %v4390, 84
        %v4473 = vpop.permute.xlu0 %4472
        %4474 = vrot.lane.b32.xlu0 %v4393, 84
        %v4475 = vpop.permute.xlu0 %4474
        %4476 = vrot.lane.b32.xlu0 %v4397, 84
        %v4477 = vpop.permute.xlu0 %4476
        %4478 = vrot.lane.b32.xlu0 %v4400, 84
        %v4479 = vpop.permute.xlu0 %4478
        %4480 = vrot.lane.b32.xlu0 %v4404, 84
        %v4481 = vpop.permute.xlu0 %4480
        %4482 = vrot.lane.b32.xlu0 %v4407, 84
        %v4483 = vpop.permute.xlu0 %4482
        %4484 = vrot.lane.b32.xlu0 %v4411, 84
        %v4485 = vpop.permute.xlu0 %4484
        %4486 = vrot.lane.b32.xlu0 %v4414, 84
        %v4487 = vpop.permute.xlu0 %4486
        %4488 = vrot.lane.b32.xlu0 %v4418, 84
        %v4489 = vpop.permute.xlu0 %4488
        %4490 = vrot.lane.b32.xlu0 %v4421, 84
        %v4491 = vpop.permute.xlu0 %4490
        %4492 = vrot.lane.b32.xlu0 %v4425, 84
        %v4493 = vpop.permute.xlu0 %4492
        %4494 = vrot.lane.b32.xlu0 %v4428, 84
        %v4495 = vpop.permute.xlu0 %4494
        %4496 = vrot.lane.b32.xlu0 %v4432, 84
        %v4497 = vpop.permute.xlu0 %4496
        %4498 = vrot.lane.b32.xlu0 %v4435, 84
        %v4499 = vpop.permute.xlu0 %4498
        %vm4532 = vcmask 855712
        %4533 = vst.msk [vmem:[#allocation4] sm:$0xf] %vm4532, %v4437
        %4534 = vst.msk [vmem:[#allocation4 + $0x8] sm:$0xf] %vm4532, %v4439
        %4535 = vst.msk [vmem:[#allocation4 + $0x10] sm:$0xf] %vm4532, %v4441
        %4536 = vst.msk [vmem:[#allocation4 + $0x18] sm:$0xf] %vm4532, %v4443
        %4537 = vst.msk [vmem:[#allocation4 + $0x20] sm:$0xf] %vm4532, %v4445
        %4538 = vst.msk [vmem:[#allocation4 + $0x28] sm:$0xf] %vm4532, %v4447
        %4539 = vst.msk [vmem:[#allocation4 + $0x30] sm:$0xf] %vm4532, %v4449
        %4540 = vst.msk [vmem:[#allocation4 + $0x38] sm:$0xf] %vm4532, %v4451
        %4541 = vst.msk [vmem:[#allocation4 + $0x40] sm:$0xf] %vm4532, %v4453
        %4542 = vst.msk [vmem:[#allocation4 + $0x48] sm:$0xf] %vm4532, %v4455
        %4543 = vst.msk [vmem:[#allocation4 + $0x50] sm:$0xf] %vm4532, %v4457
        %4544 = vst.msk [vmem:[#allocation4 + $0x58] sm:$0xf] %vm4532, %v4459
        %4545 = vst.msk [vmem:[#allocation4 + $0x60] sm:$0xf] %vm4532, %v4461
        %4546 = vst.msk [vmem:[#allocation4 + $0x68] sm:$0xf] %vm4532, %v4463
        %4547 = vst.msk [vmem:[#allocation4 + $0x70] sm:$0xf] %vm4532, %v4465
        %4548 = vst.msk [vmem:[#allocation4 + $0x78] sm:$0xf] %vm4532, %v4467
        %4549 = vst.msk [vmem:[#allocation4 + $0x80] sm:$0xf] %vm4532, %v4469
        %4550 = vst.msk [vmem:[#allocation4 + $0x88] sm:$0xf] %vm4532, %v4471
        %4551 = vst.msk [vmem:[#allocation4 + $0x90] sm:$0xf] %vm4532, %v4473
        %4552 = vst.msk [vmem:[#allocation4 + $0x98] sm:$0xf] %vm4532, %v4475
        %4553 = vst.msk [vmem:[#allocation4 + $0xa0] sm:$0xf] %vm4532, %v4477
        %4554 = vst.msk [vmem:[#allocation4 + $0xa8] sm:$0xf] %vm4532, %v4479
        %4555 = vst.msk [vmem:[#allocation4 + $0xb0] sm:$0xf] %vm4532, %v4481
        %4556 = vst.msk [vmem:[#allocation4 + $0xb8] sm:$0xf] %vm4532, %v4483
        %4557 = vst.msk [vmem:[#allocation4 + $0xc0] sm:$0xf] %vm4532, %v4485
        %4558 = vst.msk [vmem:[#allocation4 + $0xc8] sm:$0xf] %vm4532, %v4487
        %4559 = vst.msk [vmem:[#allocation4 + $0xd0] sm:$0xf] %vm4532, %v4489
        %4560 = vst.msk [vmem:[#allocation4 + $0xd8] sm:$0xf] %vm4532, %v4491
        %4561 = vst.msk [vmem:[#allocation4 + $0xe0] sm:$0xf] %vm4532, %v4493
        %4562 = vst.msk [vmem:[#allocation4 + $0xe8] sm:$0xf] %vm4532, %v4495
        %4563 = vst.msk [vmem:[#allocation4 + $0xf0] sm:$0xf] %vm4532, %v4497
        %4564 = vst.msk [vmem:[#allocation4 + $0xf8] sm:$0xf] %vm4532, %v4499
        %v4565 = vld [vmem:[#allocation3] sm:$0xc]
        %v4566 = vld [vmem:[#allocation3 + $0x4] sm:$0xf]
        %v4567 = vld [vmem:[#allocation3 + $0x8] sm:$0x7]
        %v4568 = vld [vmem:[#allocation3 + $0xc] sm:$0xc]
        %v4569 = vld [vmem:[#allocation3 + $0x10] sm:$0xf]
        %v4570 = vld [vmem:[#allocation3 + $0x14] sm:$0x7]
        %v4571 = vld [vmem:[#allocation3 + $0x18] sm:$0xc]
        %v4572 = vld [vmem:[#allocation3 + $0x1c] sm:$0xf]
        %v4573 = vld [vmem:[#allocation3 + $0x20] sm:$0x7]
        %v4574 = vld [vmem:[#allocation3 + $0x24] sm:$0xc]
        %v4575 = vld [vmem:[#allocation3 + $0x28] sm:$0xf]
        %v4576 = vld [vmem:[#allocation3 + $0x2c] sm:$0x7]
        %v4577 = vld [vmem:[#allocation3 + $0x30] sm:$0xc]
        %v4578 = vld [vmem:[#allocation3 + $0x34] sm:$0xf]
        %v4579 = vld [vmem:[#allocation3 + $0x38] sm:$0x7]
        %v4580 = vld [vmem:[#allocation3 + $0x3c] sm:$0xc]
        %v4581 = vld [vmem:[#allocation3 + $0x40] sm:$0xf]
        %v4582 = vld [vmem:[#allocation3 + $0x44] sm:$0x7]
        %v4583 = vld [vmem:[#allocation3 + $0x48] sm:$0xc]
        %v4584 = vld [vmem:[#allocation3 + $0x4c] sm:$0xf]
        %v4585 = vld [vmem:[#allocation3 + $0x50] sm:$0x7]
        %v4586 = vld [vmem:[#allocation3 + $0x54] sm:$0xc]
        %v4587 = vld [vmem:[#allocation3 + $0x58] sm:$0xf]
        %v4588 = vld [vmem:[#allocation3 + $0x5c] sm:$0x7]
        %v4589 = vld [vmem:[#allocation3 + $0x60] sm:$0xc]
        %v4590 = vld [vmem:[#allocation3 + $0x64] sm:$0xf]
        %v4591 = vld [vmem:[#allocation3 + $0x68] sm:$0x7]
        %v4592 = vld [vmem:[#allocation3 + $0x6c] sm:$0xc]
        %v4593 = vld [vmem:[#allocation3 + $0x70] sm:$0xf]
        %v4594 = vld [vmem:[#allocation3 + $0x74] sm:$0x7]
        %v4595 = vld [vmem:[#allocation3 + $0x78] sm:$0xc]
        %v4596 = vld [vmem:[#allocation3 + $0x7c] sm:$0xf]
        %v4597 = vld [vmem:[#allocation3 + $0x80] sm:$0x7]
        %v4598 = vld [vmem:[#allocation3 + $0x84] sm:$0xc]
        %v4599 = vld [vmem:[#allocation3 + $0x88] sm:$0xf]
        %v4600 = vld [vmem:[#allocation3 + $0x8c] sm:$0x7]
        %v4601 = vld [vmem:[#allocation3 + $0x90] sm:$0xc]
        %v4602 = vld [vmem:[#allocation3 + $0x94] sm:$0xf]
        %v4603 = vld [vmem:[#allocation3 + $0x98] sm:$0x7]
        %v4604 = vld [vmem:[#allocation3 + $0x9c] sm:$0xc]
        %v4605 = vld [vmem:[#allocation3 + $0xa0] sm:$0xf]
        %v4606 = vld [vmem:[#allocation3 + $0xa4] sm:$0x7]
        %v4607 = vld [vmem:[#allocation3 + $0xa8] sm:$0xc]
        %v4608 = vld [vmem:[#allocation3 + $0xac] sm:$0xf]
        %v4609 = vld [vmem:[#allocation3 + $0xb0] sm:$0x7]
        %v4610 = vld [vmem:[#allocation3 + $0xb4] sm:$0xc]
        %v4611 = vld [vmem:[#allocation3 + $0xb8] sm:$0xf]
        %v4612 = vld [vmem:[#allocation3 + $0xbc] sm:$0x7]
        %vm4613 = vsmask.f32 1280
        %vm4614 = vsmask.f32 5392
        %vm4615 = vmor %vm4613, %vm4614
        %v4617 = vshrl.u32 %v4565, 16
        %v4619 = vrot.slane %v4617, 6
        %v4620 = vshll.u32 %v4565, 16
        %v4622 = vrot.slane %v4620, 7
        %v4623 = vor.u32 %v4619, %v4622
        %v4624 = vrot.slane %v4623, 4
        %v4626 = vshrl.u32 %v4566, 16
        %v4628 = vrot.slane %v4626, 6
        %v4629 = vshll.u32 %v4566, 16
        %v4631 = vrot.slane %v4629, 7
        %v4632 = vor.u32 %v4628, %v4631
        %v4633 = vsel %vm4615, %v4624, %v4632
        %v4634 = vrot.slane %v4632, 4
        %v4636 = vshrl.u32 %v4567, 16
        %v4638 = vrot.slane %v4636, 6
        %v4639 = vshll.u32 %v4567, 16
        %v4641 = vrot.slane %v4639, 7
        %v4642 = vor.u32 %v4638, %v4641
        %v4643 = vsel %vm4615, %v4634, %v4642
        %v4645 = vshrl.u32 %v4568, 16
        %v4647 = vrot.slane %v4645, 6
        %v4648 = vshll.u32 %v4568, 16
        %v4650 = vrot.slane %v4648, 7
        %v4651 = vor.u32 %v4647, %v4650
        %v4652 = vrot.slane %v4651, 4
        %v4654 = vshrl.u32 %v4569, 16
        %v4656 = vrot.slane %v4654, 6
        %v4657 = vshll.u32 %v4569, 16
        %v4659 = vrot.slane %v4657, 7
        %v4660 = vor.u32 %v4656, %v4659
        %v4661 = vsel %vm4615, %v4652, %v4660
        %v4662 = vrot.slane %v4660, 4
        %v4664 = vshrl.u32 %v4570, 16
        %v4666 = vrot.slane %v4664, 6
        %v4667 = vshll.u32 %v4570, 16
        %v4669 = vrot.slane %v4667, 7
        %v4670 = vor.u32 %v4666, %v4669
        %v4671 = vsel %vm4615, %v4662, %v4670
        %v4673 = vshrl.u32 %v4571, 16
        %v4675 = vrot.slane %v4673, 6
        %v4676 = vshll.u32 %v4571, 16
        %v4678 = vrot.slane %v4676, 7
        %v4679 = vor.u32 %v4675, %v4678
        %v4680 = vrot.slane %v4679, 4
        %v4682 = vshrl.u32 %v4572, 16
        %v4684 = vrot.slane %v4682, 6
        %v4685 = vshll.u32 %v4572, 16
        %v4687 = vrot.slane %v4685, 7
        %v4688 = vor.u32 %v4684, %v4687
        %v4689 = vsel %vm4615, %v4680, %v4688
        %v4690 = vrot.slane %v4688, 4
        %v4692 = vshrl.u32 %v4573, 16
        %v4694 = vrot.slane %v4692, 6
        %v4695 = vshll.u32 %v4573, 16
        %v4697 = vrot.slane %v4695, 7
        %v4698 = vor.u32 %v4694, %v4697
        %v4699 = vsel %vm4615, %v4690, %v4698
        %v4701 = vshrl.u32 %v4574, 16
        %v4703 = vrot.slane %v4701, 6
        %v4704 = vshll.u32 %v4574, 16
        %v4706 = vrot.slane %v4704, 7
        %v4707 = vor.u32 %v4703, %v4706
        %v4708 = vrot.slane %v4707, 4
        %v4710 = vshrl.u32 %v4575, 16
        %v4712 = vrot.slane %v4710, 6
        %v4713 = vshll.u32 %v4575, 16
        %v4715 = vrot.slane %v4713, 7
        %v4716 = vor.u32 %v4712, %v4715
        %v4717 = vsel %vm4615, %v4708, %v4716
        %v4718 = vrot.slane %v4716, 4
        %v4720 = vshrl.u32 %v4576, 16
        %v4722 = vrot.slane %v4720, 6
        %v4723 = vshll.u32 %v4576, 16
        %v4725 = vrot.slane %v4723, 7
        %v4726 = vor.u32 %v4722, %v4725
        %v4727 = vsel %vm4615, %v4718, %v4726
        %v4729 = vshrl.u32 %v4577, 16
        %v4731 = vrot.slane %v4729, 6
        %v4732 = vshll.u32 %v4577, 16
        %v4734 = vrot.slane %v4732, 7
        %v4735 = vor.u32 %v4731, %v4734
        %v4736 = vrot.slane %v4735, 4
        %v4738 = vshrl.u32 %v4578, 16
        %v4740 = vrot.slane %v4738, 6
        %v4741 = vshll.u32 %v4578, 16
        %v4743 = vrot.slane %v4741, 7
        %v4744 = vor.u32 %v4740, %v4743
        %v4745 = vsel %vm4615, %v4736, %v4744
        %v4746 = vrot.slane %v4744, 4
        %v4748 = vshrl.u32 %v4579, 16
        %v4750 = vrot.slane %v4748, 6
        %v4751 = vshll.u32 %v4579, 16
        %v4753 = vrot.slane %v4751, 7
        %v4754 = vor.u32 %v4750, %v4753
        %v4755 = vsel %vm4615, %v4746, %v4754
        %v4757 = vshrl.u32 %v4580, 16
        %v4759 = vrot.slane %v4757, 6
        %v4760 = vshll.u32 %v4580, 16
        %v4762 = vrot.slane %v4760, 7
        %v4763 = vor.u32 %v4759, %v4762
        %v4764 = vrot.slane %v4763, 4
        %v4766 = vshrl.u32 %v4581, 16
        %v4768 = vrot.slane %v4766, 6
        %v4769 = vshll.u32 %v4581, 16
        %v4771 = vrot.slane %v4769, 7
        %v4772 = vor.u32 %v4768, %v4771
        %v4773 = vsel %vm4615, %v4764, %v4772
        %v4774 = vrot.slane %v4772, 4
        %v4776 = vshrl.u32 %v4582, 16
        %v4778 = vrot.slane %v4776, 6
        %v4779 = vshll.u32 %v4582, 16
        %v4781 = vrot.slane %v4779, 7
        %v4782 = vor.u32 %v4778, %v4781
        %v4783 = vsel %vm4615, %v4774, %v4782
        %v4785 = vshrl.u32 %v4583, 16
        %v4787 = vrot.slane %v4785, 6
        %v4788 = vshll.u32 %v4583, 16
        %v4790 = vrot.slane %v4788, 7
        %v4791 = vor.u32 %v4787, %v4790
        %v4792 = vrot.slane %v4791, 4
        %v4794 = vshrl.u32 %v4584, 16
        %v4796 = vrot.slane %v4794, 6
        %v4797 = vshll.u32 %v4584, 16
        %v4799 = vrot.slane %v4797, 7
        %v4800 = vor.u32 %v4796, %v4799
        %v4801 = vsel %vm4615, %v4792, %v4800
        %v4802 = vrot.slane %v4800, 4
        %v4804 = vshrl.u32 %v4585, 16
        %v4806 = vrot.slane %v4804, 6
        %v4807 = vshll.u32 %v4585, 16
        %v4809 = vrot.slane %v4807, 7
        %v4810 = vor.u32 %v4806, %v4809
        %v4811 = vsel %vm4615, %v4802, %v4810
        %v4813 = vshrl.u32 %v4586, 16
        %v4815 = vrot.slane %v4813, 6
        %v4816 = vshll.u32 %v4586, 16
        %v4818 = vrot.slane %v4816, 7
        %v4819 = vor.u32 %v4815, %v4818
        %v4820 = vrot.slane %v4819, 4
        %v4822 = vshrl.u32 %v4587, 16
        %v4824 = vrot.slane %v4822, 6
        %v4825 = vshll.u32 %v4587, 16
        %v4827 = vrot.slane %v4825, 7
        %v4828 = vor.u32 %v4824, %v4827
        %v4829 = vsel %vm4615, %v4820, %v4828
        %v4830 = vrot.slane %v4828, 4
        %v4832 = vshrl.u32 %v4588, 16
        %v4834 = vrot.slane %v4832, 6
        %v4835 = vshll.u32 %v4588, 16
        %v4837 = vrot.slane %v4835, 7
        %v4838 = vor.u32 %v4834, %v4837
        %v4839 = vsel %vm4615, %v4830, %v4838
        %v4841 = vshrl.u32 %v4589, 16
        %v4843 = vrot.slane %v4841, 6
        %v4844 = vshll.u32 %v4589, 16
        %v4846 = vrot.slane %v4844, 7
        %v4847 = vor.u32 %v4843, %v4846
        %v4848 = vrot.slane %v4847, 4
        %v4850 = vshrl.u32 %v4590, 16
        %v4852 = vrot.slane %v4850, 6
        %v4853 = vshll.u32 %v4590, 16
        %v4855 = vrot.slane %v4853, 7
        %v4856 = vor.u32 %v4852, %v4855
        %v4857 = vsel %vm4615, %v4848, %v4856
        %v4858 = vrot.slane %v4856, 4
        %v4860 = vshrl.u32 %v4591, 16
        %v4862 = vrot.slane %v4860, 6
        %v4863 = vshll.u32 %v4591, 16
        %v4865 = vrot.slane %v4863, 7
        %v4866 = vor.u32 %v4862, %v4865
        %v4867 = vsel %vm4615, %v4858, %v4866
        %v4869 = vshrl.u32 %v4592, 16
        %v4871 = vrot.slane %v4869, 6
        %v4872 = vshll.u32 %v4592, 16
        %v4874 = vrot.slane %v4872, 7
        %v4875 = vor.u32 %v4871, %v4874
        %v4876 = vrot.slane %v4875, 4
        %v4878 = vshrl.u32 %v4593, 16
        %v4880 = vrot.slane %v4878, 6
        %v4881 = vshll.u32 %v4593, 16
        %v4883 = vrot.slane %v4881, 7
        %v4884 = vor.u32 %v4880, %v4883
        %v4885 = vsel %vm4615, %v4876, %v4884
        %v4886 = vrot.slane %v4884, 4
        %v4888 = vshrl.u32 %v4594, 16
        %v4890 = vrot.slane %v4888, 6
        %v4891 = vshll.u32 %v4594, 16
        %v4893 = vrot.slane %v4891, 7
        %v4894 = vor.u32 %v4890, %v4893
        %v4895 = vsel %vm4615, %v4886, %v4894
        %v4897 = vshrl.u32 %v4595, 16
        %v4899 = vrot.slane %v4897, 6
        %v4900 = vshll.u32 %v4595, 16
        %v4902 = vrot.slane %v4900, 7
        %v4903 = vor.u32 %v4899, %v4902
        %v4904 = vrot.slane %v4903, 4
        %v4906 = vshrl.u32 %v4596, 16
        %v4908 = vrot.slane %v4906, 6
        %v4909 = vshll.u32 %v4596, 16
        %v4911 = vrot.slane %v4909, 7
        %v4912 = vor.u32 %v4908, %v4911
        %v4913 = vsel %vm4615, %v4904, %v4912
        %v4914 = vrot.slane %v4912, 4
        %v4916 = vshrl.u32 %v4597, 16
        %v4918 = vrot.slane %v4916, 6
        %v4919 = vshll.u32 %v4597, 16
        %v4921 = vrot.slane %v4919, 7
        %v4922 = vor.u32 %v4918, %v4921
        %v4923 = vsel %vm4615, %v4914, %v4922
        %v4925 = vshrl.u32 %v4598, 16
        %v4927 = vrot.slane %v4925, 6
        %v4928 = vshll.u32 %v4598, 16
        %v4930 = vrot.slane %v4928, 7
        %v4931 = vor.u32 %v4927, %v4930
        %v4932 = vrot.slane %v4931, 4
        %v4934 = vshrl.u32 %v4599, 16
        %v4936 = vrot.slane %v4934, 6
        %v4937 = vshll.u32 %v4599, 16
        %v4939 = vrot.slane %v4937, 7
        %v4940 = vor.u32 %v4936, %v4939
        %v4941 = vsel %vm4615, %v4932, %v4940
        %v4942 = vrot.slane %v4940, 4
        %v4944 = vshrl.u32 %v4600, 16
        %v4946 = vrot.slane %v4944, 6
        %v4947 = vshll.u32 %v4600, 16
        %v4949 = vrot.slane %v4947, 7
        %v4950 = vor.u32 %v4946, %v4949
        %v4951 = vsel %vm4615, %v4942, %v4950
        %v4953 = vshrl.u32 %v4601, 16
        %v4955 = vrot.slane %v4953, 6
        %v4956 = vshll.u32 %v4601, 16
        %v4958 = vrot.slane %v4956, 7
        %v4959 = vor.u32 %v4955, %v4958
        %v4960 = vrot.slane %v4959, 4
        %v4962 = vshrl.u32 %v4602, 16
        %v4964 = vrot.slane %v4962, 6
        %v4965 = vshll.u32 %v4602, 16
        %v4967 = vrot.slane %v4965, 7
        %v4968 = vor.u32 %v4964, %v4967
        %v4969 = vsel %vm4615, %v4960, %v4968
        %v4970 = vrot.slane %v4968, 4
        %v4972 = vshrl.u32 %v4603, 16
        %v4974 = vrot.slane %v4972, 6
        %v4975 = vshll.u32 %v4603, 16
        %v4977 = vrot.slane %v4975, 7
        %v4978 = vor.u32 %v4974, %v4977
        %v4979 = vsel %vm4615, %v4970, %v4978
        %v4981 = vshrl.u32 %v4604, 16
        %v4983 = vrot.slane %v4981, 6
        %v4984 = vshll.u32 %v4604, 16
        %v4986 = vrot.slane %v4984, 7
        %v4987 = vor.u32 %v4983, %v4986
        %v4988 = vrot.slane %v4987, 4
        %v4990 = vshrl.u32 %v4605, 16
        %v4992 = vrot.slane %v4990, 6
        %v4993 = vshll.u32 %v4605, 16
        %v4995 = vrot.slane %v4993, 7
        %v4996 = vor.u32 %v4992, %v4995
        %v4997 = vsel %vm4615, %v4988, %v4996
        %v4998 = vrot.slane %v4996, 4
        %v5000 = vshrl.u32 %v4606, 16
        %v5002 = vrot.slane %v5000, 6
        %v5003 = vshll.u32 %v4606, 16
        %v5005 = vrot.slane %v5003, 7
        %v5006 = vor.u32 %v5002, %v5005
        %v5007 = vsel %vm4615, %v4998, %v5006
        %v5009 = vshrl.u32 %v4607, 16
        %v5011 = vrot.slane %v5009, 6
        %v5012 = vshll.u32 %v4607, 16
        %v5014 = vrot.slane %v5012, 7
        %v5015 = vor.u32 %v5011, %v5014
        %v5016 = vrot.slane %v5015, 4
        %v5018 = vshrl.u32 %v4608, 16
        %v5020 = vrot.slane %v5018, 6
        %v5021 = vshll.u32 %v4608, 16
        %v5023 = vrot.slane %v5021, 7
        %v5024 = vor.u32 %v5020, %v5023
        %v5025 = vsel %vm4615, %v5016, %v5024
        %v5026 = vrot.slane %v5024, 4
        %v5028 = vshrl.u32 %v4609, 16
        %v5030 = vrot.slane %v5028, 6
        %v5031 = vshll.u32 %v4609, 16
        %v5033 = vrot.slane %v5031, 7
        %v5034 = vor.u32 %v5030, %v5033
        %v5035 = vsel %vm4615, %v5026, %v5034
        %v5037 = vshrl.u32 %v4610, 16
        %v5039 = vrot.slane %v5037, 6
        %v5040 = vshll.u32 %v4610, 16
        %v5042 = vrot.slane %v5040, 7
        %v5043 = vor.u32 %v5039, %v5042
        %v5044 = vrot.slane %v5043, 4
        %v5046 = vshrl.u32 %v4611, 16
        %v5048 = vrot.slane %v5046, 6
        %v5049 = vshll.u32 %v4611, 16
        %v5051 = vrot.slane %v5049, 7
        %v5052 = vor.u32 %v5048, %v5051
        %v5053 = vsel %vm4615, %v5044, %v5052
        %v5054 = vrot.slane %v5052, 4
        %v5056 = vshrl.u32 %v4612, 16
        %v5058 = vrot.slane %v5056, 6
        %v5059 = vshll.u32 %v4612, 16
        %v5061 = vrot.slane %v5059, 7
        %v5062 = vor.u32 %v5058, %v5061
        %v5063 = vsel %vm4615, %v5054, %v5062
        %5064 = vrot.lane.b32.xlu0 %v4633, 105
        %v5065 = vpop.permute.xlu0 %5064
        %5066 = vrot.lane.b32.xlu0 %v4643, 105
        %v5067 = vpop.permute.xlu0 %5066
        %5068 = vrot.lane.b32.xlu0 %v4661, 105
        %v5069 = vpop.permute.xlu0 %5068
        %5070 = vrot.lane.b32.xlu0 %v4671, 105
        %v5071 = vpop.permute.xlu0 %5070
        %5072 = vrot.lane.b32.xlu0 %v4689, 105
        %v5073 = vpop.permute.xlu0 %5072
        %5074 = vrot.lane.b32.xlu0 %v4699, 105
        %v5075 = vpop.permute.xlu0 %5074
        %5076 = vrot.lane.b32.xlu0 %v4717, 105
        %v5077 = vpop.permute.xlu0 %5076
        %5078 = vrot.lane.b32.xlu0 %v4727, 105
        %v5079 = vpop.permute.xlu0 %5078
        %5080 = vrot.lane.b32.xlu0 %v4745, 105
        %v5081 = vpop.permute.xlu0 %5080
        %5082 = vrot.lane.b32.xlu0 %v4755, 105
        %v5083 = vpop.permute.xlu0 %5082
        %5084 = vrot.lane.b32.xlu0 %v4773, 105
        %v5085 = vpop.permute.xlu0 %5084
        %5086 = vrot.lane.b32.xlu0 %v4783, 105
        %v5087 = vpop.permute.xlu0 %5086
        %5088 = vrot.lane.b32.xlu0 %v4801, 105
        %v5089 = vpop.permute.xlu0 %5088
        %5090 = vrot.lane.b32.xlu0 %v4811, 105
        %v5091 = vpop.permute.xlu0 %5090
        %5092 = vrot.lane.b32.xlu0 %v4829, 105
        %v5093 = vpop.permute.xlu0 %5092
        %5094 = vrot.lane.b32.xlu0 %v4839, 105
        %v5095 = vpop.permute.xlu0 %5094
        %5096 = vrot.lane.b32.xlu0 %v4857, 105
        %v5097 = vpop.permute.xlu0 %5096
        %5098 = vrot.lane.b32.xlu0 %v4867, 105
        %v5099 = vpop.permute.xlu0 %5098
        %5100 = vrot.lane.b32.xlu0 %v4885, 105
        %v5101 = vpop.permute.xlu0 %5100
        %5102 = vrot.lane.b32.xlu0 %v4895, 105
        %v5103 = vpop.permute.xlu0 %5102
        %5104 = vrot.lane.b32.xlu0 %v4913, 105
        %v5105 = vpop.permute.xlu0 %5104
        %5106 = vrot.lane.b32.xlu0 %v4923, 105
        %v5107 = vpop.permute.xlu0 %5106
        %5108 = vrot.lane.b32.xlu0 %v4941, 105
        %v5109 = vpop.permute.xlu0 %5108
        %5110 = vrot.lane.b32.xlu0 %v4951, 105
        %v5111 = vpop.permute.xlu0 %5110
        %5112 = vrot.lane.b32.xlu0 %v4969, 105
        %v5113 = vpop.permute.xlu0 %5112
        %5114 = vrot.lane.b32.xlu0 %v4979, 105
        %v5115 = vpop.permute.xlu0 %5114
        %5116 = vrot.lane.b32.xlu0 %v4997, 105
        %v5117 = vpop.permute.xlu0 %5116
        %5118 = vrot.lane.b32.xlu0 %v5007, 105
        %v5119 = vpop.permute.xlu0 %5118
        %5120 = vrot.lane.b32.xlu0 %v5025, 105
        %v5121 = vpop.permute.xlu0 %5120
        %5122 = vrot.lane.b32.xlu0 %v5035, 105
        %v5123 = vpop.permute.xlu0 %5122
        %5124 = vrot.lane.b32.xlu0 %v5053, 105
        %v5125 = vpop.permute.xlu0 %5124
        %5126 = vrot.lane.b32.xlu0 %v5063, 105
        %v5127 = vpop.permute.xlu0 %5126
        %vm5160 = vcmask 1027912
        %5161 = vst.msk [vmem:[#allocation4] sm:$0xf] %vm5160, %v5065
        %5162 = vst.msk [vmem:[#allocation4 + $0x8] sm:$0xf] %vm5160, %v5067
        %5163 = vst.msk [vmem:[#allocation4 + $0x10] sm:$0xf] %vm5160, %v5069
        %5164 = vst.msk [vmem:[#allocation4 + $0x18] sm:$0xf] %vm5160, %v5071
        %5165 = vst.msk [vmem:[#allocation4 + $0x20] sm:$0xf] %vm5160, %v5073
        %5166 = vst.msk [vmem:[#allocation4 + $0x28] sm:$0xf] %vm5160, %v5075
        %5167 = vst.msk [vmem:[#allocation4 + $0x30] sm:$0xf] %vm5160, %v5077
        %5168 = vst.msk [vmem:[#allocation4 + $0x38] sm:$0xf] %vm5160, %v5079
        %5169 = vst.msk [vmem:[#allocation4 + $0x40] sm:$0xf] %vm5160, %v5081
        %5170 = vst.msk [vmem:[#allocation4 + $0x48] sm:$0xf] %vm5160, %v5083
        %5171 = vst.msk [vmem:[#allocation4 + $0x50] sm:$0xf] %vm5160, %v5085
        %5172 = vst.msk [vmem:[#allocation4 + $0x58] sm:$0xf] %vm5160, %v5087
        %5173 = vst.msk [vmem:[#allocation4 + $0x60] sm:$0xf] %vm5160, %v5089
        %5174 = vst.msk [vmem:[#allocation4 + $0x68] sm:$0xf] %vm5160, %v5091
        %5175 = vst.msk [vmem:[#allocation4 + $0x70] sm:$0xf] %vm5160, %v5093
        %5176 = vst.msk [vmem:[#allocation4 + $0x78] sm:$0xf] %vm5160, %v5095
        %5177 = vst.msk [vmem:[#allocation4 + $0x80] sm:$0xf] %vm5160, %v5097
        %5178 = vst.msk [vmem:[#allocation4 + $0x88] sm:$0xf] %vm5160, %v5099
        %5179 = vst.msk [vmem:[#allocation4 + $0x90] sm:$0xf] %vm5160, %v5101
        %5180 = vst.msk [vmem:[#allocation4 + $0x98] sm:$0xf] %vm5160, %v5103
        %5181 = vst.msk [vmem:[#allocation4 + $0xa0] sm:$0xf] %vm5160, %v5105
        %5182 = vst.msk [vmem:[#allocation4 + $0xa8] sm:$0xf] %vm5160, %v5107
        %5183 = vst.msk [vmem:[#allocation4 + $0xb0] sm:$0xf] %vm5160, %v5109
        %5184 = vst.msk [vmem:[#allocation4 + $0xb8] sm:$0xf] %vm5160, %v5111
        %5185 = vst.msk [vmem:[#allocation4 + $0xc0] sm:$0xf] %vm5160, %v5113
        %5186 = vst.msk [vmem:[#allocation4 + $0xc8] sm:$0xf] %vm5160, %v5115
        %5187 = vst.msk [vmem:[#allocation4 + $0xd0] sm:$0xf] %vm5160, %v5117
        %5188 = vst.msk [vmem:[#allocation4 + $0xd8] sm:$0xf] %vm5160, %v5119
        %5189 = vst.msk [vmem:[#allocation4 + $0xe0] sm:$0xf] %vm5160, %v5121
        %5190 = vst.msk [vmem:[#allocation4 + $0xe8] sm:$0xf] %vm5160, %v5123
        %5191 = vst.msk [vmem:[#allocation4 + $0xf0] sm:$0xf] %vm5160, %v5125
        %5192 = vst.msk [vmem:[#allocation4 + $0xf8] sm:$0xf] %vm5160, %v5127
        %v5193 = vld [vmem:[#allocation3] sm:$0x8]
        %v5194 = vld [vmem:[#allocation3 + $0x4] sm:$0xf]
        %v5195 = vld [vmem:[#allocation3 + $0x8] sm:$0x7]
        %v5196 = vld [vmem:[#allocation3 + $0xc] sm:$0x8]
        %v5197 = vld [vmem:[#allocation3 + $0x10] sm:$0xf]
        %v5198 = vld [vmem:[#allocation3 + $0x14] sm:$0x7]
        %v5199 = vld [vmem:[#allocation3 + $0x18] sm:$0x8]
        %v5200 = vld [vmem:[#allocation3 + $0x1c] sm:$0xf]
        %v5201 = vld [vmem:[#allocation3 + $0x20] sm:$0x7]
        %v5202 = vld [vmem:[#allocation3 + $0x24] sm:$0x8]
        %v5203 = vld [vmem:[#allocation3 + $0x28] sm:$0xf]
        %v5204 = vld [vmem:[#allocation3 + $0x2c] sm:$0x7]
        %v5205 = vld [vmem:[#allocation3 + $0x30] sm:$0x8]
        %v5206 = vld [vmem:[#allocation3 + $0x34] sm:$0xf]
        %v5207 = vld [vmem:[#allocation3 + $0x38] sm:$0x7]
        %v5208 = vld [vmem:[#allocation3 + $0x3c] sm:$0x8]
        %v5209 = vld [vmem:[#allocation3 + $0x40] sm:$0xf]
        %v5210 = vld [vmem:[#allocation3 + $0x44] sm:$0x7]
        %v5211 = vld [vmem:[#allocation3 + $0x48] sm:$0x8]
        %v5212 = vld [vmem:[#allocation3 + $0x4c] sm:$0xf]
        %v5213 = vld [vmem:[#allocation3 + $0x50] sm:$0x7]
        %v5214 = vld [vmem:[#allocation3 + $0x54] sm:$0x8]
        %v5215 = vld [vmem:[#allocation3 + $0x58] sm:$0xf]
        %v5216 = vld [vmem:[#allocation3 + $0x5c] sm:$0x7]
        %v5217 = vld [vmem:[#allocation3 + $0x60] sm:$0x8]
        %v5218 = vld [vmem:[#allocation3 + $0x64] sm:$0xf]
        %v5219 = vld [vmem:[#allocation3 + $0x68] sm:$0x7]
        %v5220 = vld [vmem:[#allocation3 + $0x6c] sm:$0x8]
        %v5221 = vld [vmem:[#allocation3 + $0x70] sm:$0xf]
        %v5222 = vld [vmem:[#allocation3 + $0x74] sm:$0x7]
        %v5223 = vld [vmem:[#allocation3 + $0x78] sm:$0x8]
        %v5224 = vld [vmem:[#allocation3 + $0x7c] sm:$0xf]
        %v5225 = vld [vmem:[#allocation3 + $0x80] sm:$0x7]
        %v5226 = vld [vmem:[#allocation3 + $0x84] sm:$0x8]
        %v5227 = vld [vmem:[#allocation3 + $0x88] sm:$0xf]
        %v5228 = vld [vmem:[#allocation3 + $0x8c] sm:$0x7]
        %v5229 = vld [vmem:[#allocation3 + $0x90] sm:$0x8]
        %v5230 = vld [vmem:[#allocation3 + $0x94] sm:$0xf]
        %v5231 = vld [vmem:[#allocation3 + $0x98] sm:$0x7]
        %v5232 = vld [vmem:[#allocation3 + $0x9c] sm:$0x8]
        %v5233 = vld [vmem:[#allocation3 + $0xa0] sm:$0xf]
        %v5234 = vld [vmem:[#allocation3 + $0xa4] sm:$0x7]
        %v5235 = vld [vmem:[#allocation3 + $0xa8] sm:$0x8]
        %v5236 = vld [vmem:[#allocation3 + $0xac] sm:$0xf]
        %v5237 = vld [vmem:[#allocation3 + $0xb0] sm:$0x7]
        %v5238 = vld [vmem:[#allocation3 + $0xb4] sm:$0x8]
        %v5239 = vld [vmem:[#allocation3 + $0xb8] sm:$0xf]
        %v5240 = vld [vmem:[#allocation3 + $0xbc] sm:$0x7]
        %vm5289 = vcmask 1040384
        %vm5290 = vcmask 1044484
        %vm5291 = vmor %vm5289, %vm5290
        %v5292 = vrot.slane %v5193, 7
        %v5293 = vrot.slane %v5292, 4
        %v5294 = vrot.slane %v5194, 7
        %v5295 = vsel %vm5291, %v5293, %v5294
        %v5296 = vrot.slane %v5294, 4
        %v5297 = vrot.slane %v5195, 7
        %v5298 = vsel %vm5291, %v5296, %v5297
        %v5299 = vrot.slane %v5196, 7
        %v5300 = vrot.slane %v5299, 4
        %v5301 = vrot.slane %v5197, 7
        %v5302 = vsel %vm5291, %v5300, %v5301
        %v5303 = vrot.slane %v5301, 4
        %v5304 = vrot.slane %v5198, 7
        %v5305 = vsel %vm5291, %v5303, %v5304
        %v5306 = vrot.slane %v5199, 7
        %v5307 = vrot.slane %v5306, 4
        %v5308 = vrot.slane %v5200, 7
        %v5309 = vsel %vm5291, %v5307, %v5308
        %v5310 = vrot.slane %v5308, 4
        %v5311 = vrot.slane %v5201, 7
        %v5312 = vsel %vm5291, %v5310, %v5311
        %v5313 = vrot.slane %v5202, 7
        %v5314 = vrot.slane %v5313, 4
        %v5315 = vrot.slane %v5203, 7
        %v5316 = vsel %vm5291, %v5314, %v5315
        %v5317 = vrot.slane %v5315, 4
        %v5318 = vrot.slane %v5204, 7
        %v5319 = vsel %vm5291, %v5317, %v5318
        %v5320 = vrot.slane %v5205, 7
        %v5321 = vrot.slane %v5320, 4
        %v5322 = vrot.slane %v5206, 7
        %v5323 = vsel %vm5291, %v5321, %v5322
        %v5324 = vrot.slane %v5322, 4
        %v5325 = vrot.slane %v5207, 7
        %v5326 = vsel %vm5291, %v5324, %v5325
        %v5327 = vrot.slane %v5208, 7
        %v5328 = vrot.slane %v5327, 4
        %v5329 = vrot.slane %v5209, 7
        %v5330 = vsel %vm5291, %v5328, %v5329
        %v5331 = vrot.slane %v5329, 4
        %v5332 = vrot.slane %v5210, 7
        %v5333 = vsel %vm5291, %v5331, %v5332
        %v5334 = vrot.slane %v5211, 7
        %v5335 = vrot.slane %v5334, 4
        %v5336 = vrot.slane %v5212, 7
        %v5337 = vsel %vm5291, %v5335, %v5336
        %v5338 = vrot.slane %v5336, 4
        %v5339 = vrot.slane %v5213, 7
        %v5340 = vsel %vm5291, %v5338, %v5339
        %v5341 = vrot.slane %v5214, 7
        %v5342 = vrot.slane %v5341, 4
        %v5343 = vrot.slane %v5215, 7
        %v5344 = vsel %vm5291, %v5342, %v5343
        %v5345 = vrot.slane %v5343, 4
        %v5346 = vrot.slane %v5216, 7
        %v5347 = vsel %vm5291, %v5345, %v5346
        %v5348 = vrot.slane %v5217, 7
        %v5349 = vrot.slane %v5348, 4
        %v5350 = vrot.slane %v5218, 7
        %v5351 = vsel %vm5291, %v5349, %v5350
        %v5352 = vrot.slane %v5350, 4
        %v5353 = vrot.slane %v5219, 7
        %v5354 = vsel %vm5291, %v5352, %v5353
        %v5355 = vrot.slane %v5220, 7
        %v5356 = vrot.slane %v5355, 4
        %v5357 = vrot.slane %v5221, 7
        %v5358 = vsel %vm5291, %v5356, %v5357
        %v5359 = vrot.slane %v5357, 4
        %v5360 = vrot.slane %v5222, 7
        %v5361 = vsel %vm5291, %v5359, %v5360
        %v5362 = vrot.slane %v5223, 7
        %v5363 = vrot.slane %v5362, 4
        %v5364 = vrot.slane %v5224, 7
        %v5365 = vsel %vm5291, %v5363, %v5364
        %v5366 = vrot.slane %v5364, 4
        %v5367 = vrot.slane %v5225, 7
        %v5368 = vsel %vm5291, %v5366, %v5367
        %v5369 = vrot.slane %v5226, 7
        %v5370 = vrot.slane %v5369, 4
        %v5371 = vrot.slane %v5227, 7
        %v5372 = vsel %vm5291, %v5370, %v5371
        %v5373 = vrot.slane %v5371, 4
        %v5374 = vrot.slane %v5228, 7
        %v5375 = vsel %vm5291, %v5373, %v5374
        %v5376 = vrot.slane %v5229, 7
        %v5377 = vrot.slane %v5376, 4
        %v5378 = vrot.slane %v5230, 7
        %v5379 = vsel %vm5291, %v5377, %v5378
        %v5380 = vrot.slane %v5378, 4
        %v5381 = vrot.slane %v5231, 7
        %v5382 = vsel %vm5291, %v5380, %v5381
        %v5383 = vrot.slane %v5232, 7
        %v5384 = vrot.slane %v5383, 4
        %v5385 = vrot.slane %v5233, 7
        %v5386 = vsel %vm5291, %v5384, %v5385
        %v5387 = vrot.slane %v5385, 4
        %v5388 = vrot.slane %v5234, 7
        %v5389 = vsel %vm5291, %v5387, %v5388
        %v5390 = vrot.slane %v5235, 7
        %v5391 = vrot.slane %v5390, 4
        %v5392 = vrot.slane %v5236, 7
        %v5393 = vsel %vm5291, %v5391, %v5392
        %v5394 = vrot.slane %v5392, 4
        %v5395 = vrot.slane %v5237, 7
        %v5396 = vsel %vm5291, %v5394, %v5395
        %v5397 = vrot.slane %v5238, 7
        %v5398 = vrot.slane %v5397, 4
        %v5399 = vrot.slane %v5239, 7
        %v5400 = vsel %vm5291, %v5398, %v5399
        %v5401 = vrot.slane %v5399, 4
        %v5402 = vrot.slane %v5240, 7
        %v5403 = vsel %vm5291, %v5401, %v5402
        %5404 = vrot.lane.b32.xlu0 %v5295, 126
        %v5405 = vpop.permute.xlu0 %5404
        %5406 = vrot.lane.b32.xlu0 %v5298, 126
        %v5407 = vpop.permute.xlu0 %5406
        %5408 = vrot.lane.b32.xlu0 %v5302, 126
        %v5409 = vpop.permute.xlu0 %5408
        %5410 = vrot.lane.b32.xlu0 %v5305, 126
        %v5411 = vpop.permute.xlu0 %5410
        %5412 = vrot.lane.b32.xlu0 %v5309, 126
        %v5413 = vpop.permute.xlu0 %5412
        %5414 = vrot.lane.b32.xlu0 %v5312, 126
        %v5415 = vpop.permute.xlu0 %5414
        %5416 = vrot.lane.b32.xlu0 %v5316, 126
        %v5417 = vpop.permute.xlu0 %5416
        %5418 = vrot.lane.b32.xlu0 %v5319, 126
        %v5419 = vpop.permute.xlu0 %5418
        %5420 = vrot.lane.b32.xlu0 %v5323, 126
        %v5421 = vpop.permute.xlu0 %5420
        %5422 = vrot.lane.b32.xlu0 %v5326, 126
        %v5423 = vpop.permute.xlu0 %5422
        %5424 = vrot.lane.b32.xlu0 %v5330, 126
        %v5425 = vpop.permute.xlu0 %5424
        %5426 = vrot.lane.b32.xlu0 %v5333, 126
        %v5427 = vpop.permute.xlu0 %5426
        %5428 = vrot.lane.b32.xlu0 %v5337, 126
        %v5429 = vpop.permute.xlu0 %5428
        %5430 = vrot.lane.b32.xlu0 %v5340, 126
        %v5431 = vpop.permute.xlu0 %5430
        %5432 = vrot.lane.b32.xlu0 %v5344, 126
        %v5433 = vpop.permute.xlu0 %5432
        %5434 = vrot.lane.b32.xlu0 %v5347, 126
        %v5435 = vpop.permute.xlu0 %5434
        %5436 = vrot.lane.b32.xlu0 %v5351, 126
        %v5437 = vpop.permute.xlu0 %5436
        %5438 = vrot.lane.b32.xlu0 %v5354, 126
        %v5439 = vpop.permute.xlu0 %5438
        %5440 = vrot.lane.b32.xlu0 %v5358, 126
        %v5441 = vpop.permute.xlu0 %5440
        %5442 = vrot.lane.b32.xlu0 %v5361, 126
        %v5443 = vpop.permute.xlu0 %5442
        %5444 = vrot.lane.b32.xlu0 %v5365, 126
        %v5445 = vpop.permute.xlu0 %5444
        %5446 = vrot.lane.b32.xlu0 %v5368, 126
        %v5447 = vpop.permute.xlu0 %5446
        %5448 = vrot.lane.b32.xlu0 %v5372, 126
        %v5449 = vpop.permute.xlu0 %5448
        %5450 = vrot.lane.b32.xlu0 %v5375, 126
        %v5451 = vpop.permute.xlu0 %5450
        %5452 = vrot.lane.b32.xlu0 %v5379, 126
        %v5453 = vpop.permute.xlu0 %5452
        %5454 = vrot.lane.b32.xlu0 %v5382, 126
        %v5455 = vpop.permute.xlu0 %5454
        %5456 = vrot.lane.b32.xlu0 %v5386, 126
        %v5457 = vpop.permute.xlu0 %5456
        %5458 = vrot.lane.b32.xlu0 %v5389, 126
        %v5459 = vpop.permute.xlu0 %5458
        %5460 = vrot.lane.b32.xlu0 %v5393, 126
        %v5461 = vpop.permute.xlu0 %5460
        %5462 = vrot.lane.b32.xlu0 %v5396, 126
        %v5463 = vpop.permute.xlu0 %5462
        %5464 = vrot.lane.b32.xlu0 %v5400, 126
        %v5465 = vpop.permute.xlu0 %5464
        %5466 = vrot.lane.b32.xlu0 %v5403, 126
        %v5467 = vpop.permute.xlu0 %5466
        %v5468 = vrot.slane %v5405, 4
        %v5469 = vrot.slane %v5407, 4
        %v5470 = vrot.slane %v5409, 4
        %v5471 = vrot.slane %v5411, 4
        %v5472 = vrot.slane %v5413, 4
        %v5473 = vrot.slane %v5415, 4
        %v5474 = vrot.slane %v5417, 4
        %v5475 = vrot.slane %v5419, 4
        %v5476 = vrot.slane %v5421, 4
        %v5477 = vrot.slane %v5423, 4
        %v5478 = vrot.slane %v5425, 4
        %v5479 = vrot.slane %v5427, 4
        %v5480 = vrot.slane %v5429, 4
        %v5481 = vrot.slane %v5431, 4
        %v5482 = vrot.slane %v5433, 4
        %v5483 = vrot.slane %v5435, 4
        %v5484 = vrot.slane %v5437, 4
        %v5485 = vrot.slane %v5439, 4
        %v5486 = vrot.slane %v5441, 4
        %v5487 = vrot.slane %v5443, 4
        %v5488 = vrot.slane %v5445, 4
        %v5489 = vrot.slane %v5447, 4
        %v5490 = vrot.slane %v5449, 4
        %v5491 = vrot.slane %v5451, 4
        %v5492 = vrot.slane %v5453, 4
        %v5493 = vrot.slane %v5455, 4
        %v5494 = vrot.slane %v5457, 4
        %v5495 = vrot.slane %v5459, 4
        %v5496 = vrot.slane %v5461, 4
        %v5497 = vrot.slane %v5463, 4
        %v5498 = vrot.slane %v5465, 4
        %v5499 = vrot.slane %v5467, 4
        %vm5500 = vcmask 1031168
        %v5501 = vsel %vm5500, %v5468, %v5405
        %v5502 = vsel %vm5500, %v5469, %v5407
        %v5503 = vsel %vm5500, %v5470, %v5409
        %v5504 = vsel %vm5500, %v5471, %v5411
        %v5505 = vsel %vm5500, %v5472, %v5413
        %v5506 = vsel %vm5500, %v5473, %v5415
        %v5507 = vsel %vm5500, %v5474, %v5417
        %v5508 = vsel %vm5500, %v5475, %v5419
        %v5509 = vsel %vm5500, %v5476, %v5421
        %v5510 = vsel %vm5500, %v5477, %v5423
        %v5511 = vsel %vm5500, %v5478, %v5425
        %v5512 = vsel %vm5500, %v5479, %v5427
        %v5513 = vsel %vm5500, %v5480, %v5429
        %v5514 = vsel %vm5500, %v5481, %v5431
        %v5515 = vsel %vm5500, %v5482, %v5433
        %v5516 = vsel %vm5500, %v5483, %v5435
        %v5517 = vsel %vm5500, %v5484, %v5437
        %v5518 = vsel %vm5500, %v5485, %v5439
        %v5519 = vsel %vm5500, %v5486, %v5441
        %v5520 = vsel %vm5500, %v5487, %v5443
        %v5521 = vsel %vm5500, %v5488, %v5445
        %v5522 = vsel %vm5500, %v5489, %v5447
        %v5523 = vsel %vm5500, %v5490, %v5449
        %v5524 = vsel %vm5500, %v5491, %v5451
        %v5525 = vsel %vm5500, %v5492, %v5453
        %v5526 = vsel %vm5500, %v5493, %v5455
        %v5527 = vsel %vm5500, %v5494, %v5457
        %v5528 = vsel %vm5500, %v5495, %v5459
        %v5529 = vsel %vm5500, %v5496, %v5461
        %v5530 = vsel %vm5500, %v5497, %v5463
        %v5531 = vsel %vm5500, %v5498, %v5465
        %v5532 = vsel %vm5500, %v5499, %v5467
        %vm5565 = vcmask 1044464
        %vm5566 = vcmask 154628
        %vm5567 = vmor %vm5566, %vm5565
        %5568 = vst.msk [vmem:[#allocation4] sm:$0xff] %vm5567, %v5501
        %5569 = vst.msk [vmem:[#allocation4 + $0x8] sm:$0xff] %vm5567, %v5502
        %5570 = vst.msk [vmem:[#allocation4 + $0x10] sm:$0xff] %vm5567, %v5503
        %5571 = vst.msk [vmem:[#allocation4 + $0x18] sm:$0xff] %vm5567, %v5504
        %5572 = vst.msk [vmem:[#allocation4 + $0x20] sm:$0xff] %vm5567, %v5505
        %5573 = vst.msk [vmem:[#allocation4 + $0x28] sm:$0xff] %vm5567, %v5506
        %5574 = vst.msk [vmem:[#allocation4 + $0x30] sm:$0xff] %vm5567, %v5507
        %5575 = vst.msk [vmem:[#allocation4 + $0x38] sm:$0xff] %vm5567, %v5508
        %5576 = vst.msk [vmem:[#allocation4 + $0x40] sm:$0xff] %vm5567, %v5509
        %5577 = vst.msk [vmem:[#allocation4 + $0x48] sm:$0xff] %vm5567, %v5510
        %5578 = vst.msk [vmem:[#allocation4 + $0x50] sm:$0xff] %vm5567, %v5511
        %5579 = vst.msk [vmem:[#allocation4 + $0x58] sm:$0xff] %vm5567, %v5512
        %5580 = vst.msk [vmem:[#allocation4 + $0x60] sm:$0xff] %vm5567, %v5513
        %5581 = vst.msk [vmem:[#allocation4 + $0x68] sm:$0xff] %vm5567, %v5514
        %5582 = vst.msk [vmem:[#allocation4 + $0x70] sm:$0xff] %vm5567, %v5515
        %5583 = vst.msk [vmem:[#allocation4 + $0x78] sm:$0xff] %vm5567, %v5516
        %5584 = vst.msk [vmem:[#allocation4 + $0x80] sm:$0xff] %vm5567, %v5517
        %5585 = vst.msk [vmem:[#allocation4 + $0x88] sm:$0xff] %vm5567, %v5518
        %5586 = vst.msk [vmem:[#allocation4 + $0x90] sm:$0xff] %vm5567, %v5519
        %5587 = vst.msk [vmem:[#allocation4 + $0x98] sm:$0xff] %vm5567, %v5520
        %5588 = vst.msk [vmem:[#allocation4 + $0xa0] sm:$0xff] %vm5567, %v5521
        %5589 = vst.msk [vmem:[#allocation4 + $0xa8] sm:$0xff] %vm5567, %v5522
        %5590 = vst.msk [vmem:[#allocation4 + $0xb0] sm:$0xff] %vm5567, %v5523
        %5591 = vst.msk [vmem:[#allocation4 + $0xb8] sm:$0xff] %vm5567, %v5524
        %5592 = vst.msk [vmem:[#allocation4 + $0xc0] sm:$0xff] %vm5567, %v5525
        %5593 = vst.msk [vmem:[#allocation4 + $0xc8] sm:$0xff] %vm5567, %v5526
        %5594 = vst.msk [vmem:[#allocation4 + $0xd0] sm:$0xff] %vm5567, %v5527
        %5595 = vst.msk [vmem:[#allocation4 + $0xd8] sm:$0xff] %vm5567, %v5528
        %5596 = vst.msk [vmem:[#allocation4 + $0xe0] sm:$0xff] %vm5567, %v5529
        %5597 = vst.msk [vmem:[#allocation4 + $0xe8] sm:$0xff] %vm5567, %v5530
        %5598 = vst.msk [vmem:[#allocation4 + $0xf0] sm:$0xff] %vm5567, %v5531
        %5599 = vst.msk [vmem:[#allocation4 + $0xf8] sm:$0xff] %vm5567, %v5532
        %v5600 = vld [vmem:[#allocation4] sm:$0xff]
        %v5601 = vld [vmem:[#allocation4 + $0x8] sm:$0xff]
        %v5602 = vld [vmem:[#allocation4 + $0x10] sm:$0xff]
        %v5603 = vld [vmem:[#allocation4 + $0x18] sm:$0xff]
        %v5604 = vld [vmem:[#allocation4 + $0x20] sm:$0xff]
        %v5605 = vld [vmem:[#allocation4 + $0x28] sm:$0xff]
        %v5606 = vld [vmem:[#allocation4 + $0x30] sm:$0xff]
        %v5607 = vld [vmem:[#allocation4 + $0x38] sm:$0xff]
        %v5608 = vld [vmem:[#allocation4 + $0x40] sm:$0xff]
        %v5609 = vld [vmem:[#allocation4 + $0x48] sm:$0xff]
        %v5610 = vld [vmem:[#allocation4 + $0x50] sm:$0xff]
        %v5611 = vld [vmem:[#allocation4 + $0x58] sm:$0xff]
        %v5612 = vld [vmem:[#allocation4 + $0x60] sm:$0xff]
        %v5613 = vld [vmem:[#allocation4 + $0x68] sm:$0xff]
        %v5614 = vld [vmem:[#allocation4 + $0x70] sm:$0xff]
        %v5615 = vld [vmem:[#allocation4 + $0x78] sm:$0xff]
        %v5616 = vld [vmem:[#allocation4 + $0x80] sm:$0xff]
        %v5617 = vld [vmem:[#allocation4 + $0x88] sm:$0xff]
        %v5618 = vld [vmem:[#allocation4 + $0x90] sm:$0xff]
        %v5619 = vld [vmem:[#allocation4 + $0x98] sm:$0xff]
        %v5620 = vld [vmem:[#allocation4 + $0xa0] sm:$0xff]
        %v5621 = vld [vmem:[#allocation4 + $0xa8] sm:$0xff]
        %v5622 = vld [vmem:[#allocation4 + $0xb0] sm:$0xff]
        %v5623 = vld [vmem:[#allocation4 + $0xb8] sm:$0xff]
        %v5624 = vld [vmem:[#allocation4 + $0xc0] sm:$0xff]
        %v5625 = vld [vmem:[#allocation4 + $0xc8] sm:$0xff]
        %v5626 = vld [vmem:[#allocation4 + $0xd0] sm:$0xff]
        %v5627 = vld [vmem:[#allocation4 + $0xd8] sm:$0xff]
        %v5628 = vld [vmem:[#allocation4 + $0xe0] sm:$0xff]
        %v5629 = vld [vmem:[#allocation4 + $0xe8] sm:$0xff]
        %v5630 = vld [vmem:[#allocation4 + $0xf0] sm:$0xff]
        %v5631 = vld [vmem:[#allocation4 + $0xf8] sm:$0xff]
        %v5632 = vld [vmem:[%s1] sm:$0xf]
        %v5633 = vld [vmem:[%s1 + $0x4] sm:$0xf]
        %v5634 = vld [vmem:[%s1 + $0x8] sm:$0xf]
        %v5635 = vld [vmem:[%s1 + $0xc] sm:$0xf]
        %v5636 = vld [vmem:[%s1 + $0x10] sm:$0xf]
        %v5637 = vld [vmem:[%s1 + $0x14] sm:$0xf]
        %v5638 = vld [vmem:[%s1 + $0x18] sm:$0xf]
        %v5639 = vld [vmem:[%s1 + $0x1c] sm:$0xf]
        %v5640 = vld [vmem:[%s1 + $0x20] sm:$0xf]
        %v5641 = vld [vmem:[%s1 + $0x24] sm:$0xf]
        %v5642 = vld [vmem:[%s1 + $0x28] sm:$0xf]
        %v5643 = vld [vmem:[%s1 + $0x2c] sm:$0xf]
        %v5644 = vld [vmem:[%s1 + $0x30] sm:$0xf]
        %v5645 = vld [vmem:[%s1 + $0x34] sm:$0xf]
        %v5646 = vld [vmem:[%s1 + $0x38] sm:$0xf]
        %v5647 = vld [vmem:[%s1 + $0x3c] sm:$0xf]
        %v5648 = vld [vmem:[%s1 + $0x40] sm:$0xf]
        %v5649 = vld [vmem:[%s1 + $0x44] sm:$0xf]
        %v5650 = vld [vmem:[%s1 + $0x48] sm:$0x3]
        %v5651 = vld [vmem:[%s2] sm:$0x1]
        %v5653 = vlaneseq
        %v5654 = vshrl.u32 %v5653, 7
        %v5655 = vsub.s32 0, %v5654
        %v5656 = vrot.slane %v5651, %v5655
        %v5690 = vunpack.c.l.b16 %v5600
        %v5691 = vunpack.c.h.b16 %v5600
        %v5692 = vunpack.c.l.b16 %v5601
        %v5693 = vunpack.c.h.b16 %v5601
        %v5694 = vunpack.c.l.b16 %v5602
        %v5695 = vunpack.c.h.b16 %v5602
        %v5696 = vunpack.c.l.b16 %v5603
        %v5697 = vunpack.c.h.b16 %v5603
        %v5698 = vunpack.c.l.b16 %v5604
        %v5699 = vunpack.c.h.b16 %v5604
        %v5700 = vunpack.c.l.b16 %v5605
        %v5701 = vunpack.c.h.b16 %v5605
        %v5702 = vunpack.c.l.b16 %v5606
        %v5703 = vunpack.c.h.b16 %v5606
        %v5704 = vunpack.c.l.b16 %v5607
        %v5705 = vunpack.c.h.b16 %v5607
        %v5706 = vunpack.c.l.b16 %v5608
        %v5707 = vunpack.c.h.b16 %v5608
        %v5708 = vunpack.c.l.b16 %v5609
        %v5709 = vunpack.c.h.b16 %v5609
        %v5710 = vunpack.c.l.b16 %v5610
        %v5711 = vunpack.c.h.b16 %v5610
        %v5712 = vunpack.c.l.b16 %v5611
        %v5713 = vunpack.c.h.b16 %v5611
        %v5714 = vunpack.c.l.b16 %v5612
        %v5715 = vunpack.c.h.b16 %v5612
        %v5716 = vunpack.c.l.b16 %v5613
        %v5717 = vunpack.c.h.b16 %v5613
        %v5718 = vunpack.c.l.b16 %v5614
        %v5719 = vunpack.c.h.b16 %v5614
        %v5720 = vunpack.c.l.b16 %v5615
        %v5721 = vunpack.c.h.b16 %v5615
        %v5722 = vunpack.c.l.b16 %v5616
        %v5723 = vunpack.c.h.b16 %v5616
        %v5724 = vunpack.c.l.b16 %v5617
        %v5725 = vunpack.c.h.b16 %v5617
        %v5726 = vunpack.c.l.b16 %v5618
        %v5727 = vunpack.c.h.b16 %v5618
        %v5728 = vunpack.c.l.b16 %v5619
        %v5729 = vunpack.c.h.b16 %v5619
        %v5730 = vunpack.c.l.b16 %v5620
        %v5731 = vunpack.c.h.b16 %v5620
        %v5732 = vunpack.c.l.b16 %v5621
        %v5733 = vunpack.c.h.b16 %v5621
        %v5734 = vunpack.c.l.b16 %v5622
        %v5735 = vunpack.c.h.b16 %v5622
        %v5736 = vunpack.c.l.b16 %v5623
        %v5737 = vunpack.c.h.b16 %v5623
        %v5738 = vunpack.c.l.b16 %v5624
        %v5739 = vunpack.c.h.b16 %v5624
        %v5740 = vunpack.c.l.b16 %v5625
        %v5741 = vunpack.c.h.b16 %v5625
        %v5742 = vunpack.c.l.b16 %v5626
        %v5743 = vunpack.c.h.b16 %v5626
        %v5744 = vunpack.c.l.b16 %v5627
        %v5745 = vunpack.c.h.b16 %v5627
        %v5746 = vunpack.c.l.b16 %v5628
        %v5747 = vunpack.c.h.b16 %v5628
        %v5748 = vunpack.c.l.b16 %v5629
        %v5749 = vunpack.c.h.b16 %v5629
        %v5750 = vunpack.c.l.b16 %v5630
        %v5751 = vunpack.c.h.b16 %v5630
        %v5752 = vunpack.c.l.b16 %v5631
        %v5753 = vunpack.c.h.b16 %v5631
        %v5754 = vpack.c.b16 %v5692, %v5690
        %v5755 = vpack.c.b16 %v5693, %v5691
        %v5756 = vpack.c.b16 %v5696, %v5694
        %v5757 = vpack.c.b16 %v5697, %v5695
        %v5758 = vpack.c.b16 %v5700, %v5698
        %v5759 = vpack.c.b16 %v5701, %v5699
        %v5760 = vpack.c.b16 %v5704, %v5702
        %v5761 = vpack.c.b16 %v5705, %v5703
        %v5762 = vpack.c.b16 %v5708, %v5706
        %v5763 = vpack.c.b16 %v5709, %v5707
        %v5764 = vpack.c.b16 %v5712, %v5710
        %v5765 = vpack.c.b16 %v5713, %v5711
        %v5766 = vpack.c.b16 %v5716, %v5714
        %v5767 = vpack.c.b16 %v5717, %v5715
        %v5768 = vpack.c.b16 %v5720, %v5718
        %v5769 = vpack.c.b16 %v5721, %v5719
        %v5770 = vpack.c.b16 %v5724, %v5722
        %v5771 = vpack.c.b16 %v5725, %v5723
        %v5772 = vpack.c.b16 %v5728, %v5726
        %v5773 = vpack.c.b16 %v5729, %v5727
        %v5774 = vpack.c.b16 %v5732, %v5730
        %v5775 = vpack.c.b16 %v5733, %v5731
        %v5776 = vpack.c.b16 %v5736, %v5734
        %v5777 = vpack.c.b16 %v5737, %v5735
        %v5778 = vpack.c.b16 %v5740, %v5738
        %v5779 = vpack.c.b16 %v5741, %v5739
        %v5780 = vpack.c.b16 %v5744, %v5742
        %v5781 = vpack.c.b16 %v5745, %v5743
        %v5782 = vpack.c.b16 %v5748, %v5746
        %v5783 = vpack.c.b16 %v5749, %v5747
        %v5784 = vpack.c.b16 %v5752, %v5750
        %v5785 = vpack.c.b16 %v5753, %v5751
        %v5821 = vunpack.c.l.b16 %v5632
        %v5822 = vunpack.c.l.b16 %v5633
        %v5823 = vunpack.c.l.b16 %v5634
        %v5824 = vunpack.c.l.b16 %v5635
        %v5825 = vunpack.c.l.b16 %v5636
        %v5826 = vunpack.c.l.b16 %v5637
        %v5827 = vunpack.c.l.b16 %v5638
        %v5828 = vunpack.c.l.b16 %v5639
        %v5829 = vunpack.c.l.b16 %v5640
        %v5830 = vunpack.c.l.b16 %v5641
        %v5831 = vunpack.c.l.b16 %v5642
        %v5832 = vunpack.c.l.b16 %v5643
        %v5833 = vunpack.c.l.b16 %v5644
        %v5834 = vunpack.c.l.b16 %v5645
        %v5835 = vunpack.c.l.b16 %v5646
        %v5836 = vunpack.c.l.b16 %v5647
        %v5837 = vunpack.c.l.b16 %v5648
        %v5838 = vunpack.c.l.b16 %v5649
        %v5839 = vunpack.c.l.b16 %v5650
        %v5840 = vpack.c.b16 %v5822, %v5821
        %v5841 = vpack.c.b16 %v5824, %v5823
        %v5842 = vpack.c.b16 %v5826, %v5825
        %v5843 = vpack.c.b16 %v5828, %v5827
        %v5844 = vpack.c.b16 %v5830, %v5829
        %v5845 = vpack.c.b16 %v5832, %v5831
        %v5846 = vpack.c.b16 %v5834, %v5833
        %v5847 = vpack.c.b16 %v5836, %v5835
        %v5848 = vpack.c.b16 %v5838, %v5837
        %v5849 = vpack.c.b16 %v5839, %v5839
        %vm5859 = vcmask 154624
        %v5861 = vsel %vm5859, %v5755, 0
        %v5864 = vsel %vm5859, %v5757, 0
        %v5867 = vsel %vm5859, %v5759, 0
        %v5870 = vsel %vm5859, %v5761, 0
        %v5873 = vsel %vm5859, %v5763, 0
        %v5876 = vsel %vm5859, %v5765, 0
        %v5879 = vsel %vm5859, %v5767, 0
        %v5882 = vsel %vm5859, %v5769, 0
        %v5885 = vsel %vm5859, %v5771, 0
        %v5888 = vsel %vm5859, %v5773, 0
        %v5891 = vsel %vm5859, %v5775, 0
        %v5894 = vsel %vm5859, %v5777, 0
        %v5897 = vsel %vm5859, %v5779, 0
        %v5900 = vsel %vm5859, %v5781, 0
        %v5903 = vsel %vm5859, %v5783, 0
        %v5906 = vsel %vm5859, %v5785, 0
        %vm5908 = vcmask 1040384
        %vm5909 = vcmask 1041408
        %v5910 = vsel %vm5908, 4294967295, 65535
        %v5911 = vsel %vm5909, %v5910, 0
        %v5913 = vand.u32 %v5849, %v5911
        %5915 = vmatprep.subr.bf16.mxu0 0
        %5916 = vmatpush1.bf16.msra.mxu0 %v5847
        %5917 = vmatprep.subr.bf16.mxu0 0
        %5918 = vmatpush1.bf16.msra.mxu0 %v5846
        %5919 = vmatprep.subr.bf16.mxu0 0
        %5920 = vmatpush1.bf16.msra.mxu0 %v5845
        %5921 = vmatprep.subr.bf16.mxu0 0
        %5922 = vmatpush1.bf16.msra.mxu0 %v5844
        %5923 = vmatprep.subr.bf16.mxu0 0
        %5924 = vmatpush1.bf16.msra.mxu0 %v5843
        %5925 = vmatprep.subr.bf16.mxu0 0
        %5926 = vmatpush1.bf16.msra.mxu0 %v5842
        %5927 = vmatprep.subr.bf16.mxu0 0
        %5928 = vmatpush1.bf16.msra.mxu0 %v5841
        %5929 = vmatprep.subr.bf16.mxu0 0
        %5930 = vmatpush1.bf16.msra.mxu0 %v5840
        %5931 = vmatprep.subr.bf16.mxu0 0
        %5932 = vmatpush2.bf16.msra.mxu0 0
        %5933 = vmatprep.subr.bf16.mxu0 0
        %5934 = vmatpush2.bf16.msra.mxu0 0
        %5935 = vmatprep.subr.bf16.mxu0 0
        %5936 = vmatpush2.bf16.msra.mxu0 0
        %5937 = vmatprep.subr.bf16.mxu0 0
        %5938 = vmatpush2.bf16.msra.mxu0 0
        %5939 = vmatprep.subr.bf16.mxu0 0
        %5940 = vmatpush2.bf16.msra.mxu0 0
        %5941 = vmatprep.subr.bf16.mxu0 0
        %5942 = vmatpush2.bf16.msra.mxu0 0
        %5943 = vmatprep.subr.bf16.mxu0 0
        %5944 = vmatpush2.bf16.msra.mxu0 %v5913
        %5945 = vmatprep.subr.bf16.mxu0 0
        %5946 = vmatpush2.bf16.msra.mxu0 %v5848
        %5947 = vmatprep.mubr.bf16.mxu0 %v5861
        %5948 = vmatmul.mubr.bf16.gmra.mxu0 %v5754
        %v5949 = vpop.f32.mrf.mxu0
        %v5950 = vadd.f32 %v5656, %v5949
        %v5951 = vpop.f32.mrf.mxu0
        %v5952 = vpop.f32.mrf.mxu0
        %v5953 = vadd.f32 %v5656, %v5952
        %v5954 = vpop.f32.mrf.mxu0
        %5955 = vmatprep.mubr.bf16.mxu0 %v5864
        %5956 = vmatmul.mubr.bf16.gmra.mxu0 %v5756
        %v5957 = vpop.f32.mrf.mxu0
        %v5958 = vadd.f32 %v5656, %v5957
        %v5959 = vpop.f32.mrf.mxu0
        %v5960 = vpop.f32.mrf.mxu0
        %v5961 = vadd.f32 %v5656, %v5960
        %v5962 = vpop.f32.mrf.mxu0
        %5963 = vmatprep.mubr.bf16.mxu0 %v5867
        %5964 = vmatmul.mubr.bf16.gmra.mxu0 %v5758
        %v5965 = vpop.f32.mrf.mxu0
        %v5966 = vadd.f32 %v5656, %v5965
        %v5967 = vpop.f32.mrf.mxu0
        %v5968 = vpop.f32.mrf.mxu0
        %v5969 = vadd.f32 %v5656, %v5968
        %v5970 = vpop.f32.mrf.mxu0
        %5971 = vmatprep.mubr.bf16.mxu0 %v5870
        %5972 = vmatmul.mubr.bf16.gmra.mxu0 %v5760
        %v5973 = vpop.f32.mrf.mxu0
        %v5974 = vadd.f32 %v5656, %v5973
        %v5975 = vpop.f32.mrf.mxu0
        %v5976 = vpop.f32.mrf.mxu0
        %v5977 = vadd.f32 %v5656, %v5976
        %v5978 = vpop.f32.mrf.mxu0
        %5979 = vmatprep.mubr.bf16.mxu0 %v5873
        %5980 = vmatmul.mubr.bf16.gmra.mxu0 %v5762
        %v5981 = vpop.f32.mrf.mxu0
        %v5982 = vadd.f32 %v5656, %v5981
        %v5983 = vpop.f32.mrf.mxu0
        %v5984 = vpop.f32.mrf.mxu0
        %v5985 = vadd.f32 %v5656, %v5984
        %v5986 = vpop.f32.mrf.mxu0
        %5987 = vmatprep.mubr.bf16.mxu0 %v5876
        %5988 = vmatmul.mubr.bf16.gmra.mxu0 %v5764
        %v5989 = vpop.f32.mrf.mxu0
        %v5990 = vadd.f32 %v5656, %v5989
        %v5991 = vpop.f32.mrf.mxu0
        %v5992 = vpop.f32.mrf.mxu0
        %v5993 = vadd.f32 %v5656, %v5992
        %v5994 = vpop.f32.mrf.mxu0
        %5995 = vmatprep.mubr.bf16.mxu0 %v5879
        %5996 = vmatmul.mubr.bf16.gmra.mxu0 %v5766
        %v5997 = vpop.f32.mrf.mxu0
        %v5998 = vadd.f32 %v5656, %v5997
        %v5999 = vpop.f32.mrf.mxu0
        %v6000 = vpop.f32.mrf.mxu0
        %v6001 = vadd.f32 %v5656, %v6000
        %v6002 = vpop.f32.mrf.mxu0
        %6003 = vmatprep.mubr.bf16.mxu0 %v5882
        %6004 = vmatmul.mubr.bf16.gmra.mxu0 %v5768
        %v6005 = vpop.f32.mrf.mxu0
        %v6006 = vadd.f32 %v5656, %v6005
        %v6007 = vpop.f32.mrf.mxu0
        %v6008 = vpop.f32.mrf.mxu0
        %v6009 = vadd.f32 %v5656, %v6008
        %v6010 = vpop.f32.mrf.mxu0
        %6011 = vmatprep.mubr.bf16.mxu0 %v5885
        %6012 = vmatmul.mubr.bf16.gmra.mxu0 %v5770
        %v6013 = vpop.f32.mrf.mxu0
        %v6014 = vadd.f32 %v5656, %v6013
        %v6015 = vpop.f32.mrf.mxu0
        %v6016 = vpop.f32.mrf.mxu0
        %v6017 = vadd.f32 %v5656, %v6016
        %v6018 = vpop.f32.mrf.mxu0
        %6019 = vmatprep.mubr.bf16.mxu0 %v5888
        %6020 = vmatmul.mubr.bf16.gmra.mxu0 %v5772
        %v6021 = vpop.f32.mrf.mxu0
        %v6022 = vadd.f32 %v5656, %v6021
        %v6023 = vpop.f32.mrf.mxu0
        %v6024 = vpop.f32.mrf.mxu0
        %v6025 = vadd.f32 %v5656, %v6024
        %v6026 = vpop.f32.mrf.mxu0
        %6027 = vmatprep.mubr.bf16.mxu0 %v5891
        %6028 = vmatmul.mubr.bf16.gmra.mxu0 %v5774
        %v6029 = vpop.f32.mrf.mxu0
        %v6030 = vadd.f32 %v5656, %v6029
        %v6031 = vpop.f32.mrf.mxu0
        %v6032 = vpop.f32.mrf.mxu0
        %v6033 = vadd.f32 %v5656, %v6032
        %v6034 = vpop.f32.mrf.mxu0
        %6035 = vmatprep.mubr.bf16.mxu0 %v5894
        %6036 = vmatmul.mubr.bf16.gmra.mxu0 %v5776
        %v6037 = vpop.f32.mrf.mxu0
        %v6038 = vadd.f32 %v5656, %v6037
        %v6039 = vpop.f32.mrf.mxu0
        %v6040 = vpop.f32.mrf.mxu0
        %v6041 = vadd.f32 %v5656, %v6040
        %v6042 = vpop.f32.mrf.mxu0
        %6043 = vmatprep.mubr.bf16.mxu0 %v5897
        %6044 = vmatmul.mubr.bf16.gmra.mxu0 %v5778
        %v6045 = vpop.f32.mrf.mxu0
        %v6046 = vadd.f32 %v5656, %v6045
        %v6047 = vpop.f32.mrf.mxu0
        %v6048 = vpop.f32.mrf.mxu0
        %v6049 = vadd.f32 %v5656, %v6048
        %v6050 = vpop.f32.mrf.mxu0
        %6051 = vmatprep.mubr.bf16.mxu0 %v5900
        %6052 = vmatmul.mubr.bf16.gmra.mxu0 %v5780
        %v6053 = vpop.f32.mrf.mxu0
        %v6054 = vadd.f32 %v5656, %v6053
        %v6055 = vpop.f32.mrf.mxu0
        %v6056 = vpop.f32.mrf.mxu0
        %v6057 = vadd.f32 %v5656, %v6056
        %v6058 = vpop.f32.mrf.mxu0
        %6059 = vmatprep.mubr.bf16.mxu0 %v5903
        %6060 = vmatmul.mubr.bf16.gmra.mxu0 %v5782
        %v6061 = vpop.f32.mrf.mxu0
        %v6062 = vadd.f32 %v5656, %v6061
        %v6063 = vpop.f32.mrf.mxu0
        %v6064 = vpop.f32.mrf.mxu0
        %v6065 = vadd.f32 %v5656, %v6064
        %v6066 = vpop.f32.mrf.mxu0
        %6067 = vmatprep.mubr.bf16.mxu0 %v5906
        %6068 = vmatmul.mubr.bf16.gmra.mxu0 %v5784
        %v6069 = vpop.f32.mrf.mxu0
        %v6070 = vadd.f32 %v5656, %v6069
        %v6071 = vpop.f32.mrf.mxu0
        %v6072 = vpop.f32.mrf.mxu0
        %v6073 = vadd.f32 %v5656, %v6072
        %v6074 = vpop.f32.mrf.mxu0
        %6075 = vdwg.mxu0
        %v6076 = vmax.f32 %v5950, 0.0
        %v6077 = vmax.f32 %v5953, 0.0
        %v6078 = vmax.f32 %v5958, 0.0
        %v6079 = vmax.f32 %v5961, 0.0
        %v6080 = vmax.f32 %v5966, 0.0
        %v6081 = vmax.f32 %v5969, 0.0
        %v6082 = vmax.f32 %v5974, 0.0
        %v6083 = vmax.f32 %v5977, 0.0
        %v6084 = vmax.f32 %v5982, 0.0
        %v6085 = vmax.f32 %v5985, 0.0
        %v6086 = vmax.f32 %v5990, 0.0
        %v6087 = vmax.f32 %v5993, 0.0
        %v6088 = vmax.f32 %v5998, 0.0
        %v6089 = vmax.f32 %v6001, 0.0
        %v6090 = vmax.f32 %v6006, 0.0
        %v6091 = vmax.f32 %v6009, 0.0
        %v6092 = vmax.f32 %v6014, 0.0
        %v6093 = vmax.f32 %v6017, 0.0
        %v6094 = vmax.f32 %v6022, 0.0
        %v6095 = vmax.f32 %v6025, 0.0
        %v6096 = vmax.f32 %v6030, 0.0
        %v6097 = vmax.f32 %v6033, 0.0
        %v6098 = vmax.f32 %v6038, 0.0
        %v6099 = vmax.f32 %v6041, 0.0
        %v6100 = vmax.f32 %v6046, 0.0
        %v6101 = vmax.f32 %v6049, 0.0
        %v6102 = vmax.f32 %v6054, 0.0
        %v6103 = vmax.f32 %v6057, 0.0
        %v6104 = vmax.f32 %v6062, 0.0
        %v6105 = vmax.f32 %v6065, 0.0
        %v6106 = vmax.f32 %v6070, 0.0
        %v6107 = vmax.f32 %v6073, 0.0
        %v6108 = vpack.c.bf16 %v6077, %v6076
        %v6109 = vpack.c.bf16 %v6079, %v6078
        %v6110 = vpack.c.bf16 %v6081, %v6080
        %v6111 = vpack.c.bf16 %v6083, %v6082
        %v6112 = vpack.c.bf16 %v6085, %v6084
        %v6113 = vpack.c.bf16 %v6087, %v6086
        %v6114 = vpack.c.bf16 %v6089, %v6088
        %v6115 = vpack.c.bf16 %v6091, %v6090
        %v6116 = vpack.c.bf16 %v6093, %v6092
        %v6117 = vpack.c.bf16 %v6095, %v6094
        %v6118 = vpack.c.bf16 %v6097, %v6096
        %v6119 = vpack.c.bf16 %v6099, %v6098
        %v6120 = vpack.c.bf16 %v6101, %v6100
        %v6121 = vpack.c.bf16 %v6103, %v6102
        %v6122 = vpack.c.bf16 %v6105, %v6104
        %v6123 = vpack.c.bf16 %v6107, %v6106
        %v6140 = vunpack.c.l.b16 %v6108
        %v6141 = vunpack.c.h.b16 %v6108
        %v6142 = vunpack.c.l.b16 %v6109
        %v6143 = vunpack.c.h.b16 %v6109
        %v6144 = vunpack.c.l.b16 %v6110
        %v6145 = vunpack.c.h.b16 %v6110
        %v6146 = vunpack.c.l.b16 %v6111
        %v6147 = vunpack.c.h.b16 %v6111
        %v6148 = vunpack.c.l.b16 %v6112
        %v6149 = vunpack.c.h.b16 %v6112
        %v6150 = vunpack.c.l.b16 %v6113
        %v6151 = vunpack.c.h.b16 %v6113
        %v6152 = vunpack.c.l.b16 %v6114
        %v6153 = vunpack.c.h.b16 %v6114
        %v6154 = vunpack.c.l.b16 %v6115
        %v6155 = vunpack.c.h.b16 %v6115
        %v6156 = vunpack.c.l.b16 %v6116
        %v6157 = vunpack.c.h.b16 %v6116
        %v6158 = vunpack.c.l.b16 %v6117
        %v6159 = vunpack.c.h.b16 %v6117
        %v6160 = vunpack.c.l.b16 %v6118
        %v6161 = vunpack.c.h.b16 %v6118
        %v6162 = vunpack.c.l.b16 %v6119
        %v6163 = vunpack.c.h.b16 %v6119
        %v6164 = vunpack.c.l.b16 %v6120
        %v6165 = vunpack.c.h.b16 %v6120
        %v6166 = vunpack.c.l.b16 %v6121
        %v6167 = vunpack.c.h.b16 %v6121
        %v6168 = vunpack.c.l.b16 %v6122
        %v6169 = vunpack.c.h.b16 %v6122
        %v6170 = vunpack.c.l.b16 %v6123
        %v6171 = vunpack.c.h.b16 %v6123
        %v6172 = vpack.c.b16 %v6140, %v6140
        %v6173 = vpack.c.b16 %v6141, %v6141
        %v6174 = vpack.c.b16 %v6142, %v6142
        %v6175 = vpack.c.b16 %v6143, %v6143
        %v6176 = vpack.c.b16 %v6144, %v6144
        %v6177 = vpack.c.b16 %v6145, %v6145
        %v6178 = vpack.c.b16 %v6146, %v6146
        %v6179 = vpack.c.b16 %v6147, %v6147
        %v6180 = vpack.c.b16 %v6148, %v6148
        %v6181 = vpack.c.b16 %v6149, %v6149
        %v6182 = vpack.c.b16 %v6150, %v6150
        %v6183 = vpack.c.b16 %v6151, %v6151
        %v6184 = vpack.c.b16 %v6152, %v6152
        %v6185 = vpack.c.b16 %v6153, %v6153
        %v6186 = vpack.c.b16 %v6154, %v6154
        %v6187 = vpack.c.b16 %v6155, %v6155
        %v6188 = vpack.c.b16 %v6156, %v6156
        %v6189 = vpack.c.b16 %v6157, %v6157
        %v6190 = vpack.c.b16 %v6158, %v6158
        %v6191 = vpack.c.b16 %v6159, %v6159
        %v6192 = vpack.c.b16 %v6160, %v6160
        %v6193 = vpack.c.b16 %v6161, %v6161
        %v6194 = vpack.c.b16 %v6162, %v6162
        %v6195 = vpack.c.b16 %v6163, %v6163
        %v6196 = vpack.c.b16 %v6164, %v6164
        %v6197 = vpack.c.b16 %v6165, %v6165
        %v6198 = vpack.c.b16 %v6166, %v6166
        %v6199 = vpack.c.b16 %v6167, %v6167
        %v6200 = vpack.c.b16 %v6168, %v6168
        %v6201 = vpack.c.b16 %v6169, %v6169
        %v6202 = vpack.c.b16 %v6170, %v6170
        %v6203 = vpack.c.b16 %v6171, %v6171
        %vm6236 = vcmask 257024
        %6237 = vst.msk [vmem:[%s177] sm:$0xf] %vm6236, %v6172
        %6238 = vst.msk [vmem:[%s177 + $0x4] sm:$0xf] %vm6236, %v6173
        %6239 = vst.msk [vmem:[%s177 + $0x8] sm:$0xf] %vm6236, %v6174
        %6240 = vst.msk [vmem:[%s177 + $0xc] sm:$0xf] %vm6236, %v6175
        %6241 = vst.msk [vmem:[%s177 + $0x10] sm:$0xf] %vm6236, %v6176
        %6242 = vst.msk [vmem:[%s177 + $0x14] sm:$0xf] %vm6236, %v6177
        %6243 = vst.msk [vmem:[%s177 + $0x18] sm:$0xf] %vm6236, %v6178
        %6244 = vst.msk [vmem:[%s177 + $0x1c] sm:$0xf] %vm6236, %v6179
        %6245 = vst.msk [vmem:[%s177 + $0x20] sm:$0xf] %vm6236, %v6180
        %6246 = vst.msk [vmem:[%s177 + $0x24] sm:$0xf] %vm6236, %v6181
        %6247 = vst.msk [vmem:[%s177 + $0x28] sm:$0xf] %vm6236, %v6182
        %6248 = vst.msk [vmem:[%s177 + $0x2c] sm:$0xf] %vm6236, %v6183
        %6249 = vst.msk [vmem:[%s177 + $0x30] sm:$0xf] %vm6236, %v6184
        %6250 = vst.msk [vmem:[%s177 + $0x34] sm:$0xf] %vm6236, %v6185
        %6251 = vst.msk [vmem:[%s177 + $0x38] sm:$0xf] %vm6236, %v6186
        %6252 = vst.msk [vmem:[%s177 + $0x3c] sm:$0xf] %vm6236, %v6187
        %6253 = vst.msk [vmem:[%s177 + $0x40] sm:$0xf] %vm6236, %v6188
        %6254 = vst.msk [vmem:[%s177 + $0x44] sm:$0xf] %vm6236, %v6189
        %6255 = vst.msk [vmem:[%s177 + $0x48] sm:$0xf] %vm6236, %v6190
        %6256 = vst.msk [vmem:[%s177 + $0x4c] sm:$0xf] %vm6236, %v6191
        %6257 = vst.msk [vmem:[%s177 + $0x50] sm:$0xf] %vm6236, %v6192
        %6258 = vst.msk [vmem:[%s177 + $0x54] sm:$0xf] %vm6236, %v6193
        %6259 = vst.msk [vmem:[%s177 + $0x58] sm:$0xf] %vm6236, %v6194
        %6260 = vst.msk [vmem:[%s177 + $0x5c] sm:$0xf] %vm6236, %v6195
        %6261 = vst.msk [vmem:[%s177 + $0x60] sm:$0xf] %vm6236, %v6196
        %6262 = vst.msk [vmem:[%s177 + $0x64] sm:$0xf] %vm6236, %v6197
        %6263 = vst.msk [vmem:[%s177 + $0x68] sm:$0xf] %vm6236, %v6198
        %6264 = vst.msk [vmem:[%s177 + $0x6c] sm:$0xf] %vm6236, %v6199
        %6265 = vst.msk [vmem:[%s177 + $0x70] sm:$0xf] %vm6236, %v6200
        %6266 = vst.msk [vmem:[%s177 + $0x74] sm:$0xf] %vm6236, %v6201
        %6267 = vst.msk [vmem:[%s177 + $0x78] sm:$0xf] %vm6236, %v6202
        %6268 = vst.msk [vmem:[%s177 + $0x7c] sm:$0xf] %vm6236, %v6203
        %s6269 = sand.u32 %s107, 1
        %s6270 = scalar_lea.sflag [#allocation6], %s6269
        %s6271 = sand.u32 %s107, 1
        %s6272 = smul.addr %s6271, 128
        %s6273 = scalar_lea.vmem [#allocation5], %s6272
        // Predicated region
        $region37: #{tpu_custom_call.1} parent=31 // pred_check
          %p6274 = pneg %p117
        $region38: #{tpu_custom_call.1} parent=31 // pred_check_branch
          %6276 = sbr.rel (%p6274) target = $region40
        $region39: #{tpu_custom_call.1} parent=31 // pred_region
          %s6277 = smul.u32 16, %s22
          %s6279 = ssub.s32 2048, 2048
          %6280 = vsyncadd %s6270, %s6279
          %s6281 = smul.addr %s6277, 2
          %s6282 = smul.addr %s21, 32
          %s6283 = sadd.s32 %s6281, %s6282
          %s6284 = smul.addr %s6283, 64
          %s6285 = scalar_lea.hbm %s3, %s6284
          %s6286 = sshll.u32 %s6273, 4
          %s6287 = int_to_ptr.vmem [resolvable:$true] %s6286
          %6292 = dma.vmem_to_hbm [thread:$0]  %s6287, 2048, %s6285, %s6270, 64, 64, 4
        $region40: #{tpu_custom_call.1} parent=31 // pred_fallthru
          _
      $region32: #{tpu_custom_call.1} parent=5 // pred_fallthru
        _
      %p6293 = scmp.le.s32.totalorder 2, %s12
      // Predicated region
      $region41: #{tpu_custom_call.1} parent=5 // pred_check
        %p6294 = pneg %p6293
      $region42: #{tpu_custom_call.1} parent=5 // pred_check_branch
        %6296 = sbr.rel (%p6294) target = $region44
      $region43: #{tpu_custom_call.1} parent=5 // pred_region
        %s6297 = ssub.s32 %s12, 2
        // Predicated region
        $region45: #{tpu_custom_call.1} parent=43 // pred_check
          %p6298 = pneg %p123
        $region46: #{tpu_custom_call.1} parent=43 // pred_check_branch
          %6300 = sbr.rel (%p6298) target = $region48
        $region47: #{tpu_custom_call.1} parent=43 // pred_region
          %s6301 = sand.u32 %s108, 1
          %s6302 = scalar_lea.sflag [#allocation6], %s6301
          %s6303 = sand.u32 %s108, 1
          %s6304 = smul.addr %s6303, 128
          %s6305 = scalar_lea.vmem [#allocation5], %s6304
          %6306 = dma.done %s6302, 2048
        $region48: #{tpu_custom_call.1} parent=43 // pred_fallthru
          _
      $region44: #{tpu_custom_call.1} parent=5 // pred_fallthru
        _
    $region6: #{tpu_custom_call.1} parent=1 // loop_footer
      %s16 = sadd.s32 1, %s12
    $region7: #{tpu_custom_call.1} parent=1 // loop_footer_branch
      %11 = sbr.rel target = $region3
    $region8: #{tpu_custom_call.1} parent=1 // loop_exit
      _
    %6307 = vsyncpa [#allocation6], 1
    %s6308 = scalar_lea.sflag [#allocation6], 1
    %6309 = vsyncpa %s6308, 1

</llo_original>
